<compile_context>
chip_gen: v7x
topology: tpu7x:2x2x1
jax: 0.10.0
libtpu: 0.0.40
codegen_flags: <defaults>
</compile_context>

<pallas_src>
import functools
import numpy as np
import jax
import jax.numpy as jnp
from jax.experimental import pallas as pl
from jax.experimental.pallas import tpu as pltpu


_VMEM_LIMIT = 48 * 1024 * 1024   # below v7x's 64 MiB physical, above default scoped limits


def _cparams(sem):
    return pltpu.CompilerParams(dimension_semantics=sem, vmem_limit_bytes=_VMEM_LIMIT)


# ----------------------------- helpers ---------------------------------------

def find_multiple(n: int, k: int) -> int:
    return n if n % k == 0 else n + k - n % k


def _ceil_to(n: int, k: int) -> int:
    return (n + k - 1) // k * k


def _pick_tile(dim: int, preferred: int, align: int):
    """Return (tile, padded_dim): tile divides padded_dim, tile is `align`-aligned
    unless it covers the whole (un-padded) axis."""
    if dim <= preferred:
        return dim, dim                       # single full-axis block
    t = (preferred // align) * align
    while t >= align:
        if dim % t == 0:
            return t, dim
        t -= align
    return preferred, _ceil_to(dim, preferred)


def _pad2d(x, rows, cols):
    r, c = x.shape
    if r == rows and c == cols:
        return x
    return jnp.pad(x, ((0, rows - r), (0, cols - c)))


def precompute_freqs_cis_2d(grid_size, n_elem, base=10000, cls_token_num=1):
    half_dim = n_elem // 2
    freqs = 1.0 / (base ** (np.arange(0, half_dim, 2)[: half_dim // 2].astype(np.float32) / half_dim))
    t = np.arange(grid_size, dtype=np.float32)
    freqs = np.outer(t, freqs)
    fg = np.concatenate(
        [np.broadcast_to(freqs[:, None, :], (grid_size, grid_size, freqs.shape[1])),
         np.broadcast_to(freqs[None, :, :], (grid_size, grid_size, freqs.shape[1]))],
        axis=-1)
    cache = np.stack([np.cos(fg), np.sin(fg)], axis=-1).reshape(grid_size * grid_size, half_dim, 2)
    cond = np.concatenate([np.zeros((cls_token_num, half_dim, 2), np.float32),
                           cache.astype(np.float32)], axis=0)
    return jnp.asarray(cond, jnp.float32)


def apply_rotary_emb(x, freqs_cis):
    # x: (B, S, H, Dh), freqs_cis: (S, Dh//2, 2) -- matches torch reference exactly.
    B, S, H, D = x.shape
    xr = x.astype(jnp.float32).reshape(B, S, H, D // 2, 2)
    fc = freqs_cis.reshape(1, S, 1, D // 2, 2)
    out = jnp.stack(
        [xr[..., 0] * fc[..., 0] - xr[..., 1] * fc[..., 1],
         xr[..., 1] * fc[..., 0] + xr[..., 0] * fc[..., 1]], axis=-1)
    return out.reshape(B, S, H, D).astype(x.dtype)


# ----------------------------- tiled matmul (+bias, +residual) ----------------

def _matmul_kernel(has_bias, has_res, *refs):
    x_ref, w_ref = refs[0], refs[1]
    pos = 2
    b_ref = r_ref = None
    if has_bias:
        b_ref = refs[pos]; pos += 1
    if has_res:
        r_ref = refs[pos]; pos += 1
    o_ref, acc_ref = refs[pos], refs[pos + 1]

    k = pl.program_id(2)

    @pl.when(k == 0)
    def _init():
        acc_ref[...] = jnp.zeros(acc_ref.shape, jnp.float32)

    acc_ref[...] += jnp.dot(x_ref[...], w_ref[...], preferred_element_type=jnp.float32)

    @pl.when(k == pl.num_programs(2) - 1)
    def _finalize():
        out = acc_ref[...]
        if has_bias:
            out = out + b_ref[...].astype(jnp.float32)
        if has_res:
            out = out + r_ref[...].astype(jnp.float32)
        o_ref[...] = out.astype(o_ref.dtype)


def matmul(x, w, b=None, residual=None, out_dtype=jnp.bfloat16, tm=256, tn=256, tk=512):
    """out = x @ w (+ b) (+ residual); K-accumulated in f32 scratch."""
    M, K = x.shape
    N = w.shape[1]
    tm, Mp = _pick_tile(M, tm, 8)
    tn, Np = _pick_tile(N, tn, 128)
    if tn % 128:                               # keep output stores lane-dense
        tn = _ceil_to(N, 128); Np = tn
    tk, Kp = _pick_tile(K, tk, 128)

    xp = _pad2d(x, Mp, Kp)
    wp = _pad2d(w, Kp, Np)

    in_specs = [pl.BlockSpec((tm, tk), lambda i, j, k: (i, k)),
                pl.BlockSpec((tk, tn), lambda i, j, k: (k, j))]
    args = [xp, wp]
    if b is not None:
        in_specs.append(pl.BlockSpec((1, tn), lambda i, j, k: (0, j)))
        args.append(_pad2d(b.reshape(1, N).astype(jnp.float32), 1, Np))
    if residual is not None:
        in_specs.append(pl.BlockSpec((tm, tn), lambda i, j, k: (i, j)))
        args.append(_pad2d(residual, Mp, Np))

    out = pl.pallas_call(
        functools.partial(_matmul_kernel, b is not None, residual is not None),
        grid=(Mp // tm, Np // tn, Kp // tk),
        in_specs=in_specs,
        out_specs=pl.BlockSpec((tm, tn), lambda i, j, k: (i, j)),
        out_shape=jax.ShapeDtypeStruct((Mp, Np), out_dtype),
        scratch_shapes=[pltpu.VMEM((tm, tn), jnp.float32)],
        compiler_params=_cparams(("parallel", "parallel", "arbitrary")),
    )(*args)
    return out[:M, :N]


# ----------------------------- fused RMSNorm + matmul -------------------------

def _rmsnorm_matmul_kernel(eps, x_ref, g_ref, w_ref, o_ref):
    x = x_ref[...].astype(jnp.float32)
    ms = jnp.mean(x * x, axis=-1, keepdims=True)
    xn = x * jax.lax.rsqrt(ms + eps) * g_ref[...].astype(jnp.float32)
    o_ref[...] = jnp.dot(xn.astype(w_ref.dtype), w_ref[...],
                         preferred_element_type=jnp.float32).astype(o_ref.dtype)


def rmsnorm_matmul(x, gamma, w, eps, out_dtype=jnp.bfloat16, tm=256, tn=256):
    """out = RMSNorm(x; gamma) @ w, fused in one kernel (K kept whole -> norm exact)."""
    M, K = x.shape
    N = w.shape[1]
    tm, Mp = _pick_tile(M, tm, 8)
    tn, Np = _pick_tile(N, tn, 128)
    if tn % 128:
        tn = _ceil_to(N, 128); Np = tn
    xp = _pad2d(x, Mp, K)
    wp = _pad2d(w, K, Np)

    out = pl.pallas_call(
        functools.partial(_rmsnorm_matmul_kernel, eps),
        grid=(Mp // tm, Np // tn),
        in_specs=[pl.BlockSpec((tm, K), lambda i, j: (i, 0)),
                  pl.BlockSpec((1, K), lambda i, j: (0, 0)),
                  pl.BlockSpec((K, tn), lambda i, j: (0, j))],
        out_specs=pl.BlockSpec((tm, tn), lambda i, j: (i, j)),
        out_shape=jax.ShapeDtypeStruct((Mp, Np), out_dtype),
        compiler_params=_cparams(("parallel", "parallel")),
    )(xp, gamma.reshape(1, K), wp)
    return out[:M, :N]


# ----------------------------- fused FFN block (norm + SwiGLU + residual) -----

def _ffn_kernel(eps, x_ref, g_ref, w1_ref, w3_ref, w2_ref, o_ref, acc_ref):
    j = pl.program_id(1)

    @pl.when(j == 0)
    def _init():
        acc_ref[...] = jnp.zeros(acc_ref.shape, jnp.float32)

    x = x_ref[...].astype(jnp.float32)
    ms = jnp.mean(x * x, axis=-1, keepdims=True)
    xn = (x * jax.lax.rsqrt(ms + eps) * g_ref[...].astype(jnp.float32)).astype(w1_ref.dtype)
    h1 = jnp.dot(xn, w1_ref[...], preferred_element_type=jnp.float32)
    h3 = jnp.dot(xn, w3_ref[...], preferred_element_type=jnp.float32)
    hh = (h1 * jax.nn.sigmoid(h1)) * h3                       # SiLU(w1 x) * (w3 x)
    acc_ref[...] += jnp.dot(hh.astype(w2_ref.dtype), w2_ref[...],
                            preferred_element_type=jnp.float32)

    @pl.when(j == pl.num_programs(1) - 1)
    def _finalize():                                          # residual fused
        o_ref[...] = (acc_ref[...] + x_ref[...].astype(jnp.float32)).astype(o_ref.dtype)


def ffn_block(x, gamma, w1, w3, w2, eps, out_dtype=jnp.bfloat16, tm=256, th=256):
    """out = x + w2( SiLU(w1 RMSNorm(x)) * (w3 RMSNorm(x)) ), tiled over (rows, hidden)."""
    M, D = x.shape
    Hd = w1.shape[1]
    tm, Mp = _pick_tile(M, tm, 8)
    th, Hp = _pick_tile(Hd, th, 128)
    xp = _pad2d(x, Mp, D)
    w1p = _pad2d(w1, D, Hp)
    w3p = _pad2d(w3, D, Hp)
    w2p = _pad2d(w2, Hp, D)

    out = pl.pallas_call(
        functools.partial(_ffn_kernel, eps),
        grid=(Mp // tm, Hp // th),
        in_specs=[pl.BlockSpec((tm, D), lambda i, j: (i, 0)),
                  pl.BlockSpec((1, D), lambda i, j: (0, 0)),
                  pl.BlockSpec((D, th), lambda i, j: (0, j)),
                  pl.BlockSpec((D, th), lambda i, j: (0, j)),
                  pl.BlockSpec((th, D), lambda i, j: (j, 0))],
        out_specs=pl.BlockSpec((tm, D), lambda i, j: (i, 0)),
        out_shape=jax.ShapeDtypeStruct((Mp, D), out_dtype),
        scratch_shapes=[pltpu.VMEM((tm, D), jnp.float32)],
        compiler_params=_cparams(("parallel", "arbitrary")),
    )(xp, gamma.reshape(1, D), w1p, w3p, w2p)
    return out[:M]


# ----------------------------- flash causal attention -------------------------

def _flash_attn_kernel(scale, q_ref, k_ref, v_ref, o_ref, m_ref, l_ref, acc_ref):
    qi = pl.program_id(2)
    ki = pl.program_id(3)
    tq = q_ref.shape[2]
    tk = k_ref.shape[2]

    @pl.when(ki == 0)
    def _init():
        m_ref[...] = jnp.full(m_ref.shape, -jnp.inf, jnp.float32)
        l_ref[...] = jnp.zeros(l_ref.shape, jnp.float32)
        acc_ref[...] = jnp.zeros(acc_ref.shape, jnp.float32)

    @pl.when(ki <= qi)   # causal: KV tiles strictly above the diagonal contribute nothing
    def _compute():
        q = q_ref[0, 0]
        k = k_ref[0, 0]
        v = v_ref[0, 0]
        s = jax.lax.dot_general(q, k, (((1,), (1,)), ((), ())),
                                preferred_element_type=jnp.float32) * scale
        row = qi * tq + jax.lax.broadcasted_iota(jnp.int32, (tq, tk), 0)
        col = ki * tk + jax.lax.broadcasted_iota(jnp.int32, (tq, tk), 1)
        s = jnp.where(col <= row, s, -1e30)
        m_prev = m_ref[...]
        m_new = jnp.maximum(m_prev, jnp.max(s, axis=-1, keepdims=True))
        alpha = jnp.exp(m_prev - m_new)
        p = jnp.exp(s - m_new)
        l_ref[...] = alpha * l_ref[...] + jnp.sum(p, axis=-1, keepdims=True)
        acc_ref[...] = alpha * acc_ref[...] + jnp.dot(
            p.astype(v.dtype), v, preferred_element_type=jnp.float32)
        m_ref[...] = m_new

    @pl.when(ki == pl.num_programs(3) - 1)
    def _finalize():
        o_ref[0, 0] = (acc_ref[...] *
                       pl.reciprocal(l_ref[...], approx=True)).astype(o_ref.dtype)


def flash_attention(q, k, v, seq_tile):
    # q, k, v: (B, H, Sp, Dh) with Sp % seq_tile == 0.
    B, H, Sp, Dh = q.shape
    nt = Sp // seq_tile
    scale = 1.0 / float(np.sqrt(Dh))
    q_spec = pl.BlockSpec((1, 1, seq_tile, Dh), lambda b, h, qi, ki: (b, h, qi, 0))
    kv_spec = pl.BlockSpec((1, 1, seq_tile, Dh), lambda b, h, qi, ki: (b, h, ki, 0))
    return pl.pallas_call(
        functools.partial(_flash_attn_kernel, scale),
        grid=(B, H, nt, nt),
        in_specs=[q_spec, kv_spec, kv_spec],
        out_specs=q_spec,
        out_shape=jax.ShapeDtypeStruct((B, H, Sp, Dh), q.dtype),
        scratch_shapes=[pltpu.VMEM((seq_tile, 1), jnp.float32),
                        pltpu.VMEM((seq_tile, 1), jnp.float32),
                        pltpu.VMEM((seq_tile, Dh), jnp.float32)],
        compiler_params=_cparams(("parallel", "parallel", "parallel", "arbitrary")),
    )(q, k, v)


# ----------------------------- fused FinalLayer -------------------------------

def _final_layer_kernel(eps, x_ref, shift_ref, scale_ref, w_ref, b_ref, o_ref):
    x = x_ref[0].astype(jnp.float32)                     # (ts, D)
    mu = jnp.mean(x, axis=-1, keepdims=True)
    var = jnp.mean((x - mu) * (x - mu), axis=-1, keepdims=True)
    xn = (x - mu) * jax.lax.rsqrt(var + eps)             # LayerNorm, no affine
    mod = xn * (1.0 + scale_ref[0].astype(jnp.float32)) + shift_ref[0].astype(jnp.float32)
    out = jnp.dot(mod.astype(w_ref.dtype), w_ref[...],
                  preferred_element_type=jnp.float32) + b_ref[...].astype(jnp.float32)
    o_ref[0] = out.astype(o_ref.dtype)


def final_layer(x, shift, scale, w, b, seq_tile, eps=1e-6):
    B, Sp, D = x.shape
    N = w.shape[1]
    Np = _ceil_to(max(N, 128), 128)                      # lane-dense output
    wp = _pad2d(w, D, Np)
    bp = _pad2d(b.reshape(1, N).astype(jnp.float32), 1, Np)
    ts = seq_tile
    out = pl.pallas_call(
        functools.partial(_final_layer_kernel, eps),
        grid=(B, Sp // ts),
        in_specs=[
            pl.BlockSpec((1, ts, D), lambda bi, si: (bi, si, 0)),
            pl.BlockSpec((1, 1, D), lambda bi, si: (bi, 0, 0)),
            pl.BlockSpec((1, 1, D), lambda bi, si: (bi, 0, 0)),
            pl.BlockSpec((D, Np), lambda bi, si: (0, 0)),
            pl.BlockSpec((1, Np), lambda bi, si: (0, 0)),
        ],
        out_specs=pl.BlockSpec((1, ts, Np), lambda bi, si: (bi, si, 0)),
        out_shape=jax.ShapeDtypeStruct((B, Sp, Np), jnp.float32),
        compiler_params=_cparams(("parallel", "parallel")),
    )(x, shift, scale, wp, bp)
    return out[:, :, :N]


# ----------------------------- model -----------------------------------------

def init_params(key, cfg):
    dim = cfg['dim']; Cd = cfg['codebook_dim']; V = cfg['vocab_size']
    hid = find_multiple(int(2 * (4 * dim) / 3), cfg['multiple_of'])
    std = cfg['initializer_range']
    bf = jnp.bfloat16
    ks = iter(jax.random.split(key, 8 + 5 * cfg['n_layer']))

    def nrm(shape, s=std, dtype=jnp.float32):
        return (jax.random.normal(next(ks), shape, jnp.float32) * s).astype(dtype)

    layers = []
    for _ in range(cfg['n_layer']):
        layers.append(dict(
            attn_norm_w=jnp.ones((dim,), jnp.float32),
            wqkv=nrm((dim, 3 * dim), dtype=bf),          # n_kv_head == n_head
            wo=nrm((dim, dim), dtype=bf),
            ffn_norm_w=jnp.ones((dim,), jnp.float32),
            w1=nrm((dim, hid), dtype=bf),
            w3=nrm((dim, hid), dtype=bf),
            w2=nrm((hid, dim), dtype=bf),
        ))
    params = dict(
        cls_emb=nrm((cfg['num_classes'] + 1, dim)),      # LabelEmbedder table (f32)
        tok_w=nrm((Cd, dim), dtype=bf),
        tok_b=jnp.zeros((dim,), jnp.float32),
        n_d_embed=nrm((2, dim)),
        layers=layers,
        norm_w=jnp.ones((dim,), jnp.float32),
        # NOTE: reference __init__ zero-inits output.weight; we use small random
        # values so the Pallas matmul is exercised non-trivially.
        out_w=nrm((dim, V), dtype=bf),
        scale_shift_table=nrm((2, dim), 1.0 / np.sqrt(dim)),
        final_w=nrm((dim, Cd), dtype=bf),
        final_b=jnp.zeros((Cd,), jnp.float32),
        freqs_cis=precompute_freqs_cis_2d(int(np.sqrt(cfg['block_size'])),
                                          dim // cfg['n_head'],
                                          cfg['rope_base'], cfg['cls_token_num']),
    )
    return params


def dd_transformer_forward(params, cfg, x_BLC, cond_idx, timestep):
    """Eval-mode forward (mode='forward', no KV cache, c2i). Returns (tokens, logits)."""
    B, L, Cd = x_BLC.shape
    dim = cfg['dim']; H = cfg['n_head']; Dh = dim // H
    S = L + cfg['cls_token_num']
    eps = cfg['norm_eps']
    V = cfg['vocab_size']

    # pad sequence at the end to a tile multiple; causally safe (real queries never
    # attend padded keys), padded rows are sliced off at the end.
    seq_tile = 128 if S >= 128 else _ceil_to(S, 8)
    Sp = _ceil_to(S, seq_tile)
    M = B * Sp

    # ---- embeddings (glue) ----
    temp = jnp.arange(L + 1)[None, :]
    temp_mask = temp <= timestep[:, None]                                   # (B, L+1)
    n_d_emb = jnp.where(temp_mask[..., None], params['n_d_embed'][1], params['n_d_embed'][0])
    cond_emb = jnp.take(params['cls_emb'], cond_idx, axis=0)[:, None, :]    # (B, 1, dim) f32
    tok_emb = matmul(x_BLC.reshape(B * L, Cd).astype(jnp.bfloat16), params['tok_w'],
                     b=params['tok_b'], out_dtype=jnp.float32).reshape(B, L, dim)
    h = jnp.concatenate([cond_emb, tok_emb], axis=1) + n_d_emb              # (B, S, dim) f32
    h = jnp.pad(h, ((0, 0), (0, Sp - S), (0, 0))).astype(jnp.bfloat16)
    h2d = h.reshape(M, dim)

    freqs_cis = params['freqs_cis'][:S]
    freqs_cis = jnp.pad(freqs_cis, ((0, Sp - S), (0, 0), (0, 0)))           # (Sp, Dh//2, 2)

    for layer in params['layers']:
        # ---- attention block (RMSNorm fused into qkv proj, residual fused into wo) ----
        qkv = rmsnorm_matmul(h2d, layer['attn_norm_w'], layer['wqkv'], eps)  # (M, 3*dim) bf16
        qkv = qkv.reshape(B, Sp, 3, H, Dh)
        q, k_, v_ = qkv[:, :, 0], qkv[:, :, 1], qkv[:, :, 2]
        q = apply_rotary_emb(q, freqs_cis)
        k_ = apply_rotary_emb(k_, freqs_cis)
        q = jnp.transpose(q, (0, 2, 1, 3))                                   # (B, H, Sp, Dh)
        k_ = jnp.transpose(k_, (0, 2, 1, 3))
        v_ = jnp.transpose(v_, (0, 2, 1, 3))
        attn = flash_attention(q, k_, v_, seq_tile)                          # (B, H, Sp, Dh)
        attn2d = jnp.transpose(attn, (0, 2, 1, 3)).reshape(M, dim)
        h2d = matmul(attn2d, layer['wo'], residual=h2d)                      # +h fused
        # ---- feed-forward block (norm + SwiGLU + residual all fused) ----
        h2d = ffn_block(h2d, layer['ffn_norm_w'], layer['w1'], layer['w3'], layer['w2'], eps)

    # final RMSNorm fused into the logits projection
    logits = rmsnorm_matmul(h2d, params['norm_w'], params['out_w'], eps,
                            out_dtype=jnp.float32)
    logits = logits.reshape(B, Sp, V)[:, cfg['cls_token_num']:S]

    # FinalLayer(hidden_size=dim, out_channels=codebook_dim), cond_BD = cond_embeddings
    ss = params['scale_shift_table'][None] + cond_emb                        # (B, 2, dim) f32
    shift, scale = ss[:, 0:1, :], ss[:, 1:2, :]
    tokens = final_layer(h2d.reshape(B, Sp, dim), shift, scale,
                         params['final_w'], params['final_b'], seq_tile)
    tokens = tokens[:, cfg['cls_token_num']:S]

    # TODO(synk): 'final_predict' branch, KV-cache decode ('part') path and
    # dropout/drop-path (training-only) are not implemented; this is the eval forward.
    return tokens, logits


# ----------------------------- demo ------------------------------------------

if __name__ == "__main__":
    cfg = dict(dim=128, n_layer=2, n_head=4, multiple_of=128, norm_eps=1e-5,
               rope_base=10000, num_classes=10, vocab_size=64, cls_token_num=1,
               block_size=16, codebook_dim=8, initializer_range=0.02)

    root = jax.random.PRNGKey(0)
    kp, kx, kc, kt = jax.random.split(root, 4)
    params = init_params(kp, cfg)

    B = 2
    x_BLC = jax.random.normal(kx, (B, cfg['block_size'], cfg['codebook_dim']), jnp.float32)
    cond_idx = jax.random.randint(kc, (B,), 0, cfg['num_classes'])
    timestep = jax.random.randint(kt, (B,), 0, cfg['block_size'] + 1)

    fwd = jax.jit(lambda p, x, c, t: dd_transformer_forward(p, cfg, x, c, t))
    tokens, logits = fwd(params, x_BLC, cond_idx, timestep)
    jax.block_until_ready((tokens, logits))

    assert tokens.shape == (B, cfg['block_size'], cfg['codebook_dim'])
    assert logits.shape == (B, cfg['block_size'], cfg['vocab_size'])
    assert bool(jnp.all(jnp.isfinite(tokens))) and bool(jnp.all(jnp.isfinite(logits)))
    print("KERNEL_OK")
</pallas_src>

<mosaic_0001>
module attributes {stable_mosaic.version = 11 : i64} {
  func.func @_rmsnorm_matmul_kernel(%arg0: i32, %arg1: i32, %arg2: memref<48x128xbf16, #tpu.memory_space<vmem>>, %arg3: memref<1x128xf32, #tpu.memory_space<vmem>>, %arg4: memref<128x128xbf16, #tpu.memory_space<vmem>>, %arg5: memref<48x128xbf16, #tpu.memory_space<vmem>>) attributes {dimension_semantics = [#tpu.dimension_semantics<parallel>, #tpu.dimension_semantics<parallel>], iteration_bounds = array<i64: 1, 3>, scalar_prefetch = 0 : i64, scratch_operands = 0 : i64, tpu.core_type = #tpu.core_type<tc>, window_params = [{transform_indices = @transform_0, window_bounds = array<i64: 48, 128>}, {pipeline_mode = #tpu.pipeline_mode<synchronous>, transform_indices = @transform_1, window_bounds = array<i64: 1, 128>}, {transform_indices = @transform_2, window_bounds = array<i64: 128, 128>}, {transform_indices = @transform_3, window_bounds = array<i64: 48, 128>}]} {
    %c0 = arith.constant 0 : index
    %c0_0 = arith.constant 0 : index
    %0 = vector.load %arg2[%c0, %c0_0] : memref<48x128xbf16, #tpu.memory_space<vmem>>, vector<48x128xbf16>
    %1 = arith.extf %0 : vector<48x128xbf16> to vector<48x128xf32>
    %2 = arith.mulf %1, %1 : vector<48x128xf32>
    %cst = arith.constant dense<0.000000e+00> : vector<48xf32>
    %3 = vector.multi_reduction <add>, %2, %cst [1] : vector<48x128xf32> to vector<48xf32>
    %4 = vector.shape_cast %3 : vector<48xf32> to vector<48x1xf32>
    %cst_1 = arith.constant 1.280000e+02 : f32
    %5 = vector.broadcast %cst_1 : f32 to vector<48x1xf32>
    %6 = arith.divf %4, %5 : vector<48x1xf32>
    %cst_2 = arith.constant 9.99999974E-6 : f32
    %7 = vector.broadcast %cst_2 : f32 to vector<48x1xf32>
    %8 = arith.addf %6, %7 : vector<48x1xf32>
    %9 = math.rsqrt %8 : vector<48x1xf32>
    %10 = vector.broadcast %9 : vector<48x1xf32> to vector<48x128xf32>
    %11 = arith.mulf %1, %10 : vector<48x128xf32>
    %c0_3 = arith.constant 0 : index
    %c0_4 = arith.constant 0 : index
    %12 = vector.load %arg3[%c0_3, %c0_4] : memref<1x128xf32, #tpu.memory_space<vmem>>, vector<1x128xf32>
    %13 = vector.broadcast %12 : vector<1x128xf32> to vector<48x128xf32>
    %14 = arith.mulf %11, %13 : vector<48x128xf32>
    %15 = arith.truncf %14 : vector<48x128xf32> to vector<48x128xbf16>
    %c0_5 = arith.constant 0 : index
    %c0_6 = arith.constant 0 : index
    %16 = vector.load %arg4[%c0_5, %c0_6] : memref<128x128xbf16, #tpu.memory_space<vmem>>, vector<128x128xbf16>
    %cst_7 = arith.constant dense<0.000000e+00> : vector<48x128xf32>
    %17 = tpu.matmul %15, %16, %cst_7 {dimension_numbers = #tpu.dot_dimension_numbers<[1], [0], [0], [1], [0, 0, 1, 1], [], []>} : vector<48x128xbf16>, vector<128x128xbf16>, vector<48x128xf32> -> vector<48x128xf32>
    %18 = arith.truncf %17 : vector<48x128xf32> to vector<48x128xbf16>
    %c0_8 = arith.constant 0 : index
    %c0_9 = arith.constant 0 : index
    %19 = vector.load %arg5[%c0_8, %c0_9] : memref<48x128xbf16, #tpu.memory_space<vmem>>, vector<48x128xbf16>
    tpu.vector_store %arg5[%c0_8, %c0_9], %18 {strides = array<i32>} : memref<48x128xbf16, #tpu.memory_space<vmem>>, vector<48x128xbf16>,
    return
  }
  func.func @transform_0(%arg0: i32, %arg1: i32) -> (i32, i32) {
    %c0_i32 = arith.constant 0 : i32
    %c0_i32_0 = arith.constant 0 : i32
    return %arg0, %c0_i32 : i32, i32
  }
  func.func @transform_1(%arg0: i32, %arg1: i32) -> (i32, i32) {
    %c0_i32 = arith.constant 0 : i32
    %c0_i32_0 = arith.constant 0 : i32
    %c0_i32_1 = arith.constant 0 : i32
    return %c0_i32, %c0_i32_0 : i32, i32
  }
  func.func @transform_2(%arg0: i32, %arg1: i32) -> (i32, i32) {
    %c0_i32 = arith.constant 0 : i32
    %c0_i32_0 = arith.constant 0 : i32
    return %c0_i32, %arg1 : i32, i32
  }
  func.func @transform_3(%arg0: i32, %arg1: i32) -> (i32, i32) {
    %c0_i32 = arith.constant 0 : i32
    return %arg0, %arg1 : i32, i32
  }
}

module attributes {stable_mosaic.version = 11 : i64} {
  func.func @_matmul_kernel(%arg0: i32, %arg1: i32, %arg2: i32, %arg3: memref<32x8xbf16, #tpu.memory_space<vmem>>, %arg4: memref<8x128xbf16, #tpu.memory_space<vmem>>, %arg5: memref<1x128xf32, #tpu.memory_space<vmem>>, %arg6: memref<32x128xf32, #tpu.memory_space<vmem>>, %arg7: memref<32x128xf32, #tpu.memory_space<vmem>>) attributes {dimension_semantics = [#tpu.dimension_semantics<parallel>, #tpu.dimension_semantics<parallel>, #tpu.dimension_semantics<arbitrary>], iteration_bounds = array<i64: 1, 1, 1>, scalar_prefetch = 0 : i64, scratch_operands = 1 : i64, tpu.core_type = #tpu.core_type<tc>, window_params = [{transform_indices = @transform_0, window_bounds = array<i64: 32, 8>}, {transform_indices = @transform_1, window_bounds = array<i64: 8, 128>}, {transform_indices = @transform_2, window_bounds = array<i64: 1, 128>}, {transform_indices = @transform_3, window_bounds = array<i64: 32, 128>}]} {
    %c0_i32 = arith.constant 0 : i32
    %0 = arith.cmpi eq, %arg2, %c0_i32 : i32
    %1 = arith.extui %0 : i1 to i32
    %c0_i32_0 = arith.constant 0 : i32
    %2 = arith.cmpi ne, %1, %c0_i32_0 : i32
    scf.if %2 {
      %cst_10 = arith.constant 0.000000e+00 : f32
      %12 = vector.broadcast %cst_10 : f32 to vector<32x128xf32>
      %c0_11 = arith.constant 0 : index
      %c0_12 = arith.constant 0 : index
      %13 = vector.load %arg7[%c0_11, %c0_12] : memref<32x128xf32, #tpu.memory_space<vmem>>, vector<32x128xf32>
      tpu.vector_store %arg7[%c0_11, %c0_12], %12 {strides = array<i32>} : memref<32x128xf32, #tpu.memory_space<vmem>>, vector<32x128xf32>,
    } else {
    }
    %c0 = arith.constant 0 : index
    %c0_1 = arith.constant 0 : index
    %3 = vector.load %arg7[%c0, %c0_1] : memref<32x128xf32, #tpu.memory_space<vmem>>, vector<32x128xf32>
    %c0_2 = arith.constant 0 : index
    %c0_3 = arith.constant 0 : index
    %4 = vector.load %arg3[%c0_2, %c0_3] : memref<32x8xbf16, #tpu.memory_space<vmem>>, vector<32x8xbf16>
    %c0_4 = arith.constant 0 : index
    %c0_5 = arith.constant 0 : index
    %5 = vector.load %arg4[%c0_4, %c0_5] : memref<8x128xbf16, #tpu.memory_space<vmem>>, vector<8x128xbf16>
    %cst = arith.constant dense<0.000000e+00> : vector<32x128xf32>
    %6 = tpu.matmul %4, %5, %cst {dimension_numbers = #tpu.dot_dimension_numbers<[1], [0], [0], [1], [0, 0, 1, 1], [], []>} : vector<32x8xbf16>, vector<8x128xbf16>, vector<32x128xf32> -> vector<32x128xf32>
    %7 = arith.addf %3, %6 : vector<32x128xf32>
    %c0_6 = arith.constant 0 : index
    %c0_7 = arith.constant 0 : index
    %8 = vector.load %arg7[%c0_6, %c0_7] : memref<32x128xf32, #tpu.memory_space<vmem>>, vector<32x128xf32>
    tpu.vector_store %arg7[%c0_6, %c0_7], %7 {strides = array<i32>} : memref<32x128xf32, #tpu.memory_space<vmem>>, vector<32x128xf32>,
    %c0_i32_8 = arith.constant 0 : i32
    %9 = arith.cmpi eq, %arg2, %c0_i32_8 : i32
    %10 = arith.extui %9 : i1 to i32
    %c0_i32_9 = arith.constant 0 : i32
    %11 = arith.cmpi ne, %10, %c0_i32_9 : i32
    scf.if %11 {
      %c0_10 = arith.constant 0 : index
      %c0_11 = arith.constant 0 : index
      %12 = vector.load %arg7[%c0_10, %c0_11] : memref<32x128xf32, #tpu.memory_space<vmem>>, vector<32x128xf32>
      %c0_12 = arith.constant 0 : index
      %c0_13 = arith.constant 0 : index
      %13 = vector.load %arg5[%c0_12, %c0_13] : memref<1x128xf32, #tpu.memory_space<vmem>>, vector<1x128xf32>
      %14 = vector.broadcast %13 : vector<1x128xf32> to vector<32x128xf32>
      %15 = arith.addf %12, %14 : vector<32x128xf32>
      %c0_14 = arith.constant 0 : index
      %c0_15 = arith.constant 0 : index
      %16 = vector.load %arg6[%c0_14, %c0_15] : memref<32x128xf32, #tpu.memory_space<vmem>>, vector<32x128xf32>
      tpu.vector_store %arg6[%c0_14, %c0_15], %15 {strides = array<i32>} : memref<32x128xf32, #tpu.memory_space<vmem>>, vector<32x128xf32>,
    } else {
    }
    return
  }
  func.func @transform_0(%arg0: i32, %arg1: i32, %arg2: i32) -> (i32, i32) {
    %c0_i32 = arith.constant 0 : i32
    return %arg0, %arg2 : i32, i32
  }
  func.func @transform_1(%arg0: i32, %arg1: i32, %arg2: i32) -> (i32, i32) {
    %c0_i32 = arith.constant 0 : i32
    return %arg2, %arg1 : i32, i32
  }
  func.func @transform_2(%arg0: i32, %arg1: i32, %arg2: i32) -> (i32, i32) {
    %c0_i32 = arith.constant 0 : i32
    %c0_i32_0 = arith.constant 0 : i32
    return %c0_i32, %arg1 : i32, i32
  }
  func.func @transform_3(%arg0: i32, %arg1: i32, %arg2: i32) -> (i32, i32) {
    %c0_i32 = arith.constant 0 : i32
    return %arg0, %arg1 : i32, i32
  }
}

module attributes {stable_mosaic.version = 11 : i64} {
  func.func @_flash_attn_kernel(%arg0: i32, %arg1: i32, %arg2: i32, %arg3: i32, %arg4: memref<1x1x24x32xbf16, #tpu.memory_space<vmem>>, %arg5: memref<1x1x24x32xbf16, #tpu.memory_space<vmem>>, %arg6: memref<1x1x24x32xbf16, #tpu.memory_space<vmem>>, %arg7: memref<1x1x24x32xbf16, #tpu.memory_space<vmem>>, %arg8: memref<24x1xf32, #tpu.memory_space<vmem>>, %arg9: memref<24x1xf32, #tpu.memory_space<vmem>>, %arg10: memref<24x32xf32, #tpu.memory_space<vmem>>) attributes {dimension_semantics = [#tpu.dimension_semantics<parallel>, #tpu.dimension_semantics<parallel>, #tpu.dimension_semantics<parallel>, #tpu.dimension_semantics<arbitrary>], iteration_bounds = array<i64: 2, 4, 1, 1>, scalar_prefetch = 0 : i64, scratch_operands = 3 : i64, tpu.core_type = #tpu.core_type<tc>, window_params = [{transform_indices = @transform_0, window_bounds = array<i64: 1, 1, 24, 32>}, {transform_indices = @transform_1, window_bounds = array<i64: 1, 1, 24, 32>}, {transform_indices = @transform_2, window_bounds = array<i64: 1, 1, 24, 32>}, {transform_indices = @transform_3, window_bounds = array<i64: 1, 1, 24, 32>}]} {
    %c0_i32 = arith.constant 0 : i32
    %0 = arith.cmpi eq, %arg3, %c0_i32 : i32
    %1 = arith.extui %0 : i1 to i32
    %c0_i32_0 = arith.constant 0 : i32
    %2 = arith.cmpi ne, %1, %c0_i32_0 : i32
    scf.if %2 {
      %cst = arith.constant 0xFF800000 : f32
      %9 = vector.broadcast %cst : f32 to vector<24x1xf32>
      %c0 = arith.constant 0 : index
      %c0_4 = arith.constant 0 : index
      %10 = vector.load %arg8[%c0, %c0_4] : memref<24x1xf32, #tpu.memory_space<vmem>>, vector<24x1xf32>
      tpu.vector_store %arg8[%c0, %c0_4], %9 {strides = array<i32>} : memref<24x1xf32, #tpu.memory_space<vmem>>, vector<24x1xf32>,
      %cst_5 = arith.constant 0.000000e+00 : f32
      %11 = vector.broadcast %cst_5 : f32 to vector<24x1xf32>
      %c0_6 = arith.constant 0 : index
      %c0_7 = arith.constant 0 : index
      %12 = vector.load %arg9[%c0_6, %c0_7] : memref<24x1xf32, #tpu.memory_space<vmem>>, vector<24x1xf32>
      tpu.vector_store %arg9[%c0_6, %c0_7], %11 {strides = array<i32>} : memref<24x1xf32, #tpu.memory_space<vmem>>, vector<24x1xf32>,
      %cst_8 = arith.constant 0.000000e+00 : f32
      %13 = vector.broadcast %cst_8 : f32 to vector<24x32xf32>
      %c0_9 = arith.constant 0 : index
      %c0_10 = arith.constant 0 : index
      %14 = vector.load %arg10[%c0_9, %c0_10] : memref<24x32xf32, #tpu.memory_space<vmem>>, vector<24x32xf32>
      tpu.vector_store %arg10[%c0_9, %c0_10], %13 {strides = array<i32>} : memref<24x32xf32, #tpu.memory_space<vmem>>, vector<24x32xf32>,
    } else {
    }
    %3 = arith.cmpi sle, %arg3, %arg2 : i32
    %4 = arith.extui %3 : i1 to i32
    %c0_i32_1 = arith.constant 0 : i32
    %5 = arith.cmpi ne, %4, %c0_i32_1 : i32
    scf.if %5 {
      %c0 = arith.constant 0 : index
      %c0_4 = arith.constant 0 : index
      %c0_5 = arith.constant 0 : index
      %c0_6 = arith.constant 0 : index
      %9 = vector.load %arg4[%c0, %c0_4, %c0_5, %c0_6] : memref<1x1x24x32xbf16, #tpu.memory_space<vmem>>, vector<1x1x24x32xbf16>
      %10 = vector.shape_cast %9 : vector<1x1x24x32xbf16> to vector<24x32xbf16>
      %c0_7 = arith.constant 0 : index
      %c0_8 = arith.constant 0 : index
      %c0_9 = arith.constant 0 : index
      %c0_10 = arith.constant 0 : index
      %11 = vector.load %arg5[%c0_7, %c0_8, %c0_9, %c0_10] : memref<1x1x24x32xbf16, #tpu.memory_space<vmem>>, vector<1x1x24x32xbf16>
      %12 = vector.shape_cast %11 : vector<1x1x24x32xbf16> to vector<24x32xbf16>
      %c0_11 = arith.constant 0 : index
      %c0_12 = arith.constant 0 : index
      %c0_13 = arith.constant 0 : index
      %c0_14 = arith.constant 0 : index
      %13 = vector.load %arg6[%c0_11, %c0_12, %c0_13, %c0_14] : memref<1x1x24x32xbf16, #tpu.memory_space<vmem>>, vector<1x1x24x32xbf16>
      %14 = vector.shape_cast %13 : vector<1x1x24x32xbf16> to vector<24x32xbf16>
      %cst = arith.constant dense<0.000000e+00> : vector<24x24xf32>
      %15 = tpu.matmul %10, %12, %cst {dimension_numbers = #tpu.dot_dimension_numbers<[1], [1], [0], [0], [0, 0, 1, 0], [], []>} : vector<24x32xbf16>, vector<24x32xbf16>, vector<24x24xf32> -> vector<24x24xf32>
      %cst_15 = arith.constant 0.176776692 : f32
      %16 = vector.broadcast %cst_15 : f32 to vector<24x24xf32>
      %17 = arith.mulf %15, %16 : vector<24x24xf32>
      %c24_i32 = arith.constant 24 : i32
      %18 = arith.muli %arg2, %c24_i32 : i32
      %19 = tpu.iota {dimensions = array<i32: 0>} : vector<24x24xi32>
      %20 = vector.broadcast %18 : i32 to vector<24x24xi32>
      %21 = arith.addi %20, %19 : vector<24x24xi32>
      %c24_i32_16 = arith.constant 24 : i32
      %22 = arith.muli %arg3, %c24_i32_16 : i32
      %23 = tpu.iota {dimensions = array<i32: 1>} : vector<24x24xi32>
      %24 = vector.broadcast %22 : i32 to vector<24x24xi32>
      %25 = arith.addi %24, %23 : vector<24x24xi32>
      %26 = arith.cmpi sle, %25, %21 : vector<24x24xi32>
      %cst_17 = arith.constant -1.000000e+30 : f32
      %27 = vector.broadcast %cst_17 : f32 to vector<24x24xf32>
      %28 = arith.select %26, %17, %27 : vector<24x24xi1>, vector<24x24xf32>
      %c0_18 = arith.constant 0 : index
      %c0_19 = arith.constant 0 : index
      %29 = vector.load %arg8[%c0_18, %c0_19] : memref<24x1xf32, #tpu.memory_space<vmem>>, vector<24x1xf32>
      %cst_20 = arith.constant dense<0xFF800000> : vector<24xf32>
      %30 = vector.multi_reduction <maximumf>, %28, %cst_20 [1] : vector<24x24xf32> to vector<24xf32>
      %31 = vector.shape_cast %30 : vector<24xf32> to vector<24x1xf32>
      %32 = arith.maximumf %29, %31 : vector<24x1xf32>
      %33 = arith.subf %29, %32 : vector<24x1xf32>
      %34 = math.exp %33 : vector<24x1xf32>
      %35 = vector.broadcast %32 : vector<24x1xf32> to vector<24x24xf32>
      %36 = arith.subf %28, %35 : vector<24x24xf32>
      %37 = math.exp %36 : vector<24x24xf32>
      %c0_21 = arith.constant 0 : index
      %c0_22 = arith.constant 0 : index
      %38 = vector.load %arg9[%c0_21, %c0_22] : memref<24x1xf32, #tpu.memory_space<vmem>>, vector<24x1xf32>
      %39 = arith.mulf %34, %38 : vector<24x1xf32>
      %cst_23 = arith.constant dense<0.000000e+00> : vector<24xf32>
      %40 = vector.multi_reduction <add>, %37, %cst_23 [1] : vector<24x24xf32> to vector<24xf32>
      %41 = vector.shape_cast %40 : vector<24xf32> to vector<24x1xf32>
      %42 = arith.addf %39, %41 : vector<24x1xf32>
      %c0_24 = arith.constant 0 : index
      %c0_25 = arith.constant 0 : index
      %43 = vector.load %arg9[%c0_24, %c0_25] : memref<24x1xf32, #tpu.memory_space<vmem>>, vector<24x1xf32>
      tpu.vector_store %arg9[%c0_24, %c0_25], %42 {strides = array<i32>} : memref<24x1xf32, #tpu.memory_space<vmem>>, vector<24x1xf32>,
      %c0_26 = arith.constant 0 : index
      %c0_27 = arith.constant 0 : index
      %44 = vector.load %arg10[%c0_26, %c0_27] : memref<24x32xf32, #tpu.memory_space<vmem>>, vector<24x32xf32>
      %45 = vector.broadcast %34 : vector<24x1xf32> to vector<24x32xf32>
      %46 = arith.mulf %45, %44 : vector<24x32xf32>
      %47 = arith.truncf %37 : vector<24x24xf32> to vector<24x24xbf16>
      %cst_28 = arith.constant dense<0.000000e+00> : vector<24x32xf32>
      %48 = tpu.matmul %47, %14, %cst_28 {dimension_numbers = #tpu.dot_dimension_numbers<[1], [0], [0], [1], [0, 0, 1, 1], [], []>} : vector<24x24xbf16>, vector<24x32xbf16>, vector<24x32xf32> -> vector<24x32xf32>
      %49 = arith.addf %46, %48 : vector<24x32xf32>
      %c0_29 = arith.constant 0 : index
      %c0_30 = arith.constant 0 : index
      %50 = vector.load %arg10[%c0_29, %c0_30] : memref<24x32xf32, #tpu.memory_space<vmem>>, vector<24x32xf32>
      tpu.vector_store %arg10[%c0_29, %c0_30], %49 {strides = array<i32>} : memref<24x32xf32, #tpu.memory_space<vmem>>, vector<24x32xf32>,
      %c0_31 = arith.constant 0 : index
      %c0_32 = arith.constant 0 : index
      %51 = vector.load %arg8[%c0_31, %c0_32] : memref<24x1xf32, #tpu.memory_space<vmem>>, vector<24x1xf32>
      tpu.vector_store %arg8[%c0_31, %c0_32], %32 {strides = array<i32>} : memref<24x1xf32, #tpu.memory_space<vmem>>, vector<24x1xf32>,
    } else {
    }
    %c0_i32_2 = arith.constant 0 : i32
    %6 = arith.cmpi eq, %arg3, %c0_i32_2 : i32
    %7 = arith.extui %6 : i1 to i32
    %c0_i32_3 = arith.constant 0 : i32
    %8 = arith.cmpi ne, %7, %c0_i32_3 : i32
    scf.if %8 {
      %c0 = arith.constant 0 : index
      %c0_4 = arith.constant 0 : index
      %9 = vector.load %arg10[%c0, %c0_4] : memref<24x32xf32, #tpu.memory_space<vmem>>, vector<24x32xf32>
      %c0_5 = arith.constant 0 : index
      %c0_6 = arith.constant 0 : index
      %10 = vector.load %arg9[%c0_5, %c0_6] : memref<24x1xf32, #tpu.memory_space<vmem>>, vector<24x1xf32>
      %11 = tpu.reciprocal %10 {approx = true} : vector<24x1xf32> -> vector<24x1xf32>
      %12 = vector.broadcast %11 : vector<24x1xf32> to vector<24x32xf32>
      %13 = arith.mulf %9, %12 : vector<24x32xf32>
      %14 = arith.truncf %13 : vector<24x32xf32> to vector<24x32xbf16>
      %c0_7 = arith.constant 0 : index
      %c0_8 = arith.constant 0 : index
      %c0_9 = arith.constant 0 : index
      %c0_10 = arith.constant 0 : index
      %15 = vector.load %arg7[%c0_7, %c0_8, %c0_9, %c0_10] : memref<1x1x24x32xbf16, #tpu.memory_space<vmem>>, vector<1x1x24x32xbf16>
      %16 = vector.shape_cast %15 : vector<1x1x24x32xbf16> to vector<24x32xbf16>
      %17 = vector.shape_cast %14 : vector<24x32xbf16> to vector<1x1x24x32xbf16>
      tpu.vector_store %arg7[%c0_7, %c0_8, %c0_9, %c0_10], %17 {strides = array<i32>} : memref<1x1x24x32xbf16, #tpu.memory_space<vmem>>, vector<1x1x24x32xbf16>,
    } else {
    }
    return
  }
  func.func @transform_0(%arg0: i32, %arg1: i32, %arg2: i32, %arg3: i32) -> (i32, i32, i32, i32) {
    %c0_i32 = arith.constant 0 : i32
    %c0_i32_0 = arith.constant 0 : i32
    return %arg0, %arg1, %arg2, %c0_i32 : i32, i32, i32, i32
  }
  func.func @transform_1(%arg0: i32, %arg1: i32, %arg2: i32, %arg3: i32) -> (i32, i32, i32, i32) {
    %c0_i32 = arith.constant 0 : i32
    %c0_i32_0 = arith.constant 0 : i32
    return %arg0, %arg1, %arg3, %c0_i32 : i32, i32, i32, i32
  }
  func.func @transform_2(%arg0: i32, %arg1: i32, %arg2: i32, %arg3: i32) -> (i32, i32, i32, i32) {
    %c0_i32 = arith.constant 0 : i32
    %c0_i32_0 = arith.constant 0 : i32
    return %arg0, %arg1, %arg3, %c0_i32 : i32, i32, i32, i32
  }
  func.func @transform_3(%arg0: i32, %arg1: i32, %arg2: i32, %arg3: i32) -> (i32, i32, i32, i32) {
    %c0_i32 = arith.constant 0 : i32
    %c0_i32_0 = arith.constant 0 : i32
    return %arg0, %arg1, %arg2, %c0_i32 : i32, i32, i32, i32
  }
}

module attributes {stable_mosaic.version = 11 : i64} {
  func.func @_matmul_kernel(%arg0: i32, %arg1: i32, %arg2: i32, %arg3: memref<48x128xbf16, #tpu.memory_space<vmem>>, %arg4: memref<128x128xbf16, #tpu.memory_space<vmem>>, %arg5: memref<48x128xbf16, #tpu.memory_space<vmem>>, %arg6: memref<48x128xbf16, #tpu.memory_space<vmem>>, %arg7: memref<48x128xf32, #tpu.memory_space<vmem>>) attributes {dimension_semantics = [#tpu.dimension_semantics<parallel>, #tpu.dimension_semantics<parallel>, #tpu.dimension_semantics<arbitrary>], iteration_bounds = array<i64: 1, 1, 1>, scalar_prefetch = 0 : i64, scratch_operands = 1 : i64, tpu.core_type = #tpu.core_type<tc>, window_params = [{transform_indices = @transform_0, window_bounds = array<i64: 48, 128>}, {transform_indices = @transform_1, window_bounds = array<i64: 128, 128>}, {transform_indices = @transform_2, window_bounds = array<i64: 48, 128>}, {transform_indices = @transform_3, window_bounds = array<i64: 48, 128>}]} {
    %c0_i32 = arith.constant 0 : i32
    %0 = arith.cmpi eq, %arg2, %c0_i32 : i32
    %1 = arith.extui %0 : i1 to i32
    %c0_i32_0 = arith.constant 0 : i32
    %2 = arith.cmpi ne, %1, %c0_i32_0 : i32
    scf.if %2 {
      %cst_10 = arith.constant 0.000000e+00 : f32
      %12 = vector.broadcast %cst_10 : f32 to vector<48x128xf32>
      %c0_11 = arith.constant 0 : index
      %c0_12 = arith.constant 0 : index
      %13 = vector.load %arg7[%c0_11, %c0_12] : memref<48x128xf32, #tpu.memory_space<vmem>>, vector<48x128xf32>
      tpu.vector_store %arg7[%c0_11, %c0_12], %12 {strides = array<i32>} : memref<48x128xf32, #tpu.memory_space<vmem>>, vector<48x128xf32>,
    } else {
    }
    %c0 = arith.constant 0 : index
    %c0_1 = arith.constant 0 : index
    %3 = vector.load %arg7[%c0, %c0_1] : memref<48x128xf32, #tpu.memory_space<vmem>>, vector<48x128xf32>
    %c0_2 = arith.constant 0 : index
    %c0_3 = arith.constant 0 : index
    %4 = vector.load %arg3[%c0_2, %c0_3] : memref<48x128xbf16, #tpu.memory_space<vmem>>, vector<48x128xbf16>
    %c0_4 = arith.constant 0 : index
    %c0_5 = arith.constant 0 : index
    %5 = vector.load %arg4[%c0_4, %c0_5] : memref<128x128xbf16, #tpu.memory_space<vmem>>, vector<128x128xbf16>
    %cst = arith.constant dense<0.000000e+00> : vector<48x128xf32>
    %6 = tpu.matmul %4, %5, %cst {dimension_numbers = #tpu.dot_dimension_numbers<[1], [0], [0], [1], [0, 0, 1, 1], [], []>} : vector<48x128xbf16>, vector<128x128xbf16>, vector<48x128xf32> -> vector<48x128xf32>
    %7 = arith.addf %3, %6 : vector<48x128xf32>
    %c0_6 = arith.constant 0 : index
    %c0_7 = arith.constant 0 : index
    %8 = vector.load %arg7[%c0_6, %c0_7] : memref<48x128xf32, #tpu.memory_space<vmem>>, vector<48x128xf32>
    tpu.vector_store %arg7[%c0_6, %c0_7], %7 {strides = array<i32>} : memref<48x128xf32, #tpu.memory_space<vmem>>, vector<48x128xf32>,
    %c0_i32_8 = arith.constant 0 : i32
    %9 = arith.cmpi eq, %arg2, %c0_i32_8 : i32
    %10 = arith.extui %9 : i1 to i32
    %c0_i32_9 = arith.constant 0 : i32
    %11 = arith.cmpi ne, %10, %c0_i32_9 : i32
    scf.if %11 {
      %c0_10 = arith.constant 0 : index
      %c0_11 = arith.constant 0 : index
      %12 = vector.load %arg7[%c0_10, %c0_11] : memref<48x128xf32, #tpu.memory_space<vmem>>, vector<48x128xf32>
      %c0_12 = arith.constant 0 : index
      %c0_13 = arith.constant 0 : index
      %13 = vector.load %arg5[%c0_12, %c0_13] : memref<48x128xbf16, #tpu.memory_space<vmem>>, vector<48x128xbf16>
      %14 = arith.extf %13 : vector<48x128xbf16> to vector<48x128xf32>
      %15 = arith.addf %12, %14 : vector<48x128xf32>
      %16 = arith.truncf %15 : vector<48x128xf32> to vector<48x128xbf16>
      %c0_14 = arith.constant 0 : index
      %c0_15 = arith.constant 0 : index
      %17 = vector.load %arg6[%c0_14, %c0_15] : memref<48x128xbf16, #tpu.memory_space<vmem>>, vector<48x128xbf16>
      tpu.vector_store %arg6[%c0_14, %c0_15], %16 {strides = array<i32>} : memref<48x128xbf16, #tpu.memory_space<vmem>>, vector<48x128xbf16>,
    } else {
    }
    return
  }
  func.func @transform_0(%arg0: i32, %arg1: i32, %arg2: i32) -> (i32, i32) {
    %c0_i32 = arith.constant 0 : i32
    return %arg0, %arg2 : i32, i32
  }
  func.func @transform_1(%arg0: i32, %arg1: i32, %arg2: i32) -> (i32, i32) {
    %c0_i32 = arith.constant 0 : i32
    return %arg2, %arg1 : i32, i32
  }
  func.func @transform_2(%arg0: i32, %arg1: i32, %arg2: i32) -> (i32, i32) {
    %c0_i32 = arith.constant 0 : i32
    return %arg0, %arg1 : i32, i32
  }
  func.func @transform_3(%arg0: i32, %arg1: i32, %arg2: i32) -> (i32, i32) {
    %c0_i32 = arith.constant 0 : i32
    return %arg0, %arg1 : i32, i32
  }
}

module attributes {stable_mosaic.version = 11 : i64} {
  func.func @_ffn_kernel(%arg0: i32, %arg1: i32, %arg2: memref<48x128xbf16, #tpu.memory_space<vmem>>, %arg3: memref<1x128xf32, #tpu.memory_space<vmem>>, %arg4: memref<128x128xbf16, #tpu.memory_space<vmem>>, %arg5: memref<128x128xbf16, #tpu.memory_space<vmem>>, %arg6: memref<128x128xbf16, #tpu.memory_space<vmem>>, %arg7: memref<48x128xbf16, #tpu.memory_space<vmem>>, %arg8: memref<48x128xf32, #tpu.memory_space<vmem>>) attributes {dimension_semantics = [#tpu.dimension_semantics<parallel>, #tpu.dimension_semantics<arbitrary>], iteration_bounds = array<i64: 1, 3>, scalar_prefetch = 0 : i64, scratch_operands = 1 : i64, tpu.core_type = #tpu.core_type<tc>, window_params = [{transform_indices = @transform_0, window_bounds = array<i64: 48, 128>}, {pipeline_mode = #tpu.pipeline_mode<synchronous>, transform_indices = @transform_1, window_bounds = array<i64: 1, 128>}, {transform_indices = @transform_2, window_bounds = array<i64: 128, 128>}, {transform_indices = @transform_3, window_bounds = array<i64: 128, 128>}, {transform_indices = @transform_4, window_bounds = array<i64: 128, 128>}, {transform_indices = @transform_5, window_bounds = array<i64: 48, 128>}]} {
    %c0_i32 = arith.constant 0 : i32
    %0 = arith.cmpi eq, %arg1, %c0_i32 : i32
    %1 = arith.extui %0 : i1 to i32
    %c0_i32_0 = arith.constant 0 : i32
    %2 = arith.cmpi ne, %1, %c0_i32_0 : i32
    scf.if %2 {
      %cst_21 = arith.constant 0.000000e+00 : f32
      %39 = vector.broadcast %cst_21 : f32 to vector<48x128xf32>
      %c0_22 = arith.constant 0 : index
      %c0_23 = arith.constant 0 : index
      %40 = vector.load %arg8[%c0_22, %c0_23] : memref<48x128xf32, #tpu.memory_space<vmem>>, vector<48x128xf32>
      tpu.vector_store %arg8[%c0_22, %c0_23], %39 {strides = array<i32>} : memref<48x128xf32, #tpu.memory_space<vmem>>, vector<48x128xf32>,
    } else {
    }
    %c0 = arith.constant 0 : index
    %c0_1 = arith.constant 0 : index
    %3 = vector.load %arg2[%c0, %c0_1] : memref<48x128xbf16, #tpu.memory_space<vmem>>, vector<48x128xbf16>
    %4 = arith.extf %3 : vector<48x128xbf16> to vector<48x128xf32>
    %5 = arith.mulf %4, %4 : vector<48x128xf32>
    %cst = arith.constant dense<0.000000e+00> : vector<48xf32>
    %6 = vector.multi_reduction <add>, %5, %cst [1] : vector<48x128xf32> to vector<48xf32>
    %7 = vector.shape_cast %6 : vector<48xf32> to vector<48x1xf32>
    %cst_2 = arith.constant 1.280000e+02 : f32
    %8 = vector.broadcast %cst_2 : f32 to vector<48x1xf32>
    %9 = arith.divf %7, %8 : vector<48x1xf32>
    %cst_3 = arith.constant 9.99999974E-6 : f32
    %10 = vector.broadcast %cst_3 : f32 to vector<48x1xf32>
    %11 = arith.addf %9, %10 : vector<48x1xf32>
    %12 = math.rsqrt %11 : vector<48x1xf32>
    %13 = vector.broadcast %12 : vector<48x1xf32> to vector<48x128xf32>
    %14 = arith.mulf %4, %13 : vector<48x128xf32>
    %c0_4 = arith.constant 0 : index
    %c0_5 = arith.constant 0 : index
    %15 = vector.load %arg3[%c0_4, %c0_5] : memref<1x128xf32, #tpu.memory_space<vmem>>, vector<1x128xf32>
    %16 = vector.broadcast %15 : vector<1x128xf32> to vector<48x128xf32>
    %17 = arith.mulf %14, %16 : vector<48x128xf32>
    %18 = arith.truncf %17 : vector<48x128xf32> to vector<48x128xbf16>
    %c0_6 = arith.constant 0 : index
    %c0_7 = arith.constant 0 : index
    %19 = vector.load %arg4[%c0_6, %c0_7] : memref<128x128xbf16, #tpu.memory_space<vmem>>, vector<128x128xbf16>
    %cst_8 = arith.constant dense<0.000000e+00> : vector<48x128xf32>
    %20 = tpu.matmul %18, %19, %cst_8 {dimension_numbers = #tpu.dot_dimension_numbers<[1], [0], [0], [1], [0, 0, 1, 1], [], []>} : vector<48x128xbf16>, vector<128x128xbf16>, vector<48x128xf32> -> vector<48x128xf32>
    %c0_9 = arith.constant 0 : index
    %c0_10 = arith.constant 0 : index
    %21 = vector.load %arg5[%c0_9, %c0_10] : memref<128x128xbf16, #tpu.memory_space<vmem>>, vector<128x128xbf16>
    %cst_11 = arith.constant dense<0.000000e+00> : vector<48x128xf32>
    %22 = tpu.matmul %18, %21, %cst_11 {dimension_numbers = #tpu.dot_dimension_numbers<[1], [0], [0], [1], [0, 0, 1, 1], [], []>} : vector<48x128xbf16>, vector<128x128xbf16>, vector<48x128xf32> -> vector<48x128xf32>
    %23 = arith.negf %20 : vector<48x128xf32>
    %24 = math.exp %23 : vector<48x128xf32>
    %cst_12 = arith.constant 1.000000e+00 : f32
    %25 = vector.broadcast %cst_12 : f32 to vector<48x128xf32>
    %26 = arith.addf %25, %24 : vector<48x128xf32>
    %27 = arith.divf %25, %26 : vector<48x128xf32>
    %28 = arith.mulf %20, %27 : vector<48x128xf32>
    %29 = arith.mulf %28, %22 : vector<48x128xf32>
    %c0_13 = arith.constant 0 : index
    %c0_14 = arith.constant 0 : index
    %30 = vector.load %arg8[%c0_13, %c0_14] : memref<48x128xf32, #tpu.memory_space<vmem>>, vector<48x128xf32>
    %31 = arith.truncf %29 : vector<48x128xf32> to vector<48x128xbf16>
    %c0_15 = arith.constant 0 : index
    %c0_16 = arith.constant 0 : index
    %32 = vector.load %arg6[%c0_15, %c0_16] : memref<128x128xbf16, #tpu.memory_space<vmem>>, vector<128x128xbf16>
    %cst_17 = arith.constant dense<0.000000e+00> : vector<48x128xf32>
    %33 = tpu.matmul %31, %32, %cst_17 {dimension_numbers = #tpu.dot_dimension_numbers<[1], [0], [0], [1], [0, 0, 1, 1], [], []>} : vector<48x128xbf16>, vector<128x128xbf16>, vector<48x128xf32> -> vector<48x128xf32>
    %34 = arith.addf %30, %33 : vector<48x128xf32>
    %c0_18 = arith.constant 0 : index
    %c0_19 = arith.constant 0 : index
    %35 = vector.load %arg8[%c0_18, %c0_19] : memref<48x128xf32, #tpu.memory_space<vmem>>, vector<48x128xf32>
    tpu.vector_store %arg8[%c0_18, %c0_19], %34 {strides = array<i32>} : memref<48x128xf32, #tpu.memory_space<vmem>>, vector<48x128xf32>,
    %c2_i32 = arith.constant 2 : i32
    %36 = arith.cmpi eq, %arg1, %c2_i32 : i32
    %37 = arith.extui %36 : i1 to i32
    %c0_i32_20 = arith.constant 0 : i32
    %38 = arith.cmpi ne, %37, %c0_i32_20 : i32
    scf.if %38 {
      %c0_21 = arith.constant 0 : index
      %c0_22 = arith.constant 0 : index
      %39 = vector.load %arg8[%c0_21, %c0_22] : memref<48x128xf32, #tpu.memory_space<vmem>>, vector<48x128xf32>
      %c0_23 = arith.constant 0 : index
      %c0_24 = arith.constant 0 : index
      %40 = vector.load %arg2[%c0_23, %c0_24] : memref<48x128xbf16, #tpu.memory_space<vmem>>, vector<48x128xbf16>
      %41 = arith.extf %40 : vector<48x128xbf16> to vector<48x128xf32>
      %42 = arith.addf %39, %41 : vector<48x128xf32>
      %43 = arith.truncf %42 : vector<48x128xf32> to vector<48x128xbf16>
      %c0_25 = arith.constant 0 : index
      %c0_26 = arith.constant 0 : index
      %44 = vector.load %arg7[%c0_25, %c0_26] : memref<48x128xbf16, #tpu.memory_space<vmem>>, vector<48x128xbf16>
      tpu.vector_store %arg7[%c0_25, %c0_26], %43 {strides = array<i32>} : memref<48x128xbf16, #tpu.memory_space<vmem>>, vector<48x128xbf16>,
    } else {
    }
    return
  }
  func.func @transform_0(%arg0: i32, %arg1: i32) -> (i32, i32) {
    %c0_i32 = arith.constant 0 : i32
    %c0_i32_0 = arith.constant 0 : i32
    return %arg0, %c0_i32 : i32, i32
  }
  func.func @transform_1(%arg0: i32, %arg1: i32) -> (i32, i32) {
    %c0_i32 = arith.constant 0 : i32
    %c0_i32_0 = arith.constant 0 : i32
    %c0_i32_1 = arith.constant 0 : i32
    return %c0_i32, %c0_i32_0 : i32, i32
  }
  func.func @transform_2(%arg0: i32, %arg1: i32) -> (i32, i32) {
    %c0_i32 = arith.constant 0 : i32
    %c0_i32_0 = arith.constant 0 : i32
    return %c0_i32, %arg1 : i32, i32
  }
  func.func @transform_3(%arg0: i32, %arg1: i32) -> (i32, i32) {
    %c0_i32 = arith.constant 0 : i32
    %c0_i32_0 = arith.constant 0 : i32
    return %c0_i32, %arg1 : i32, i32
  }
  func.func @transform_4(%arg0: i32, %arg1: i32) -> (i32, i32) {
    %c0_i32 = arith.constant 0 : i32
    %c0_i32_0 = arith.constant 0 : i32
    return %arg1, %c0_i32 : i32, i32
  }
  func.func @transform_5(%arg0: i32, %arg1: i32) -> (i32, i32) {
    %c0_i32 = arith.constant 0 : i32
    %c0_i32_0 = arith.constant 0 : i32
    return %arg0, %c0_i32 : i32, i32
  }
}

module attributes {stable_mosaic.version = 11 : i64} {
  func.func @_final_layer_kernel(%arg0: i32, %arg1: i32, %arg2: memref<1x24x128xbf16, #tpu.memory_space<vmem>>, %arg3: memref<1x1x128xf32, #tpu.memory_space<vmem>>, %arg4: memref<1x1x128xf32, #tpu.memory_space<vmem>>, %arg5: memref<128x128xbf16, #tpu.memory_space<vmem>>, %arg6: memref<1x128xf32, #tpu.memory_space<vmem>>, %arg7: memref<1x24x128xf32, #tpu.memory_space<vmem>>) attributes {dimension_semantics = [#tpu.dimension_semantics<parallel>, #tpu.dimension_semantics<parallel>], iteration_bounds = array<i64: 2, 1>, scalar_prefetch = 0 : i64, scratch_operands = 0 : i64, tpu.core_type = #tpu.core_type<tc>, window_params = [{transform_indices = @transform_0, window_bounds = array<i64: 1, 24, 128>}, {transform_indices = @transform_1, window_bounds = array<i64: 1, 1, 128>}, {transform_indices = @transform_2, window_bounds = array<i64: 1, 1, 128>}, {pipeline_mode = #tpu.pipeline_mode<synchronous>, transform_indices = @transform_3, window_bounds = array<i64: 128, 128>}, {pipeline_mode = #tpu.pipeline_mode<synchronous>, transform_indices = @transform_4, window_bounds = array<i64: 1, 128>}, {transform_indices = @transform_5, window_bounds = array<i64: 1, 24, 128>}]} {
    %c0 = arith.constant 0 : index
    %c0_0 = arith.constant 0 : index
    %c0_1 = arith.constant 0 : index
    %0 = vector.load %arg2[%c0, %c0_0, %c0_1] : memref<1x24x128xbf16, #tpu.memory_space<vmem>>, vector<1x24x128xbf16>
    %1 = vector.shape_cast %0 : vector<1x24x128xbf16> to vector<24x128xbf16>
    %2 = arith.extf %1 : vector<24x128xbf16> to vector<24x128xf32>
    %cst = arith.constant dense<0.000000e+00> : vector<24xf32>
    %3 = vector.multi_reduction <add>, %2, %cst [1] : vector<24x128xf32> to vector<24xf32>
    %4 = vector.shape_cast %3 : vector<24xf32> to vector<24x1xf32>
    %cst_2 = arith.constant 1.280000e+02 : f32
    %5 = vector.broadcast %cst_2 : f32 to vector<24x1xf32>
    %6 = arith.divf %4, %5 : vector<24x1xf32>
    %7 = vector.broadcast %6 : vector<24x1xf32> to vector<24x128xf32>
    %8 = arith.subf %2, %7 : vector<24x128xf32>
    %9 = vector.broadcast %6 : vector<24x1xf32> to vector<24x128xf32>
    %10 = arith.subf %2, %9 : vector<24x128xf32>
    %11 = arith.mulf %8, %10 : vector<24x128xf32>
    %cst_3 = arith.constant dense<0.000000e+00> : vector<24xf32>
    %12 = vector.multi_reduction <add>, %11, %cst_3 [1] : vector<24x128xf32> to vector<24xf32>
    %13 = vector.shape_cast %12 : vector<24xf32> to vector<24x1xf32>
    %cst_4 = arith.constant 1.280000e+02 : f32
    %14 = vector.broadcast %cst_4 : f32 to vector<24x1xf32>
    %15 = arith.divf %13, %14 : vector<24x1xf32>
    %16 = vector.broadcast %6 : vector<24x1xf32> to vector<24x128xf32>
    %17 = arith.subf %2, %16 : vector<24x128xf32>
    %cst_5 = arith.constant 9.99999997E-7 : f32
    %18 = vector.broadcast %cst_5 : f32 to vector<24x1xf32>
    %19 = arith.addf %15, %18 : vector<24x1xf32>
    %20 = math.rsqrt %19 : vector<24x1xf32>
    %21 = vector.broadcast %20 : vector<24x1xf32> to vector<24x128xf32>
    %22 = arith.mulf %17, %21 : vector<24x128xf32>
    %c0_6 = arith.constant 0 : index
    %c0_7 = arith.constant 0 : index
    %c0_8 = arith.constant 0 : index
    %23 = vector.load %arg4[%c0_6, %c0_7, %c0_8] : memref<1x1x128xf32, #tpu.memory_space<vmem>>, vector<1x1x128xf32>
    %24 = vector.shape_cast %23 : vector<1x1x128xf32> to vector<1x128xf32>
    %cst_9 = arith.constant 1.000000e+00 : f32
    %25 = vector.broadcast %cst_9 : f32 to vector<1x128xf32>
    %26 = arith.addf %25, %24 : vector<1x128xf32>
    %27 = vector.broadcast %26 : vector<1x128xf32> to vector<24x128xf32>
    %28 = arith.mulf %22, %27 : vector<24x128xf32>
    %c0_10 = arith.constant 0 : index
    %c0_11 = arith.constant 0 : index
    %c0_12 = arith.constant 0 : index
    %29 = vector.load %arg3[%c0_10, %c0_11, %c0_12] : memref<1x1x128xf32, #tpu.memory_space<vmem>>, vector<1x1x128xf32>
    %30 = vector.shape_cast %29 : vector<1x1x128xf32> to vector<1x128xf32>
    %31 = vector.broadcast %30 : vector<1x128xf32> to vector<24x128xf32>
    %32 = arith.addf %28, %31 : vector<24x128xf32>
    %33 = arith.truncf %32 : vector<24x128xf32> to vector<24x128xbf16>
    %c0_13 = arith.constant 0 : index
    %c0_14 = arith.constant 0 : index
    %34 = vector.load %arg5[%c0_13, %c0_14] : memref<128x128xbf16, #tpu.memory_space<vmem>>, vector<128x128xbf16>
    %cst_15 = arith.constant dense<0.000000e+00> : vector<24x128xf32>
    %35 = tpu.matmul %33, %34, %cst_15 {dimension_numbers = #tpu.dot_dimension_numbers<[1], [0], [0], [1], [0, 0, 1, 1], [], []>} : vector<24x128xbf16>, vector<128x128xbf16>, vector<24x128xf32> -> vector<24x128xf32>
    %c0_16 = arith.constant 0 : index
    %c0_17 = arith.constant 0 : index
    %36 = vector.load %arg6[%c0_16, %c0_17] : memref<1x128xf32, #tpu.memory_space<vmem>>, vector<1x128xf32>
    %37 = vector.broadcast %36 : vector<1x128xf32> to vector<24x128xf32>
    %38 = arith.addf %35, %37 : vector<24x128xf32>
    %c0_18 = arith.constant 0 : index
    %c0_19 = arith.constant 0 : index
    %c0_20 = arith.constant 0 : index
    %39 = vector.load %arg7[%c0_18, %c0_19, %c0_20] : memref<1x24x128xf32, #tpu.memory_space<vmem>>, vector<1x24x128xf32>
    %40 = vector.shape_cast %39 : vector<1x24x128xf32> to vector<24x128xf32>
    %41 = vector.shape_cast %38 : vector<24x128xf32> to vector<1x24x128xf32>
    tpu.vector_store %arg7[%c0_18, %c0_19, %c0_20], %41 {strides = array<i32>} : memref<1x24x128xf32, #tpu.memory_space<vmem>>, vector<1x24x128xf32>,
    return
  }
  func.func @transform_0(%arg0: i32, %arg1: i32) -> (i32, i32, i32) {
    %c0_i32 = arith.constant 0 : i32
    %c0_i32_0 = arith.constant 0 : i32
    return %arg0, %arg1, %c0_i32 : i32, i32, i32
  }
  func.func @transform_1(%arg0: i32, %arg1: i32) -> (i32, i32, i32) {
    %c0_i32 = arith.constant 0 : i32
    %c0_i32_0 = arith.constant 0 : i32
    %c0_i32_1 = arith.constant 0 : i32
    return %arg0, %c0_i32, %c0_i32_0 : i32, i32, i32
  }
  func.func @transform_2(%arg0: i32, %arg1: i32) -> (i32, i32, i32) {
    %c0_i32 = arith.constant 0 : i32
    %c0_i32_0 = arith.constant 0 : i32
    %c0_i32_1 = arith.constant 0 : i32
    return %arg0, %c0_i32, %c0_i32_0 : i32, i32, i32
  }
  func.func @transform_3(%arg0: i32, %arg1: i32) -> (i32, i32) {
    %c0_i32 = arith.constant 0 : i32
    %c0_i32_0 = arith.constant 0 : i32
    %c0_i32_1 = arith.constant 0 : i32
    return %c0_i32, %c0_i32_0 : i32, i32
  }
  func.func @transform_4(%arg0: i32, %arg1: i32) -> (i32, i32) {
    %c0_i32 = arith.constant 0 : i32
    %c0_i32_0 = arith.constant 0 : i32
    %c0_i32_1 = arith.constant 0 : i32
    return %c0_i32, %c0_i32_0 : i32, i32
  }
  func.func @transform_5(%arg0: i32, %arg1: i32) -> (i32, i32, i32) {
    %c0_i32 = arith.constant 0 : i32
    %c0_i32_0 = arith.constant 0 : i32
    return %arg0, %arg1, %c0_i32 : i32, i32, i32
  }
}

module attributes {stable_mosaic.version = 11 : i64} {
  func.func @_rmsnorm_matmul_kernel(%arg0: i32, %arg1: i32, %arg2: memref<48x128xbf16, #tpu.memory_space<vmem>>, %arg3: memref<1x128xf32, #tpu.memory_space<vmem>>, %arg4: memref<128x128xbf16, #tpu.memory_space<vmem>>, %arg5: memref<48x128xf32, #tpu.memory_space<vmem>>) attributes {dimension_semantics = [#tpu.dimension_semantics<parallel>, #tpu.dimension_semantics<parallel>], iteration_bounds = array<i64: 1, 1>, scalar_prefetch = 0 : i64, scratch_operands = 0 : i64, tpu.core_type = #tpu.core_type<tc>, window_params = [{transform_indices = @transform_0, window_bounds = array<i64: 48, 128>}, {pipeline_mode = #tpu.pipeline_mode<synchronous>, transform_indices = @transform_1, window_bounds = array<i64: 1, 128>}, {transform_indices = @transform_2, window_bounds = array<i64: 128, 128>}, {transform_indices = @transform_3, window_bounds = array<i64: 48, 128>}]} {
    %c0 = arith.constant 0 : index
    %c0_0 = arith.constant 0 : index
    %0 = vector.load %arg2[%c0, %c0_0] : memref<48x128xbf16, #tpu.memory_space<vmem>>, vector<48x128xbf16>
    %1 = arith.extf %0 : vector<48x128xbf16> to vector<48x128xf32>
    %2 = arith.mulf %1, %1 : vector<48x128xf32>
    %cst = arith.constant dense<0.000000e+00> : vector<48xf32>
    %3 = vector.multi_reduction <add>, %2, %cst [1] : vector<48x128xf32> to vector<48xf32>
    %4 = vector.shape_cast %3 : vector<48xf32> to vector<48x1xf32>
    %cst_1 = arith.constant 1.280000e+02 : f32
    %5 = vector.broadcast %cst_1 : f32 to vector<48x1xf32>
    %6 = arith.divf %4, %5 : vector<48x1xf32>
    %cst_2 = arith.constant 9.99999974E-6 : f32
    %7 = vector.broadcast %cst_2 : f32 to vector<48x1xf32>
    %8 = arith.addf %6, %7 : vector<48x1xf32>
    %9 = math.rsqrt %8 : vector<48x1xf32>
    %10 = vector.broadcast %9 : vector<48x1xf32> to vector<48x128xf32>
    %11 = arith.mulf %1, %10 : vector<48x128xf32>
    %c0_3 = arith.constant 0 : index
    %c0_4 = arith.constant 0 : index
    %12 = vector.load %arg3[%c0_3, %c0_4] : memref<1x128xf32, #tpu.memory_space<vmem>>, vector<1x128xf32>
    %13 = vector.broadcast %12 : vector<1x128xf32> to vector<48x128xf32>
    %14 = arith.mulf %11, %13 : vector<48x128xf32>
    %15 = arith.truncf %14 : vector<48x128xf32> to vector<48x128xbf16>
    %c0_5 = arith.constant 0 : index
    %c0_6 = arith.constant 0 : index
    %16 = vector.load %arg4[%c0_5, %c0_6] : memref<128x128xbf16, #tpu.memory_space<vmem>>, vector<128x128xbf16>
    %cst_7 = arith.constant dense<0.000000e+00> : vector<48x128xf32>
    %17 = tpu.matmul %15, %16, %cst_7 {dimension_numbers = #tpu.dot_dimension_numbers<[1], [0], [0], [1], [0, 0, 1, 1], [], []>} : vector<48x128xbf16>, vector<128x128xbf16>, vector<48x128xf32> -> vector<48x128xf32>
    %c0_8 = arith.constant 0 : index
    %c0_9 = arith.constant 0 : index
    %18 = vector.load %arg5[%c0_8, %c0_9] : memref<48x128xf32, #tpu.memory_space<vmem>>, vector<48x128xf32>
    tpu.vector_store %arg5[%c0_8, %c0_9], %17 {strides = array<i32>} : memref<48x128xf32, #tpu.memory_space<vmem>>, vector<48x128xf32>,
    return
  }
  func.func @transform_0(%arg0: i32, %arg1: i32) -> (i32, i32) {
    %c0_i32 = arith.constant 0 : i32
    %c0_i32_0 = arith.constant 0 : i32
    return %arg0, %c0_i32 : i32, i32
  }
  func.func @transform_1(%arg0: i32, %arg1: i32) -> (i32, i32) {
    %c0_i32 = arith.constant 0 : i32
    %c0_i32_0 = arith.constant 0 : i32
    %c0_i32_1 = arith.constant 0 : i32
    return %c0_i32, %c0_i32_0 : i32, i32
  }
  func.func @transform_2(%arg0: i32, %arg1: i32) -> (i32, i32) {
    %c0_i32 = arith.constant 0 : i32
    %c0_i32_0 = arith.constant 0 : i32
    return %c0_i32, %arg1 : i32, i32
  }
  func.func @transform_3(%arg0: i32, %arg1: i32) -> (i32, i32) {
    %c0_i32 = arith.constant 0 : i32
    return %arg0, %arg1 : i32, i32
  }
}

</mosaic_0001>

<llo_original>
// kernel: _lambda_.11
$region0: #{_lambda_.11}
  #allocation0 [shape = 'u32[]', space=smem, size = 0x4, offset = 0x4, fixed_abs, tag = 'smem constant byte address 0x4 - core index']
  #allocation1 [shape = 'u32[144,128]{1,0:T(1,128)}', space=vmem, size = 0x12000, scoped, tag = 'internal scratch']
  #allocation2 [shape = 'f32[32,128]{1,0:T(8,128)}', space=vmem, size = 0x4000, scoped, tag = 'scratch operand']
  %s0 = inlined_call_operand.vmem [shape: bf16[32,8], index: 0, kind: input, shape index: {}]
  %s1 = inlined_call_operand.vmem [shape: bf16[8,128], index: 1, kind: input, shape index: {}]
  %s2 = inlined_call_operand.vmem [shape: f32[1,128], index: 2, kind: input, shape index: {}]
  %s3 = inlined_call_operand.vmem [shape: f32[32,128], index: 3, kind: output, shape index: {}]
  %s4 = sld [smem:[#allocation0]]
  $region30: #{_lambda_.11} parent=0
    _
  %s6 = ssub.s32 1, %s4
  %s7 = scalar_select 0, %s6, %s4
  // Predicated region
  $region2: #{_lambda_.11} parent=0 // pred_check
    _
  $region3: #{_lambda_.11} parent=0 // pred_check_branch
    %9 = sbr.rel (0) target = $region5
  $region4: #{_lambda_.11} parent=0 // pred_region
    _
  $region5: #{_lambda_.11} parent=0 // pred_fallthru
    _
  // Predicated region
  $region6: #{_lambda_.11} parent=0 // pred_check
    _
  $region7: #{_lambda_.11} parent=0 // pred_check_branch
    %11 = sbr.rel (0) target = $region9
  $region8: #{_lambda_.11} parent=0 // pred_region
    _
  $region9: #{_lambda_.11} parent=0 // pred_fallthru
    _
  // Predicated region
  $region10: #{_lambda_.11} parent=0 // pred_check
    _
  $region11: #{_lambda_.11} parent=0 // pred_check_branch
    %13 = sbr.rel (0) target = $region13
  $region12: #{_lambda_.11} parent=0 // pred_region
    _
  $region13: #{_lambda_.11} parent=0 // pred_fallthru
    _
  %p15 = scmp.eq.s32.totalorder 0, 0
  // Predicated region
  $region14: #{_lambda_.11} parent=0 // pred_check
    %p16 = pneg %p15
  $region15: #{_lambda_.11} parent=0 // pred_check_branch
    %18 = sbr.rel (%p16) target = $region17
  $region16: #{_lambda_.11} parent=0 // pred_region
    %19 = vst [vmem:[#allocation2] sm:$0xff] 0.0
    %20 = vst [vmem:[#allocation2 + $0x8] sm:$0xff] 0.0
    %21 = vst [vmem:[#allocation2 + $0x10] sm:$0xff] 0.0
    %22 = vst [vmem:[#allocation2 + $0x18] sm:$0xff] 0.0
  $region17: #{_lambda_.11} parent=0 // pred_fallthru
    _
  %v23 = vld [vmem:[#allocation2] sm:$0xff]
  %v24 = vld [vmem:[#allocation2 + $0x8] sm:$0xff]
  %v25 = vld [vmem:[#allocation2 + $0x10] sm:$0xff]
  %v26 = vld [vmem:[#allocation2 + $0x18] sm:$0xff]
  %v27 = vld [vmem:[%s0] sm:$0xf]
  %v28 = vld [vmem:[%s0 + $0x4] sm:$0xf]
  %v29 = vld [vmem:[%s0 + $0x8] sm:$0xf]
  %v30 = vld [vmem:[%s0 + $0xc] sm:$0xf]
  %v31 = vld [vmem:[%s1] sm:$0xf]
  %v36 = vunpack.c.l.b16 %v27
  %v37 = vunpack.c.l.b16 %v28
  %v38 = vunpack.c.l.b16 %v29
  %v39 = vunpack.c.l.b16 %v30
  %v40 = vpack.c.b16 %v37, %v36
  %v41 = vpack.c.b16 %v39, %v38
  %vm42 = vcmask 64512
  %v44 = vsel %vm42, %v40, 0
  %v47 = vsel %vm42, %v41, 0
  %vm49 = vcmask 1043456
  %v51 = vsel %vm49, %v31, 0
  %53 = vmatprep.subr.bf16.mxu0 0
  %54 = vmatpush1.bf16.msra.mxu0 %v51
  %55 = vmatprep.subr.bf16.mxu0 0
  %56 = vmatpush1.bf16.msra.mxu0 0
  %57 = vmatprep.subr.bf16.mxu0 0
  %58 = vmatpush1.bf16.msra.mxu0 0
  %59 = vmatprep.subr.bf16.mxu0 0
  %60 = vmatpush1.bf16.msra.mxu0 0
  %61 = vmatprep.subr.bf16.mxu0 0
  %62 = vmatpush1.bf16.msra.mxu0 0
  %63 = vmatprep.subr.bf16.mxu0 0
  %64 = vmatpush1.bf16.msra.mxu0 0
  %65 = vmatprep.subr.bf16.mxu0 0
  %66 = vmatpush1.bf16.msra.mxu0 0
  %67 = vmatprep.subr.bf16.mxu0 0
  %68 = vmatpush1.bf16.msra.mxu0 0
  %69 = vmatprep.subr.bf16.mxu0 0
  %70 = vmatpush1.bf16.msra.mxu0 0
  %71 = vmatprep.subr.bf16.mxu0 0
  %72 = vmatpush1.bf16.msra.mxu0 0
  %73 = vmatprep.subr.bf16.mxu0 0
  %74 = vmatpush1.bf16.msra.mxu0 0
  %75 = vmatprep.subr.bf16.mxu0 0
  %76 = vmatpush1.bf16.msra.mxu0 0
  %77 = vmatprep.subr.bf16.mxu0 0
  %78 = vmatpush1.bf16.msra.mxu0 0
  %79 = vmatprep.subr.bf16.mxu0 0
  %80 = vmatpush1.bf16.msra.mxu0 0
  %81 = vmatprep.subr.bf16.mxu0 0
  %82 = vmatpush1.bf16.msra.mxu0 0
  %83 = vmatprep.subr.bf16.mxu0 0
  %84 = vmatpush1.bf16.msra.mxu0 0
  %85 = vmatprep.mubr.bf16.mxu0 0
  %86 = vmatmul.mubr.bf16.gmra.mrb[0].mxu0 %v44
  %v87 = vpop.f32.mrb[0].mxu0
  %v88 = vadd.f32 0.0, %v87
  %v89 = vpop.f32.mrb[0].mxu0
  %v90 = vpop.f32.mrb[0].mxu0
  %v91 = vadd.f32 0.0, %v90
  %v92 = vpop.f32.mrb[0].mxu0
  %93 = vmatprep.mubr.bf16.mxu0 0
  %94 = vmatmul.mubr.bf16.gmra.mrb[0].mxu0 %v47
  %v95 = vpop.f32.mrb[0].mxu0
  %v96 = vadd.f32 0.0, %v95
  %v97 = vpop.f32.mrb[0].mxu0
  %v98 = vpop.f32.mrb[0].mxu0
  %v99 = vadd.f32 0.0, %v98
  %v100 = vpop.f32.mrb[0].mxu0
  %101 = vdwg.mxu0
  %v102 = vadd.f32 %v23, %v88
  %v103 = vadd.f32 %v24, %v91
  %v104 = vadd.f32 %v25, %v96
  %v105 = vadd.f32 %v26, %v99
  %106 = vst [vmem:[#allocation2] sm:$0xff] %v102
  %107 = vst [vmem:[#allocation2 + $0x8] sm:$0xff] %v103
  %108 = vst [vmem:[#allocation2 + $0x10] sm:$0xff] %v104
  %109 = vst [vmem:[#allocation2 + $0x18] sm:$0xff] %v105
  // Predicated region
  $region18: #{_lambda_.11} parent=0 // pred_check
    %p110 = pneg %p15
  $region19: #{_lambda_.11} parent=0 // pred_check_branch
    %112 = sbr.rel (%p110) target = $region21
  $region20: #{_lambda_.11} parent=0 // pred_region
    %v113 = vld [vmem:[#allocation2] sm:$0xff]
    %v114 = vld [vmem:[#allocation2 + $0x8] sm:$0xff]
    %v115 = vld [vmem:[#allocation2 + $0x10] sm:$0xff]
    %v116 = vld [vmem:[#allocation2 + $0x18] sm:$0xff]
    %v117 = vld [vmem:[%s2] sm:$0x1]
    %v119 = vlaneseq
    %v120 = vshrl.u32 %v119, 7
    %v121 = vsub.s32 0, %v120
    %v122 = vrot.slane %v117, %v121
    %v124 = vadd.f32 %v113, %v122
    %v125 = vadd.f32 %v114, %v122
    %v126 = vadd.f32 %v115, %v122
    %v127 = vadd.f32 %v116, %v122
    %128 = vst [vmem:[%s3] sm:$0xff] %v124
    %129 = vst [vmem:[%s3 + $0x8] sm:$0xff] %v125
    %130 = vst [vmem:[%s3 + $0x10] sm:$0xff] %v126
    %131 = vst [vmem:[%s3 + $0x18] sm:$0xff] %v127
  $region21: #{_lambda_.11} parent=0 // pred_fallthru
    _
  // Predicated region
  $region22: #{_lambda_.11} parent=0 // pred_check
    _
  $region23: #{_lambda_.11} parent=0 // pred_check_branch
    %133 = sbr.rel (0) target = $region25
  $region24: #{_lambda_.11} parent=0 // pred_region
    _
  $region25: #{_lambda_.11} parent=0 // pred_fallthru
    _
  // Predicated region
  $region26: #{_lambda_.11} parent=0 // pred_check
    _
  $region27: #{_lambda_.11} parent=0 // pred_check_branch
    %135 = sbr.rel (0) target = $region29
  $region28: #{_lambda_.11} parent=0 // pred_region
    _
  $region29: #{_lambda_.11} parent=0 // pred_fallthru
    _

// kernel: _lambda_.12
$region0: #{_lambda_.12}
  #allocation0 [shape = 'u32[]', space=smem, size = 0x4, offset = 0x4, fixed_abs, tag = 'smem constant byte address 0x4 - core index']
  #allocation1 [shape = 'u32[144,128]{1,0:T(1,128)}', space=vmem, size = 0x12000, scoped, tag = 'internal scratch']
  %s0 = inlined_call_operand.vmem [shape: bf16[48,128], index: 0, kind: input, shape index: {}]
  %s1 = inlined_call_operand.vmem [shape: f32[1,128], index: 1, kind: input, shape index: {}]
  %s2 = inlined_call_operand.vmem [shape: bf16[128,384], index: 2, kind: input, shape index: {}]
  %s3 = inlined_call_operand.vmem [shape: bf16[48,384], index: 3, kind: output, shape index: {}]
  %s4 = sld [smem:[#allocation0]]
  $region123: #{_lambda_.12} parent=0
    _
  %s6 = ssub.s32 1, %s4
  %s7 = scalar_select 0, %s6, %s4
  $region1: #{_lambda_.12} parent=0
    #allocation2 [shape = 'u8[65536]{0}', space=vmem, size = 0x10000, scoped, tag = 'input window, operand 2']
    #allocation3 [shape = 'u8[24576]{0}', space=vmem, size = 0x6000, scoped, tag = 'output window, operand 0']
    loop: start=0, step=1, limit=5
    $region2: #{_lambda_.12} parent=1 // loop_pre_header
      _
    $region3: #{_lambda_.12} parent=1 // loop_header
      %s9 = sphi 0, %s13
      %p10 = scmp.ge.s32.totalorder %s9, 5
      %s16 = sphi 0, %s28
      %s17 = sphi 0, %s24
      %s18 = sphi 0, %s16
      %s19 = sphi 0, %s17
      %s20 = sphi 0, %s18
      %s21 = sphi 0, %s19
      %s31 = sphi 0, %s33
      %s34 = sphi 0, %s31
      %s35 = sphi 0, %s34
      %s51 = sphi 0, %s35
      %s55 = sphi 0, %s55
      %s57 = sphi 0, %s55
      %s58 = sphi 0, %s57
      %s72 = sphi 0, %s58
      %s78 = sphi 0, %s80
      %s81 = sphi 0, %s78
      %s82 = sphi 0, %s81
      %s98 = sphi 0, %s82
      %s106 = sphi 0, %s108
      %s109 = sphi 0, %s106
      %s110 = sphi 0, %s109
      %s126 = sphi 0, %s110
    $region4: #{_lambda_.12} parent=1 // loop_header_branch
      %12 = sbr.rel (%p10) target = $region8
    $region5: #{_lambda_.12} parent=1 // loop_body
      %s14 = ssub.s32 %s9, 1
      %s15 = ssub.s32 %s9, 2
      %s22 = sadd.s32 1, %s17
      %p23 = scmp.ge.s32.totalorder %s22, 3
      %s24 = scalar_select %p23, 0, %s22
      %s25 = sadd.s32 1, %s16
      %s26 = scalar_select %p23, %s25, %s16
      %p27 = scmp.ge.s32.totalorder %s26, 1
      %s28 = scalar_select %p27, 0, %s26
      %s29 = ssub.s32 %s16, %s28
      %p30 = scmp.eq.s32.totalorder %s29, 0
      %s32 = sadd.s32 %s31, 1
      %s33 = scalar_select %p30, %s31, %s32
      %p36 = pneg %p30
      %p37 = scmp.eq.s32.totalorder %s9, 2
      %p38 = por %p36, %p37
      %p39 = scmp.ne.s32.totalorder %s31, %s34
      %p40 = scmp.eq.s32.totalorder %s9, 0
      %p41 = por %p39, %p40
      %p42 = scmp.ne.s32.totalorder %s31, %s34
      %p43 = scmp.eq.s32.totalorder %s14, 2
      %p44 = por %p42, %p43
      %p45 = scmp.ne.s32.totalorder %s34, %s35
      %p46 = scmp.eq.s32.totalorder %s14, 0
      %p47 = por %p45, %p46
      %p48 = scmp.ne.s32.totalorder %s34, %s35
      %p49 = scmp.eq.s32.totalorder %s15, 2
      %p50 = por %p48, %p49
      %p52 = scmp.ne.s32.totalorder %s35, %s51
      %p53 = scmp.eq.s32.totalorder %s15, 0
      %p54 = por %p52, %p53
      %s56 = sadd.s32 %s55, 1
      %p59 = scmp.eq.s32.totalorder %s9, 2
      %p60 = scmp.ne.s32.totalorder %s55, %s57
      %p61 = scmp.eq.s32.totalorder %s9, 0
      %p62 = por %p60, %p61
      %p63 = scmp.ne.s32.totalorder %s55, %s57
      %p64 = scmp.eq.s32.totalorder %s14, 2
      %p65 = por %p63, %p64
      %p66 = scmp.ne.s32.totalorder %s57, %s58
      %p67 = scmp.eq.s32.totalorder %s14, 0
      %p68 = por %p66, %p67
      %p69 = scmp.ne.s32.totalorder %s57, %s58
      %p70 = scmp.eq.s32.totalorder %s15, 2
      %p71 = por %p69, %p70
      %p73 = scmp.ne.s32.totalorder %s58, %s72
      %p74 = scmp.eq.s32.totalorder %s15, 0
      %p75 = por %p73, %p74
      %s76 = ssub.s32 %s17, %s24
      %p77 = scmp.eq.s32.totalorder %s76, 0
      %s79 = sadd.s32 %s78, 1
      %s80 = scalar_select %p77, %s78, %s79
      %p83 = pneg %p77
      %p84 = scmp.eq.s32.totalorder %s9, 2
      %p85 = por %p83, %p84
      %p86 = scmp.ne.s32.totalorder %s78, %s81
      %p87 = scmp.eq.s32.totalorder %s9, 0
      %p88 = por %p86, %p87
      %p89 = scmp.ne.s32.totalorder %s78, %s81
      %p90 = scmp.eq.s32.totalorder %s14, 2
      %p91 = por %p89, %p90
      %p92 = scmp.ne.s32.totalorder %s81, %s82
      %p93 = scmp.eq.s32.totalorder %s14, 0
      %p94 = por %p92, %p93
      %p95 = scmp.ne.s32.totalorder %s81, %s82
      %p96 = scmp.eq.s32.totalorder %s15, 2
      %p97 = por %p95, %p96
      %p99 = scmp.ne.s32.totalorder %s82, %s98
      %p100 = scmp.eq.s32.totalorder %s15, 0
      %p101 = por %p99, %p100
      %s102 = ssub.s32 %s16, %s28
      %s103 = ssub.s32 %s17, %s24
      %s104 = sor.u32 %s102, %s103
      %p105 = scmp.eq.s32.totalorder %s104, 0
      %s107 = sadd.s32 %s106, 1
      %s108 = scalar_select %p105, %s106, %s107
      %p111 = pneg %p105
      %p112 = scmp.eq.s32.totalorder %s9, 2
      %p113 = por %p111, %p112
      %p114 = scmp.ne.s32.totalorder %s106, %s109
      %p115 = scmp.eq.s32.totalorder %s9, 0
      %p116 = por %p114, %p115
      %p117 = scmp.ne.s32.totalorder %s106, %s109
      %p118 = scmp.eq.s32.totalorder %s14, 2
      %p119 = por %p117, %p118
      %p120 = scmp.ne.s32.totalorder %s109, %s110
      %p121 = scmp.eq.s32.totalorder %s14, 0
      %p122 = por %p120, %p121
      %p123 = scmp.ne.s32.totalorder %s109, %s110
      %p124 = scmp.eq.s32.totalorder %s15, 2
      %p125 = por %p123, %p124
      %p127 = scmp.ne.s32.totalorder %s110, %s126
      %p128 = scmp.eq.s32.totalorder %s15, 0
      %p129 = por %p127, %p128
      %p130 = scmp.le.s32.totalorder 1, %s9
      %p131 = scmp.lt.s32.totalorder %s9, 4
      %p132 = pnand %p130, %p131
      %p133 = pneg %p132
      // Predicated region
      $region9: #{_lambda_.12} parent=5 // pred_check
        _
      $region10: #{_lambda_.12} parent=5 // pred_check_branch
        %135 = sbr.rel (%p132) target = $region12
      $region11: #{_lambda_.12} parent=5 // pred_region
        %s136 = ssub.s32 %s9, 1
        // Predicated region
        $region13: #{_lambda_.12} parent=11 // pred_check
          %p137 = pneg %p47
        $region14: #{_lambda_.12} parent=11 // pred_check_branch
          %139 = sbr.rel (%p137) target = $region16
        $region15: #{_lambda_.12} parent=11 // pred_region
          %s140 = smul.u32 6, %s18
          %p141 = scmp.lt.s32.totalorder %s140, 5
          %s142 = scalar_select %p141, %s140, 5
          %s143 = smul.addr %s142, 4
          %s144 = scalar_lea.vmem %s0, %s143
          %s145 = smul.u32 6, %s18
        $region16: #{_lambda_.12} parent=11 // pred_fallthru
          _
        // Predicated region
        $region17: #{_lambda_.12} parent=11 // pred_check
          %p146 = pneg %p68
        $region18: #{_lambda_.12} parent=11 // pred_check_branch
          %148 = sbr.rel (%p146) target = $region20
        $region19: #{_lambda_.12} parent=11 // pred_region
          _
        $region20: #{_lambda_.12} parent=11 // pred_fallthru
          _
      $region12: #{_lambda_.12} parent=5 // pred_fallthru
        _
      %p149 = scmp.lt.s32.totalorder %s9, 3
      // Predicated region
      $region21: #{_lambda_.12} parent=5 // pred_check
        %p150 = pneg %p149
      $region22: #{_lambda_.12} parent=5 // pred_check_branch
        %152 = sbr.rel (%p150) target = $region24
      $region23: #{_lambda_.12} parent=5 // pred_region
        // Predicated region
        $region25: #{_lambda_.12} parent=23 // pred_check
          %p153 = pneg %p88
        $region26: #{_lambda_.12} parent=23 // pred_check_branch
          %155 = sbr.rel (%p153) target = $region28
        $region27: #{_lambda_.12} parent=23 // pred_region
          %s156 = sand.u32 %s78, 1
          %s157 = sand.u32 %s78, 1
          %s158 = smul.addr %s157, 64
          %s159 = scalar_lea.vmem [#allocation2], %s158
          %s160 = smul.addr %s17, 4
          %s161 = scalar_lea.vmem %s2, %s160
          // Predicated region
          $region29: #{_lambda_.12} parent=27 // pred_check
            _
          $region30: #{_lambda_.12} parent=27 // pred_check_branch
            %163 = sbr.rel (0) target = $region32
          $region31: #{_lambda_.12} parent=27 // pred_region
            // Predicated region
            $region33: #{_lambda_.12} parent=31 // pred_check
              _
            $region34: #{_lambda_.12} parent=31 // pred_check_branch
              %165 = sbr.rel target = $region36
            $region35: #{_lambda_.12} parent=31 // pred_region
              // Predicated region
              $region48: #{_lambda_.12} parent=35 // pred_check
                _
              $region49: #{_lambda_.12} parent=35 // pred_check_branch
                %210 = sbr.rel (0) target = $region51
              $region50: #{_lambda_.12} parent=35 // pred_region
                loop: start=0, step=1, limit=1
                $region52: #{_lambda_.12} parent=50 // loop_pre_header
                  _
                $region53: #{_lambda_.12} parent=50 // loop_header
                  %s212 = sphi 0, %s216
                  %p213 = scmp.ge.s32.totalorder %s212, 1
                  %s217 = sphi %s161, %s161
                  %s218 = sphi %s159, %s159
                $region54: #{_lambda_.12} parent=50 // loop_header_branch
                  %215 = sbr.rel (%p213) target = $region58
                $region55: #{_lambda_.12} parent=50 // loop_body
                  _
                $region56: #{_lambda_.12} parent=50 // loop_footer
                  %s216 = sadd.s32 1, %s212
                $region57: #{_lambda_.12} parent=50 // loop_footer_branch
                  %211 = sbr.rel target = $region53
                $region58: #{_lambda_.12} parent=50 // loop_exit
                  _
                loop: start=0, step=1, limit=1
                $region59: #{_lambda_.12} parent=50 // loop_pre_header
                  _
                $region60: #{_lambda_.12} parent=50 // loop_header
                  %s221 = sphi 0, %s225
                  %p222 = scmp.ge.s32.totalorder %s221, 1
                  %s226 = sphi %s161, %s161
                  %s227 = sphi %s159, %s159
                $region61: #{_lambda_.12} parent=50 // loop_header_branch
                  %224 = sbr.rel (%p222) target = $region65
                $region62: #{_lambda_.12} parent=50 // loop_body
                  %v228 = vld [vmem:[%s226] sm:$0xf]
                  %229 = vst [vmem:[%s227] sm:$0xf] %v228
                  %v230 = vld [vmem:[%s226 + $0xc] sm:$0xf]
                  %231 = vst [vmem:[%s227 + $0x4] sm:$0xf] %v230
                  %v232 = vld [vmem:[%s226 + $0x18] sm:$0xf]
                  %233 = vst [vmem:[%s227 + $0x8] sm:$0xf] %v232
                  %v234 = vld [vmem:[%s226 + $0x24] sm:$0xf]
                  %235 = vst [vmem:[%s227 + $0xc] sm:$0xf] %v234
                  %v236 = vld [vmem:[%s226 + $0x30] sm:$0xf]
                  %237 = vst [vmem:[%s227 + $0x10] sm:$0xf] %v236
                  %v238 = vld [vmem:[%s226 + $0x3c] sm:$0xf]
                  %239 = vst [vmem:[%s227 + $0x14] sm:$0xf] %v238
                  %v240 = vld [vmem:[%s226 + $0x48] sm:$0xf]
                  %241 = vst [vmem:[%s227 + $0x18] sm:$0xf] %v240
                  %v242 = vld [vmem:[%s226 + $0x54] sm:$0xf]
                  %243 = vst [vmem:[%s227 + $0x1c] sm:$0xf] %v242
                  %v244 = vld [vmem:[%s226 + $0x60] sm:$0xf]
                  %245 = vst [vmem:[%s227 + $0x20] sm:$0xf] %v244
                  %v246 = vld [vmem:[%s226 + $0x6c] sm:$0xf]
                  %247 = vst [vmem:[%s227 + $0x24] sm:$0xf] %v246
                  %v248 = vld [vmem:[%s226 + $0x78] sm:$0xf]
                  %249 = vst [vmem:[%s227 + $0x28] sm:$0xf] %v248
                  %v250 = vld [vmem:[%s226 + $0x84] sm:$0xf]
                  %251 = vst [vmem:[%s227 + $0x2c] sm:$0xf] %v250
                  %v252 = vld [vmem:[%s226 + $0x90] sm:$0xf]
                  %253 = vst [vmem:[%s227 + $0x30] sm:$0xf] %v252
                  %v254 = vld [vmem:[%s226 + $0x9c] sm:$0xf]
                  %255 = vst [vmem:[%s227 + $0x34] sm:$0xf] %v254
                  %v256 = vld [vmem:[%s226 + $0xa8] sm:$0xf]
                  %257 = vst [vmem:[%s227 + $0x38] sm:$0xf] %v256
                  %v258 = vld [vmem:[%s226 + $0xb4] sm:$0xf]
                  %259 = vst [vmem:[%s227 + $0x3c] sm:$0xf] %v258
                $region63: #{_lambda_.12} parent=50 // loop_footer
                  %s225 = sadd.s32 1, %s221
                $region64: #{_lambda_.12} parent=50 // loop_footer_branch
                  %220 = sbr.rel target = $region60
                $region65: #{_lambda_.12} parent=50 // loop_exit
                  _
              $region51: #{_lambda_.12} parent=35 // pred_fallthru
                _
            $region36: #{_lambda_.12} parent=31 // pred_fallthru
              _
            // Predicated region
            $region37: #{_lambda_.12} parent=31 // pred_check
              _
            $region38: #{_lambda_.12} parent=31 // pred_check_branch
              %167 = sbr.rel (0) target = $region40
            $region39: #{_lambda_.12} parent=31 // pred_region
              loop: start=0, step=1, limit=1
              $region41: #{_lambda_.12} parent=39 // loop_pre_header
                _
              $region42: #{_lambda_.12} parent=39 // loop_header
                %s170 = sphi 0, %s174
                %p171 = scmp.ge.s32.totalorder %s170, 1
                %s175 = sphi %s161, %s161
                %s176 = sphi %s159, %s159
              $region43: #{_lambda_.12} parent=39 // loop_header_branch
                %173 = sbr.rel (%p171) target = $region47
              $region44: #{_lambda_.12} parent=39 // loop_body
                %v177 = vld [vmem:[%s175] sm:$0xf]
                %178 = vst [vmem:[%s176] sm:$0xf] %v177
                %v179 = vld [vmem:[%s175 + $0xc] sm:$0xf]
                %180 = vst [vmem:[%s176 + $0x4] sm:$0xf] %v179
                %v181 = vld [vmem:[%s175 + $0x18] sm:$0xf]
                %182 = vst [vmem:[%s176 + $0x8] sm:$0xf] %v181
                %v183 = vld [vmem:[%s175 + $0x24] sm:$0xf]
                %184 = vst [vmem:[%s176 + $0xc] sm:$0xf] %v183
                %v185 = vld [vmem:[%s175 + $0x30] sm:$0xf]
                %186 = vst [vmem:[%s176 + $0x10] sm:$0xf] %v185
                %v187 = vld [vmem:[%s175 + $0x3c] sm:$0xf]
                %188 = vst [vmem:[%s176 + $0x14] sm:$0xf] %v187
                %v189 = vld [vmem:[%s175 + $0x48] sm:$0xf]
                %190 = vst [vmem:[%s176 + $0x18] sm:$0xf] %v189
                %v191 = vld [vmem:[%s175 + $0x54] sm:$0xf]
                %192 = vst [vmem:[%s176 + $0x1c] sm:$0xf] %v191
                %v193 = vld [vmem:[%s175 + $0x60] sm:$0xf]
                %194 = vst [vmem:[%s176 + $0x20] sm:$0xf] %v193
                %v195 = vld [vmem:[%s175 + $0x6c] sm:$0xf]
                %196 = vst [vmem:[%s176 + $0x24] sm:$0xf] %v195
                %v197 = vld [vmem:[%s175 + $0x78] sm:$0xf]
                %198 = vst [vmem:[%s176 + $0x28] sm:$0xf] %v197
                %v199 = vld [vmem:[%s175 + $0x84] sm:$0xf]
                %200 = vst [vmem:[%s176 + $0x2c] sm:$0xf] %v199
                %v201 = vld [vmem:[%s175 + $0x90] sm:$0xf]
                %202 = vst [vmem:[%s176 + $0x30] sm:$0xf] %v201
                %v203 = vld [vmem:[%s175 + $0x9c] sm:$0xf]
                %204 = vst [vmem:[%s176 + $0x34] sm:$0xf] %v203
                %v205 = vld [vmem:[%s175 + $0xa8] sm:$0xf]
                %206 = vst [vmem:[%s176 + $0x38] sm:$0xf] %v205
                %v207 = vld [vmem:[%s175 + $0xb4] sm:$0xf]
                %208 = vst [vmem:[%s176 + $0x3c] sm:$0xf] %v207
              $region45: #{_lambda_.12} parent=39 // loop_footer
                %s174 = sadd.s32 1, %s170
              $region46: #{_lambda_.12} parent=39 // loop_footer_branch
                %169 = sbr.rel target = $region42
              $region47: #{_lambda_.12} parent=39 // loop_exit
                _
            $region40: #{_lambda_.12} parent=31 // pred_fallthru
              _
          $region32: #{_lambda_.12} parent=27 // pred_fallthru
            _
          %260 = vnop
        $region28: #{_lambda_.12} parent=23 // pred_fallthru
          _
      $region24: #{_lambda_.12} parent=5 // pred_fallthru
        _
      %p261 = scmp.le.s32.totalorder 1, %s9
      %p262 = scmp.lt.s32.totalorder %s9, 4
      %p263 = pnand %p261, %p262
      %p264 = pneg %p263
      // Predicated region
      $region66: #{_lambda_.12} parent=5 // pred_check
        _
      $region67: #{_lambda_.12} parent=5 // pred_check_branch
        %266 = sbr.rel (%p263) target = $region69
      $region68: #{_lambda_.12} parent=5 // pred_region
        %s267 = ssub.s32 %s9, 1
        %s268 = sand.u32 %s81, 1
        %s269 = sand.u32 %s81, 1
        %s270 = smul.addr %s269, 64
        %s271 = scalar_lea.vmem [#allocation2], %s270
        // Predicated region
        $region70: #{_lambda_.12} parent=68 // pred_check
          %p272 = pneg %p94
        $region71: #{_lambda_.12} parent=68 // pred_check_branch
          %274 = sbr.rel (%p272) target = $region73
        $region72: #{_lambda_.12} parent=68 // pred_region
          _
        $region73: #{_lambda_.12} parent=68 // pred_fallthru
          _
        %s275 = smul.u32 6, %s18
        %p276 = scmp.lt.s32.totalorder %s275, 5
        %s277 = scalar_select %p276, %s275, 5
        %s278 = smul.addr %s277, 4
        %s279 = scalar_lea.vmem %s0, %s278
        %p280 = pneg %p47
        %p281 = pneg %p44
        %p282 = pneg %p68
        %p283 = pneg %p65
        %s284 = sand.u32 %s81, 1
        %s285 = sand.u32 %s81, 1
        %s286 = smul.addr %s285, 64
        %s287 = scalar_lea.vmem [#allocation2], %s286
        %p288 = pneg %p94
        %p289 = pneg %p91
        %p290 = pneg %p122
        %p291 = pneg %p119
        %s292 = sand.u32 %s109, 1
        %s293 = sand.u32 %s109, 1
        %s294 = smul.addr %s293, 24
        %s295 = scalar_lea.vmem [#allocation3], %s294
        %s296 = smul.u32 6, %s18
        %p297 = scmp.lt.s32.totalorder %s296, 5
        %s298 = scalar_select %p297, %s296, 5
        %s299 = smul.addr %s298, 4
        %s300 = scalar_lea.vmem %s0, %s299
        %s301 = smul.u32 6, %s18
        %s302 = smul.u32 6, %s18
        %v304 = vld [vmem:[%s300] sm:$0xf]
        %v305 = vld [vmem:[%s300 + $0x4] sm:$0xf]
        %v306 = vld [vmem:[%s300 + $0x8] sm:$0xf]
        %v307 = vld [vmem:[%s300 + $0xc] sm:$0xf]
        %v308 = vld [vmem:[%s300 + $0x10] sm:$0xf]
        %v309 = vld [vmem:[%s300 + $0x14] sm:$0xf]
        %v310 = vunpack.c.l.bf16 %v304
        %v311 = vunpack.c.l.bf16 %v305
        %v312 = vunpack.c.l.bf16 %v306
        %v313 = vunpack.c.l.bf16 %v307
        %v314 = vunpack.c.l.bf16 %v308
        %v315 = vunpack.c.l.bf16 %v309
        %v316 = vmul.f32 %v310, %v310
        %v317 = vmul.f32 %v311, %v311
        %v318 = vmul.f32 %v312, %v312
        %v319 = vmul.f32 %v313, %v313
        %v320 = vmul.f32 %v314, %v314
        %v321 = vmul.f32 %v315, %v315
        %322 = vadd.xlane.f32.xlu0 %v316
        %v323 = vpop.xlane.xlu0 %322
        %324 = vadd.xlane.f32.xlu0 %v317
        %v325 = vpop.xlane.xlu0 %324
        %326 = vadd.xlane.f32.xlu0 %v318
        %v327 = vpop.xlane.xlu0 %326
        %328 = vadd.xlane.f32.xlu0 %v319
        %v329 = vpop.xlane.xlu0 %328
        %330 = vadd.xlane.f32.xlu0 %v320
        %v331 = vpop.xlane.xlu0 %330
        %332 = vadd.xlane.f32.xlu0 %v321
        %v333 = vpop.xlane.xlu0 %332
        %v334 = vrcp.pop 128.0
        %v335 = vmul.f32 %v323, %v334
        %v336 = vmul.f32 %v325, %v334
        %v337 = vmul.f32 %v327, %v334
        %v338 = vmul.f32 %v329, %v334
        %v339 = vmul.f32 %v331, %v334
        %v340 = vmul.f32 %v333, %v334
        %v341 = vadd.f32 %v335, 1e-05
        %v342 = vadd.f32 %v336, 1e-05
        %v343 = vadd.f32 %v337, 1e-05
        %v344 = vadd.f32 %v338, 1e-05
        %v345 = vadd.f32 %v339, 1e-05
        %v346 = vadd.f32 %v340, 1e-05
        %v347 = vrsqrt.pop %v341
        %v348 = vrsqrt.pop %v342
        %v349 = vrsqrt.pop %v343
        %v350 = vrsqrt.pop %v344
        %v351 = vrsqrt.pop %v345
        %v352 = vrsqrt.pop %v346
        %v353 = vmul.f32 %v310, %v347
        %v354 = vmul.f32 %v311, %v348
        %v355 = vmul.f32 %v312, %v349
        %v356 = vmul.f32 %v313, %v350
        %v357 = vmul.f32 %v314, %v351
        %v358 = vmul.f32 %v315, %v352
        %v359 = vld [vmem:[%s1] sm:$0x1]
        %v361 = vlaneseq
        %v362 = vshrl.u32 %v361, 7
        %v363 = vsub.s32 0, %v362
        %v364 = vrot.slane %v359, %v363
        %v366 = vmul.f32 %v353, %v364
        %v367 = vmul.f32 %v354, %v364
        %v368 = vmul.f32 %v355, %v364
        %v369 = vmul.f32 %v356, %v364
        %v370 = vmul.f32 %v357, %v364
        %v371 = vmul.f32 %v358, %v364
        %v372 = vpack.c.bf16 %v367, %v366
        %v373 = vpack.c.bf16 %v369, %v368
        %v374 = vpack.c.bf16 %v371, %v370
        %v375 = vld [vmem:[%s271] sm:$0xf]
        %v376 = vld [vmem:[%s271 + $0x4] sm:$0xf]
        %v377 = vld [vmem:[%s271 + $0x8] sm:$0xf]
        %v378 = vld [vmem:[%s271 + $0xc] sm:$0xf]
        %v379 = vld [vmem:[%s271 + $0x10] sm:$0xf]
        %v380 = vld [vmem:[%s271 + $0x14] sm:$0xf]
        %v381 = vld [vmem:[%s271 + $0x18] sm:$0xf]
        %v382 = vld [vmem:[%s271 + $0x1c] sm:$0xf]
        %v383 = vld [vmem:[%s271 + $0x20] sm:$0xf]
        %v384 = vld [vmem:[%s271 + $0x24] sm:$0xf]
        %v385 = vld [vmem:[%s271 + $0x28] sm:$0xf]
        %v386 = vld [vmem:[%s271 + $0x2c] sm:$0xf]
        %v387 = vld [vmem:[%s271 + $0x30] sm:$0xf]
        %v388 = vld [vmem:[%s271 + $0x34] sm:$0xf]
        %v389 = vld [vmem:[%s271 + $0x38] sm:$0xf]
        %v390 = vld [vmem:[%s271 + $0x3c] sm:$0xf]
        %v407 = vunpack.c.l.b16 %v375
        %v408 = vunpack.c.l.b16 %v376
        %v409 = vunpack.c.l.b16 %v377
        %v410 = vunpack.c.l.b16 %v378
        %v411 = vunpack.c.l.b16 %v379
        %v412 = vunpack.c.l.b16 %v380
        %v413 = vunpack.c.l.b16 %v381
        %v414 = vunpack.c.l.b16 %v382
        %v415 = vunpack.c.l.b16 %v383
        %v416 = vunpack.c.l.b16 %v384
        %v417 = vunpack.c.l.b16 %v385
        %v418 = vunpack.c.l.b16 %v386
        %v419 = vunpack.c.l.b16 %v387
        %v420 = vunpack.c.l.b16 %v388
        %v421 = vunpack.c.l.b16 %v389
        %v422 = vunpack.c.l.b16 %v390
        %v423 = vpack.c.b16 %v408, %v407
        %v424 = vpack.c.b16 %v410, %v409
        %v425 = vpack.c.b16 %v412, %v411
        %v426 = vpack.c.b16 %v414, %v413
        %v427 = vpack.c.b16 %v416, %v415
        %v428 = vpack.c.b16 %v418, %v417
        %v429 = vpack.c.b16 %v420, %v419
        %v430 = vpack.c.b16 %v422, %v421
        %439 = vmatprep.subr.bf16.mxu0 0
        %440 = vmatpush1.bf16.msra.mxu0 %v423
        %441 = vmatprep.subr.bf16.mxu0 0
        %442 = vmatpush1.bf16.msra.mxu0 %v424
        %443 = vmatprep.subr.bf16.mxu0 0
        %444 = vmatpush1.bf16.msra.mxu0 %v425
        %445 = vmatprep.subr.bf16.mxu0 0
        %446 = vmatpush1.bf16.msra.mxu0 %v426
        %447 = vmatprep.subr.bf16.mxu0 0
        %448 = vmatpush1.bf16.msra.mxu0 %v427
        %449 = vmatprep.subr.bf16.mxu0 0
        %450 = vmatpush1.bf16.msra.mxu0 %v428
        %451 = vmatprep.subr.bf16.mxu0 0
        %452 = vmatpush1.bf16.msra.mxu0 %v429
        %453 = vmatprep.subr.bf16.mxu0 0
        %454 = vmatpush1.bf16.msra.mxu0 %v430
        %455 = vmatprep.subr.bf16.mxu0 0
        %456 = vmatpush1.bf16.msra.mxu0 0
        %457 = vmatprep.subr.bf16.mxu0 0
        %458 = vmatpush1.bf16.msra.mxu0 0
        %459 = vmatprep.subr.bf16.mxu0 0
        %460 = vmatpush1.bf16.msra.mxu0 0
        %461 = vmatprep.subr.bf16.mxu0 0
        %462 = vmatpush1.bf16.msra.mxu0 0
        %463 = vmatprep.subr.bf16.mxu0 0
        %464 = vmatpush1.bf16.msra.mxu0 0
        %465 = vmatprep.subr.bf16.mxu0 0
        %466 = vmatpush1.bf16.msra.mxu0 0
        %467 = vmatprep.subr.bf16.mxu0 0
        %468 = vmatpush1.bf16.msra.mxu0 0
        %469 = vmatprep.subr.bf16.mxu0 0
        %470 = vmatpush1.bf16.msra.mxu0 0
        %471 = vmatprep.mubr.bf16.mxu0 0
        %472 = vmatmul.mubr.bf16.gmra.mrb[0].mxu0 %v372
        %v473 = vpop.f32.mrb[0].mxu0
        %v474 = vadd.f32 0.0, %v473
        %v475 = vpop.f32.mrb[0].mxu0
        %v476 = vpop.f32.mrb[0].mxu0
        %v477 = vadd.f32 0.0, %v476
        %v478 = vpop.f32.mrb[0].mxu0
        %479 = vmatprep.mubr.bf16.mxu0 0
        %480 = vmatmul.mubr.bf16.gmra.mrb[0].mxu0 %v373
        %v481 = vpop.f32.mrb[0].mxu0
        %v482 = vadd.f32 0.0, %v481
        %v483 = vpop.f32.mrb[0].mxu0
        %v484 = vpop.f32.mrb[0].mxu0
        %v485 = vadd.f32 0.0, %v484
        %v486 = vpop.f32.mrb[0].mxu0
        %487 = vmatprep.mubr.bf16.mxu0 0
        %488 = vmatmul.mubr.bf16.gmra.mrb[0].mxu0 %v374
        %v489 = vpop.f32.mrb[0].mxu0
        %v490 = vadd.f32 0.0, %v489
        %v491 = vpop.f32.mrb[0].mxu0
        %v492 = vpop.f32.mrb[0].mxu0
        %v493 = vadd.f32 0.0, %v492
        %v494 = vpop.f32.mrb[0].mxu0
        %495 = vdwg.mxu0
        %v496 = vpack.c.bf16 %v477, %v474
        %v497 = vpack.c.bf16 %v485, %v482
        %v498 = vpack.c.bf16 %v493, %v490
        %v502 = vunpack.c.l.b16 %v496
        %v503 = vunpack.c.h.b16 %v496
        %v504 = vunpack.c.l.b16 %v497
        %v505 = vunpack.c.h.b16 %v497
        %v506 = vunpack.c.l.b16 %v498
        %v507 = vunpack.c.h.b16 %v498
        %v508 = vpack.c.b16 %v502, %v502
        %v509 = vpack.c.b16 %v503, %v503
        %v510 = vpack.c.b16 %v504, %v504
        %v511 = vpack.c.b16 %v505, %v505
        %v512 = vpack.c.b16 %v506, %v506
        %v513 = vpack.c.b16 %v507, %v507
        %520 = vst [vmem:[%s295] sm:$0xf] %v508
        %521 = vst [vmem:[%s295 + $0x4] sm:$0xf] %v509
        %522 = vst [vmem:[%s295 + $0x8] sm:$0xf] %v510
        %523 = vst [vmem:[%s295 + $0xc] sm:$0xf] %v511
        %524 = vst [vmem:[%s295 + $0x10] sm:$0xf] %v512
        %525 = vst [vmem:[%s295 + $0x14] sm:$0xf] %v513
        %s526 = sand.u32 %s109, 1
        %s527 = sand.u32 %s109, 1
        %s528 = smul.addr %s527, 24
        %s529 = scalar_lea.vmem [#allocation3], %s528
        // Predicated region
        $region74: #{_lambda_.12} parent=68 // pred_check
          %p530 = pneg %p119
        $region75: #{_lambda_.12} parent=68 // pred_check_branch
          %532 = sbr.rel (%p530) target = $region77
        $region76: #{_lambda_.12} parent=68 // pred_region
          %s533 = smul.u32 6, %s18
          %s534 = smul.addr %s533, 3
          %s535 = sadd.s32 %s19, %s534
          %s536 = smul.addr %s535, 4
          %s537 = scalar_lea.vmem %s3, %s536
          // Predicated region
          $region78: #{_lambda_.12} parent=76 // pred_check
            _
          $region79: #{_lambda_.12} parent=76 // pred_check_branch
            %539 = sbr.rel (0) target = $region81
          $region80: #{_lambda_.12} parent=76 // pred_region
            // Predicated region
            $region82: #{_lambda_.12} parent=80 // pred_check
              _
            $region83: #{_lambda_.12} parent=80 // pred_check_branch
              %541 = sbr.rel target = $region85
            $region84: #{_lambda_.12} parent=80 // pred_region
              // Predicated region
              $region97: #{_lambda_.12} parent=84 // pred_check
                _
              $region98: #{_lambda_.12} parent=84 // pred_check_branch
                %566 = sbr.rel (0) target = $region100
              $region99: #{_lambda_.12} parent=84 // pred_region
                loop: start=0, step=1, limit=1
                $region101: #{_lambda_.12} parent=99 // loop_pre_header
                  _
                $region102: #{_lambda_.12} parent=99 // loop_header
                  %s568 = sphi 0, %s572
                  %p569 = scmp.ge.s32.totalorder %s568, 1
                  %s573 = sphi %s529, %s529
                  %s574 = sphi %s537, %s537
                $region103: #{_lambda_.12} parent=99 // loop_header_branch
                  %571 = sbr.rel (%p569) target = $region107
                $region104: #{_lambda_.12} parent=99 // loop_body
                  _
                $region105: #{_lambda_.12} parent=99 // loop_footer
                  %s572 = sadd.s32 1, %s568
                $region106: #{_lambda_.12} parent=99 // loop_footer_branch
                  %567 = sbr.rel target = $region102
                $region107: #{_lambda_.12} parent=99 // loop_exit
                  _
                loop: start=0, step=1, limit=1
                $region108: #{_lambda_.12} parent=99 // loop_pre_header
                  _
                $region109: #{_lambda_.12} parent=99 // loop_header
                  %s577 = sphi 0, %s581
                  %p578 = scmp.ge.s32.totalorder %s577, 1
                  %s582 = sphi %s529, %s529
                  %s583 = sphi %s537, %s537
                $region110: #{_lambda_.12} parent=99 // loop_header_branch
                  %580 = sbr.rel (%p578) target = $region114
                $region111: #{_lambda_.12} parent=99 // loop_body
                  %v584 = vld [vmem:[%s582] sm:$0xf]
                  %585 = vst [vmem:[%s583] sm:$0xf] %v584
                  %v586 = vld [vmem:[%s582 + $0x4] sm:$0xf]
                  %587 = vst [vmem:[%s583 + $0xc] sm:$0xf] %v586
                  %v588 = vld [vmem:[%s582 + $0x8] sm:$0xf]
                  %589 = vst [vmem:[%s583 + $0x18] sm:$0xf] %v588
                  %v590 = vld [vmem:[%s582 + $0xc] sm:$0xf]
                  %591 = vst [vmem:[%s583 + $0x24] sm:$0xf] %v590
                  %v592 = vld [vmem:[%s582 + $0x10] sm:$0xf]
                  %593 = vst [vmem:[%s583 + $0x30] sm:$0xf] %v592
                  %v594 = vld [vmem:[%s582 + $0x14] sm:$0xf]
                  %595 = vst [vmem:[%s583 + $0x3c] sm:$0xf] %v594
                $region112: #{_lambda_.12} parent=99 // loop_footer
                  %s581 = sadd.s32 1, %s577
                $region113: #{_lambda_.12} parent=99 // loop_footer_branch
                  %576 = sbr.rel target = $region109
                $region114: #{_lambda_.12} parent=99 // loop_exit
                  _
              $region100: #{_lambda_.12} parent=84 // pred_fallthru
                _
            $region85: #{_lambda_.12} parent=80 // pred_fallthru
              _
            // Predicated region
            $region86: #{_lambda_.12} parent=80 // pred_check
              _
            $region87: #{_lambda_.12} parent=80 // pred_check_branch
              %543 = sbr.rel (0) target = $region89
            $region88: #{_lambda_.12} parent=80 // pred_region
              loop: start=0, step=1, limit=1
              $region90: #{_lambda_.12} parent=88 // loop_pre_header
                _
              $region91: #{_lambda_.12} parent=88 // loop_header
                %s546 = sphi 0, %s550
                %p547 = scmp.ge.s32.totalorder %s546, 1
                %s551 = sphi %s529, %s529
                %s552 = sphi %s537, %s537
              $region92: #{_lambda_.12} parent=88 // loop_header_branch
                %549 = sbr.rel (%p547) target = $region96
              $region93: #{_lambda_.12} parent=88 // loop_body
                %v553 = vld [vmem:[%s551] sm:$0xf]
                %554 = vst [vmem:[%s552] sm:$0xf] %v553
                %v555 = vld [vmem:[%s551 + $0x4] sm:$0xf]
                %556 = vst [vmem:[%s552 + $0xc] sm:$0xf] %v555
                %v557 = vld [vmem:[%s551 + $0x8] sm:$0xf]
                %558 = vst [vmem:[%s552 + $0x18] sm:$0xf] %v557
                %v559 = vld [vmem:[%s551 + $0xc] sm:$0xf]
                %560 = vst [vmem:[%s552 + $0x24] sm:$0xf] %v559
                %v561 = vld [vmem:[%s551 + $0x10] sm:$0xf]
                %562 = vst [vmem:[%s552 + $0x30] sm:$0xf] %v561
                %v563 = vld [vmem:[%s551 + $0x14] sm:$0xf]
                %564 = vst [vmem:[%s552 + $0x3c] sm:$0xf] %v563
              $region94: #{_lambda_.12} parent=88 // loop_footer
                %s550 = sadd.s32 1, %s546
              $region95: #{_lambda_.12} parent=88 // loop_footer_branch
                %545 = sbr.rel target = $region91
              $region96: #{_lambda_.12} parent=88 // loop_exit
                _
            $region89: #{_lambda_.12} parent=80 // pred_fallthru
              _
          $region81: #{_lambda_.12} parent=76 // pred_fallthru
            _
          %596 = vnop
        $region77: #{_lambda_.12} parent=68 // pred_fallthru
          _
      $region69: #{_lambda_.12} parent=5 // pred_fallthru
        _
      %p597 = scmp.le.s32.totalorder 2, %s9
      // Predicated region
      $region115: #{_lambda_.12} parent=5 // pred_check
        %p598 = pneg %p597
      $region116: #{_lambda_.12} parent=5 // pred_check_branch
        %600 = sbr.rel (%p598) target = $region118
      $region117: #{_lambda_.12} parent=5 // pred_region
        %s601 = ssub.s32 %s9, 2
        // Predicated region
        $region119: #{_lambda_.12} parent=117 // pred_check
          %p602 = pneg %p125
        $region120: #{_lambda_.12} parent=117 // pred_check_branch
          %604 = sbr.rel (%p602) target = $region122
        $region121: #{_lambda_.12} parent=117 // pred_region
          %s605 = sand.u32 %s110, 1
          %s606 = sand.u32 %s110, 1
          %s607 = smul.addr %s606, 24
          %s608 = scalar_lea.vmem [#allocation3], %s607
        $region122: #{_lambda_.12} parent=117 // pred_fallthru
          _
      $region118: #{_lambda_.12} parent=5 // pred_fallthru
        _
    $region6: #{_lambda_.12} parent=1 // loop_footer
      %s13 = sadd.s32 1, %s9
    $region7: #{_lambda_.12} parent=1 // loop_footer_branch
      %8 = sbr.rel target = $region3
    $region8: #{_lambda_.12} parent=1 // loop_exit
      _

// kernel: _lambda_.14
$region0: #{_lambda_.14}
  #allocation0 [shape = 'u32[]', space=smem, size = 0x4, offset = 0x4, fixed_abs, tag = 'smem constant byte address 0x4 - core index']
  #allocation1 [shape = 'u32[144,128]{1,0:T(1,128)}', space=vmem, size = 0x12000, scoped, tag = 'internal scratch']
  #allocation2 [shape = 'f32[48,128]{1,0:T(8,128)}', space=vmem, size = 0x6000, scoped, tag = 'scratch operand']
  %s0 = inlined_call_operand.vmem [shape: bf16[48,128], index: 0, kind: input, shape index: {}]
  %s1 = inlined_call_operand.vmem [shape: bf16[128,128], index: 1, kind: input, shape index: {}]
  %s2 = inlined_call_operand.vmem [shape: bf16[48,128], index: 2, kind: input, shape index: {}]
  %s3 = inlined_call_operand.vmem [shape: bf16[48,128], index: 3, kind: output, shape index: {}]
  %s4 = sld [smem:[#allocation0]]
  $region30: #{_lambda_.14} parent=0
    _
  %s6 = ssub.s32 1, %s4
  %s7 = scalar_select 0, %s6, %s4
  // Predicated region
  $region2: #{_lambda_.14} parent=0 // pred_check
    _
  $region3: #{_lambda_.14} parent=0 // pred_check_branch
    %9 = sbr.rel (0) target = $region5
  $region4: #{_lambda_.14} parent=0 // pred_region
    _
  $region5: #{_lambda_.14} parent=0 // pred_fallthru
    _
  // Predicated region
  $region6: #{_lambda_.14} parent=0 // pred_check
    _
  $region7: #{_lambda_.14} parent=0 // pred_check_branch
    %11 = sbr.rel (0) target = $region9
  $region8: #{_lambda_.14} parent=0 // pred_region
    _
  $region9: #{_lambda_.14} parent=0 // pred_fallthru
    _
  // Predicated region
  $region10: #{_lambda_.14} parent=0 // pred_check
    _
  $region11: #{_lambda_.14} parent=0 // pred_check_branch
    %13 = sbr.rel (0) target = $region13
  $region12: #{_lambda_.14} parent=0 // pred_region
    _
  $region13: #{_lambda_.14} parent=0 // pred_fallthru
    _
  %p15 = scmp.eq.s32.totalorder 0, 0
  // Predicated region
  $region14: #{_lambda_.14} parent=0 // pred_check
    %p16 = pneg %p15
  $region15: #{_lambda_.14} parent=0 // pred_check_branch
    %18 = sbr.rel (%p16) target = $region17
  $region16: #{_lambda_.14} parent=0 // pred_region
    %19 = vst [vmem:[#allocation2] sm:$0xff] 0.0
    %20 = vst [vmem:[#allocation2 + $0x8] sm:$0xff] 0.0
    %21 = vst [vmem:[#allocation2 + $0x10] sm:$0xff] 0.0
    %22 = vst [vmem:[#allocation2 + $0x18] sm:$0xff] 0.0
    %23 = vst [vmem:[#allocation2 + $0x20] sm:$0xff] 0.0
    %24 = vst [vmem:[#allocation2 + $0x28] sm:$0xff] 0.0
  $region17: #{_lambda_.14} parent=0 // pred_fallthru
    _
  %v25 = vld [vmem:[#allocation2] sm:$0xff]
  %v26 = vld [vmem:[#allocation2 + $0x8] sm:$0xff]
  %v27 = vld [vmem:[#allocation2 + $0x10] sm:$0xff]
  %v28 = vld [vmem:[#allocation2 + $0x18] sm:$0xff]
  %v29 = vld [vmem:[#allocation2 + $0x20] sm:$0xff]
  %v30 = vld [vmem:[#allocation2 + $0x28] sm:$0xff]
  %v31 = vld [vmem:[%s0] sm:$0xf]
  %v32 = vld [vmem:[%s0 + $0x4] sm:$0xf]
  %v33 = vld [vmem:[%s0 + $0x8] sm:$0xf]
  %v34 = vld [vmem:[%s0 + $0xc] sm:$0xf]
  %v35 = vld [vmem:[%s0 + $0x10] sm:$0xf]
  %v36 = vld [vmem:[%s0 + $0x14] sm:$0xf]
  %v37 = vld [vmem:[%s1] sm:$0xf]
  %v38 = vld [vmem:[%s1 + $0x4] sm:$0xf]
  %v39 = vld [vmem:[%s1 + $0x8] sm:$0xf]
  %v40 = vld [vmem:[%s1 + $0xc] sm:$0xf]
  %v41 = vld [vmem:[%s1 + $0x10] sm:$0xf]
  %v42 = vld [vmem:[%s1 + $0x14] sm:$0xf]
  %v43 = vld [vmem:[%s1 + $0x18] sm:$0xf]
  %v44 = vld [vmem:[%s1 + $0x1c] sm:$0xf]
  %v45 = vld [vmem:[%s1 + $0x20] sm:$0xf]
  %v46 = vld [vmem:[%s1 + $0x24] sm:$0xf]
  %v47 = vld [vmem:[%s1 + $0x28] sm:$0xf]
  %v48 = vld [vmem:[%s1 + $0x2c] sm:$0xf]
  %v49 = vld [vmem:[%s1 + $0x30] sm:$0xf]
  %v50 = vld [vmem:[%s1 + $0x34] sm:$0xf]
  %v51 = vld [vmem:[%s1 + $0x38] sm:$0xf]
  %v52 = vld [vmem:[%s1 + $0x3c] sm:$0xf]
  %v59 = vunpack.c.l.b16 %v31
  %v60 = vunpack.c.l.b16 %v32
  %v61 = vunpack.c.l.b16 %v33
  %v62 = vunpack.c.l.b16 %v34
  %v63 = vunpack.c.l.b16 %v35
  %v64 = vunpack.c.l.b16 %v36
  %v65 = vpack.c.b16 %v60, %v59
  %v66 = vpack.c.b16 %v62, %v61
  %v67 = vpack.c.b16 %v64, %v63
  %v87 = vunpack.c.l.b16 %v37
  %v88 = vunpack.c.l.b16 %v38
  %v89 = vunpack.c.l.b16 %v39
  %v90 = vunpack.c.l.b16 %v40
  %v91 = vunpack.c.l.b16 %v41
  %v92 = vunpack.c.l.b16 %v42
  %v93 = vunpack.c.l.b16 %v43
  %v94 = vunpack.c.l.b16 %v44
  %v95 = vunpack.c.l.b16 %v45
  %v96 = vunpack.c.l.b16 %v46
  %v97 = vunpack.c.l.b16 %v47
  %v98 = vunpack.c.l.b16 %v48
  %v99 = vunpack.c.l.b16 %v49
  %v100 = vunpack.c.l.b16 %v50
  %v101 = vunpack.c.l.b16 %v51
  %v102 = vunpack.c.l.b16 %v52
  %v103 = vpack.c.b16 %v88, %v87
  %v104 = vpack.c.b16 %v90, %v89
  %v105 = vpack.c.b16 %v92, %v91
  %v106 = vpack.c.b16 %v94, %v93
  %v107 = vpack.c.b16 %v96, %v95
  %v108 = vpack.c.b16 %v98, %v97
  %v109 = vpack.c.b16 %v100, %v99
  %v110 = vpack.c.b16 %v102, %v101
  %119 = vmatprep.subr.bf16.mxu0 0
  %120 = vmatpush1.bf16.msra.mxu0 %v103
  %121 = vmatprep.subr.bf16.mxu0 0
  %122 = vmatpush1.bf16.msra.mxu0 %v104
  %123 = vmatprep.subr.bf16.mxu0 0
  %124 = vmatpush1.bf16.msra.mxu0 %v105
  %125 = vmatprep.subr.bf16.mxu0 0
  %126 = vmatpush1.bf16.msra.mxu0 %v106
  %127 = vmatprep.subr.bf16.mxu0 0
  %128 = vmatpush1.bf16.msra.mxu0 %v107
  %129 = vmatprep.subr.bf16.mxu0 0
  %130 = vmatpush1.bf16.msra.mxu0 %v108
  %131 = vmatprep.subr.bf16.mxu0 0
  %132 = vmatpush1.bf16.msra.mxu0 %v109
  %133 = vmatprep.subr.bf16.mxu0 0
  %134 = vmatpush1.bf16.msra.mxu0 %v110
  %135 = vmatprep.subr.bf16.mxu0 0
  %136 = vmatpush1.bf16.msra.mxu0 0
  %137 = vmatprep.subr.bf16.mxu0 0
  %138 = vmatpush1.bf16.msra.mxu0 0
  %139 = vmatprep.subr.bf16.mxu0 0
  %140 = vmatpush1.bf16.msra.mxu0 0
  %141 = vmatprep.subr.bf16.mxu0 0
  %142 = vmatpush1.bf16.msra.mxu0 0
  %143 = vmatprep.subr.bf16.mxu0 0
  %144 = vmatpush1.bf16.msra.mxu0 0
  %145 = vmatprep.subr.bf16.mxu0 0
  %146 = vmatpush1.bf16.msra.mxu0 0
  %147 = vmatprep.subr.bf16.mxu0 0
  %148 = vmatpush1.bf16.msra.mxu0 0
  %149 = vmatprep.subr.bf16.mxu0 0
  %150 = vmatpush1.bf16.msra.mxu0 0
  %151 = vmatprep.mubr.bf16.mxu0 0
  %152 = vmatmul.mubr.bf16.gmra.mrb[0].mxu0 %v65
  %v153 = vpop.f32.mrb[0].mxu0
  %v154 = vadd.f32 0.0, %v153
  %v155 = vpop.f32.mrb[0].mxu0
  %v156 = vpop.f32.mrb[0].mxu0
  %v157 = vadd.f32 0.0, %v156
  %v158 = vpop.f32.mrb[0].mxu0
  %159 = vmatprep.mubr.bf16.mxu0 0
  %160 = vmatmul.mubr.bf16.gmra.mrb[0].mxu0 %v66
  %v161 = vpop.f32.mrb[0].mxu0
  %v162 = vadd.f32 0.0, %v161
  %v163 = vpop.f32.mrb[0].mxu0
  %v164 = vpop.f32.mrb[0].mxu0
  %v165 = vadd.f32 0.0, %v164
  %v166 = vpop.f32.mrb[0].mxu0
  %167 = vmatprep.mubr.bf16.mxu0 0
  %168 = vmatmul.mubr.bf16.gmra.mrb[0].mxu0 %v67
  %v169 = vpop.f32.mrb[0].mxu0
  %v170 = vadd.f32 0.0, %v169
  %v171 = vpop.f32.mrb[0].mxu0
  %v172 = vpop.f32.mrb[0].mxu0
  %v173 = vadd.f32 0.0, %v172
  %v174 = vpop.f32.mrb[0].mxu0
  %175 = vdwg.mxu0
  %v176 = vadd.f32 %v25, %v154
  %v177 = vadd.f32 %v26, %v157
  %v178 = vadd.f32 %v27, %v162
  %v179 = vadd.f32 %v28, %v165
  %v180 = vadd.f32 %v29, %v170
  %v181 = vadd.f32 %v30, %v173
  %182 = vst [vmem:[#allocation2] sm:$0xff] %v176
  %183 = vst [vmem:[#allocation2 + $0x8] sm:$0xff] %v177
  %184 = vst [vmem:[#allocation2 + $0x10] sm:$0xff] %v178
  %185 = vst [vmem:[#allocation2 + $0x18] sm:$0xff] %v179
  %186 = vst [vmem:[#allocation2 + $0x20] sm:$0xff] %v180
  %187 = vst [vmem:[#allocation2 + $0x28] sm:$0xff] %v181
  // Predicated region
  $region18: #{_lambda_.14} parent=0 // pred_check
    %p188 = pneg %p15
  $region19: #{_lambda_.14} parent=0 // pred_check_branch
    %190 = sbr.rel (%p188) target = $region21
  $region20: #{_lambda_.14} parent=0 // pred_region
    %v191 = vld [vmem:[#allocation2] sm:$0xff]
    %v192 = vld [vmem:[#allocation2 + $0x8] sm:$0xff]
    %v193 = vld [vmem:[#allocation2 + $0x10] sm:$0xff]
    %v194 = vld [vmem:[#allocation2 + $0x18] sm:$0xff]
    %v195 = vld [vmem:[#allocation2 + $0x20] sm:$0xff]
    %v196 = vld [vmem:[#allocation2 + $0x28] sm:$0xff]
    %v197 = vld [vmem:[%s2] sm:$0xf]
    %v198 = vld [vmem:[%s2 + $0x4] sm:$0xf]
    %v199 = vld [vmem:[%s2 + $0x8] sm:$0xf]
    %v200 = vld [vmem:[%s2 + $0xc] sm:$0xf]
    %v201 = vld [vmem:[%s2 + $0x10] sm:$0xf]
    %v202 = vld [vmem:[%s2 + $0x14] sm:$0xf]
    %v203 = vunpack.c.l.bf16 %v197
    %v204 = vunpack.c.l.bf16 %v198
    %v205 = vunpack.c.l.bf16 %v199
    %v206 = vunpack.c.l.bf16 %v200
    %v207 = vunpack.c.l.bf16 %v201
    %v208 = vunpack.c.l.bf16 %v202
    %v209 = vadd.f32 %v191, %v203
    %v210 = vadd.f32 %v192, %v204
    %v211 = vadd.f32 %v193, %v205
    %v212 = vadd.f32 %v194, %v206
    %v213 = vadd.f32 %v195, %v207
    %v214 = vadd.f32 %v196, %v208
    %v215 = vpack.c.bf16 %v210, %v209
    %v216 = vpack.c.bf16 %v212, %v211
    %v217 = vpack.c.bf16 %v214, %v213
    %v221 = vunpack.c.l.b16 %v215
    %v222 = vunpack.c.h.b16 %v215
    %v223 = vunpack.c.l.b16 %v216
    %v224 = vunpack.c.h.b16 %v216
    %v225 = vunpack.c.l.b16 %v217
    %v226 = vunpack.c.h.b16 %v217
    %v227 = vpack.c.b16 %v221, %v221
    %v228 = vpack.c.b16 %v222, %v222
    %v229 = vpack.c.b16 %v223, %v223
    %v230 = vpack.c.b16 %v224, %v224
    %v231 = vpack.c.b16 %v225, %v225
    %v232 = vpack.c.b16 %v226, %v226
    %239 = vst [vmem:[%s3] sm:$0xf] %v227
    %240 = vst [vmem:[%s3 + $0x4] sm:$0xf] %v228
    %241 = vst [vmem:[%s3 + $0x8] sm:$0xf] %v229
    %242 = vst [vmem:[%s3 + $0xc] sm:$0xf] %v230
    %243 = vst [vmem:[%s3 + $0x10] sm:$0xf] %v231
    %244 = vst [vmem:[%s3 + $0x14] sm:$0xf] %v232
  $region21: #{_lambda_.14} parent=0 // pred_fallthru
    _
  // Predicated region
  $region22: #{_lambda_.14} parent=0 // pred_check
    _
  $region23: #{_lambda_.14} parent=0 // pred_check_branch
    %246 = sbr.rel (0) target = $region25
  $region24: #{_lambda_.14} parent=0 // pred_region
    _
  $region25: #{_lambda_.14} parent=0 // pred_fallthru
    _
  // Predicated region
  $region26: #{_lambda_.14} parent=0 // pred_check
    _
  $region27: #{_lambda_.14} parent=0 // pred_check_branch
    %248 = sbr.rel (0) target = $region29
  $region28: #{_lambda_.14} parent=0 // pred_region
    _
  $region29: #{_lambda_.14} parent=0 // pred_fallthru
    _

// kernel: _lambda_.13
$region0: #{_lambda_.13}
  #allocation0 [shape = 'u32[]', space=smem, size = 0x4, offset = 0x4, fixed_abs, tag = 'smem constant byte address 0x4 - core index']
  #allocation1 [shape = 'u32[144,128]{1,0:T(1,128)}', space=vmem, size = 0x12000, scoped, tag = 'internal scratch']
  #allocation2 [shape = 'f32[24,1]{1,0:T(8,128)}', space=vmem, size = 0x3000, scoped, tag = 'scratch operand']
  #allocation3 [shape = 'f32[24,1]{1,0:T(8,128)}', space=vmem, size = 0x3000, scoped, tag = 'scratch operand']
  #allocation4 [shape = 'f32[24,32]{1,0:T(8,128)}', space=vmem, size = 0x3000, scoped, tag = 'scratch operand']
  %s0 = inlined_call_operand.vmem [shape: bf16[2,4,24,32], index: 0, kind: input, shape index: {}]
  %s1 = inlined_call_operand.vmem [shape: bf16[2,4,24,32], index: 1, kind: input, shape index: {}]
  %s2 = inlined_call_operand.vmem [shape: bf16[2,4,24,32], index: 2, kind: input, shape index: {}]
  %s3 = inlined_call_operand.vmem [shape: bf16[2,4,24,32], index: 3, kind: output, shape index: {}]
  %s4 = sld [smem:[#allocation0]]
  $region57: #{_lambda_.13} parent=0
    _
  %s6 = ssub.s32 1, %s4
  %s7 = scalar_select 0, %s6, %s4
  loop: start=0, step=1, limit=10
  $region2: #{_lambda_.13} parent=0 // loop_pre_header
    _
  $region3: #{_lambda_.13} parent=0 // loop_header
    %s9 = sphi 0, %s13
    %p10 = scmp.ge.s32.totalorder %s9, 10
    %s16 = sphi 0, %s42
    %s17 = sphi 0, %s38
    %s18 = sphi 0, %s34
    %s19 = sphi 0, %s30
    %s20 = sphi 0, %s16
    %s21 = sphi 0, %s17
    %s22 = sphi 0, %s18
    %s23 = sphi 0, %s19
    %s24 = sphi 0, %s20
    %s25 = sphi 0, %s21
    %s26 = sphi 0, %s22
    %s27 = sphi 0, %s23
    %s49 = sphi 0, %s51
    %s52 = sphi 0, %s49
    %s53 = sphi 0, %s52
    %s69 = sphi 0, %s53
    %s79 = sphi 0, %s81
    %s82 = sphi 0, %s79
    %s83 = sphi 0, %s82
    %s99 = sphi 0, %s83
    %s109 = sphi 0, %s111
    %s112 = sphi 0, %s109
    %s113 = sphi 0, %s112
    %s129 = sphi 0, %s113
    %s139 = sphi 0, %s141
    %s142 = sphi 0, %s139
    %s143 = sphi 0, %s142
    %s159 = sphi 0, %s143
  $region4: #{_lambda_.13} parent=0 // loop_header_branch
    %12 = sbr.rel (%p10) target = $region8
  $region5: #{_lambda_.13} parent=0 // loop_body
    %s14 = ssub.s32 %s9, 1
    %s15 = ssub.s32 %s9, 2
    %s28 = sadd.s32 1, %s19
    %p29 = scmp.ge.s32.totalorder %s28, 1
    %s30 = scalar_select %p29, 0, %s28
    %s31 = sadd.s32 1, %s18
    %s32 = scalar_select %p29, %s31, %s18
    %p33 = scmp.ge.s32.totalorder %s32, 1
    %s34 = scalar_select %p33, 0, %s32
    %s35 = sadd.s32 1, %s17
    %s36 = scalar_select %p33, %s35, %s17
    %p37 = scmp.ge.s32.totalorder %s36, 4
    %s38 = scalar_select %p37, 0, %s36
    %s39 = sadd.s32 1, %s16
    %s40 = scalar_select %p37, %s39, %s16
    %p41 = scmp.ge.s32.totalorder %s40, 2
    %s42 = scalar_select %p41, 0, %s40
    %s43 = ssub.s32 %s16, %s42
    %s44 = ssub.s32 %s17, %s38
    %s45 = sor.u32 %s43, %s44
    %s46 = ssub.s32 %s18, %s34
    %s47 = sor.u32 %s45, %s46
    %p48 = scmp.eq.s32.totalorder %s47, 0
    %s50 = sadd.s32 %s49, 1
    %s51 = scalar_select %p48, %s49, %s50
    %p54 = pneg %p48
    %p55 = scmp.eq.s32.totalorder %s9, 7
    %p56 = por %p54, %p55
    %p57 = scmp.ne.s32.totalorder %s49, %s52
    %p58 = scmp.eq.s32.totalorder %s9, 0
    %p59 = por %p57, %p58
    %p60 = scmp.ne.s32.totalorder %s49, %s52
    %p61 = scmp.eq.s32.totalorder %s14, 7
    %p62 = por %p60, %p61
    %p63 = scmp.ne.s32.totalorder %s52, %s53
    %p64 = scmp.eq.s32.totalorder %s14, 0
    %p65 = por %p63, %p64
    %p66 = scmp.ne.s32.totalorder %s52, %s53
    %p67 = scmp.eq.s32.totalorder %s15, 7
    %p68 = por %p66, %p67
    %p70 = scmp.ne.s32.totalorder %s53, %s69
    %p71 = scmp.eq.s32.totalorder %s15, 0
    %p72 = por %p70, %p71
    %s73 = ssub.s32 %s16, %s42
    %s74 = ssub.s32 %s17, %s38
    %s75 = sor.u32 %s73, %s74
    %s76 = ssub.s32 %s19, %s30
    %s77 = sor.u32 %s75, %s76
    %p78 = scmp.eq.s32.totalorder %s77, 0
    %s80 = sadd.s32 %s79, 1
    %s81 = scalar_select %p78, %s79, %s80
    %p84 = pneg %p78
    %p85 = scmp.eq.s32.totalorder %s9, 7
    %p86 = por %p84, %p85
    %p87 = scmp.ne.s32.totalorder %s79, %s82
    %p88 = scmp.eq.s32.totalorder %s9, 0
    %p89 = por %p87, %p88
    %p90 = scmp.ne.s32.totalorder %s79, %s82
    %p91 = scmp.eq.s32.totalorder %s14, 7
    %p92 = por %p90, %p91
    %p93 = scmp.ne.s32.totalorder %s82, %s83
    %p94 = scmp.eq.s32.totalorder %s14, 0
    %p95 = por %p93, %p94
    %p96 = scmp.ne.s32.totalorder %s82, %s83
    %p97 = scmp.eq.s32.totalorder %s15, 7
    %p98 = por %p96, %p97
    %p100 = scmp.ne.s32.totalorder %s83, %s99
    %p101 = scmp.eq.s32.totalorder %s15, 0
    %p102 = por %p100, %p101
    %s103 = ssub.s32 %s16, %s42
    %s104 = ssub.s32 %s17, %s38
    %s105 = sor.u32 %s103, %s104
    %s106 = ssub.s32 %s19, %s30
    %s107 = sor.u32 %s105, %s106
    %p108 = scmp.eq.s32.totalorder %s107, 0
    %s110 = sadd.s32 %s109, 1
    %s111 = scalar_select %p108, %s109, %s110
    %p114 = pneg %p108
    %p115 = scmp.eq.s32.totalorder %s9, 7
    %p116 = por %p114, %p115
    %p117 = scmp.ne.s32.totalorder %s109, %s112
    %p118 = scmp.eq.s32.totalorder %s9, 0
    %p119 = por %p117, %p118
    %p120 = scmp.ne.s32.totalorder %s109, %s112
    %p121 = scmp.eq.s32.totalorder %s14, 7
    %p122 = por %p120, %p121
    %p123 = scmp.ne.s32.totalorder %s112, %s113
    %p124 = scmp.eq.s32.totalorder %s14, 0
    %p125 = por %p123, %p124
    %p126 = scmp.ne.s32.totalorder %s112, %s113
    %p127 = scmp.eq.s32.totalorder %s15, 7
    %p128 = por %p126, %p127
    %p130 = scmp.ne.s32.totalorder %s113, %s129
    %p131 = scmp.eq.s32.totalorder %s15, 0
    %p132 = por %p130, %p131
    %s133 = ssub.s32 %s16, %s42
    %s134 = ssub.s32 %s17, %s38
    %s135 = sor.u32 %s133, %s134
    %s136 = ssub.s32 %s18, %s34
    %s137 = sor.u32 %s135, %s136
    %p138 = scmp.eq.s32.totalorder %s137, 0
    %s140 = sadd.s32 %s139, 1
    %s141 = scalar_select %p138, %s139, %s140
    %p144 = pneg %p138
    %p145 = scmp.eq.s32.totalorder %s9, 7
    %p146 = por %p144, %p145
    %p147 = scmp.ne.s32.totalorder %s139, %s142
    %p148 = scmp.eq.s32.totalorder %s9, 0
    %p149 = por %p147, %p148
    %p150 = scmp.ne.s32.totalorder %s139, %s142
    %p151 = scmp.eq.s32.totalorder %s14, 7
    %p152 = por %p150, %p151
    %p153 = scmp.ne.s32.totalorder %s142, %s143
    %p154 = scmp.eq.s32.totalorder %s14, 0
    %p155 = por %p153, %p154
    %p156 = scmp.ne.s32.totalorder %s142, %s143
    %p157 = scmp.eq.s32.totalorder %s15, 7
    %p158 = por %p156, %p157
    %p160 = scmp.ne.s32.totalorder %s143, %s159
    %p161 = scmp.eq.s32.totalorder %s15, 0
    %p162 = por %p160, %p161
    %p163 = scmp.le.s32.totalorder 1, %s9
    %p164 = scmp.lt.s32.totalorder %s9, 9
    %p165 = pnand %p163, %p164
    %p166 = pneg %p165
    // Predicated region
    $region9: #{_lambda_.13} parent=5 // pred_check
      _
    $region10: #{_lambda_.13} parent=5 // pred_check_branch
      %168 = sbr.rel (%p165) target = $region12
    $region11: #{_lambda_.13} parent=5 // pred_region
      %s169 = ssub.s32 %s9, 1
    $region12: #{_lambda_.13} parent=5 // pred_fallthru
      _
    %p170 = scmp.lt.s32.totalorder %s9, 8
    // Predicated region
    $region13: #{_lambda_.13} parent=5 // pred_check
      %p171 = pneg %p170
    $region14: #{_lambda_.13} parent=5 // pred_check_branch
      %173 = sbr.rel (%p171) target = $region16
    $region15: #{_lambda_.13} parent=5 // pred_region
      // Predicated region
      $region17: #{_lambda_.13} parent=15 // pred_check
        %p174 = pneg %p59
      $region18: #{_lambda_.13} parent=15 // pred_check_branch
        %176 = sbr.rel (%p174) target = $region20
      $region19: #{_lambda_.13} parent=15 // pred_region
        %s177 = smul.u32 3, %s18
        %p178 = scmp.lt.s32.totalorder %s16, 1
        %s179 = scalar_select %p178, %s16, 1
        %p180 = scmp.lt.s32.totalorder %s17, 3
        %s181 = scalar_select %p180, %s17, 3
        %p182 = scmp.lt.s32.totalorder %s177, 2
        %s183 = scalar_select %p182, %s177, 2
        %s184 = smul.addr %s181, 3
        %s185 = sadd.s32 %s183, %s184
        %s186 = smul.addr %s179, 12
        %s187 = sadd.s32 %s185, %s186
        %s188 = smul.addr %s187, 4
        %s189 = scalar_lea.vmem %s0, %s188
        %s190 = smul.u32 3, %s18
      $region20: #{_lambda_.13} parent=15 // pred_fallthru
        _
      // Predicated region
      $region21: #{_lambda_.13} parent=15 // pred_check
        %p191 = pneg %p89
      $region22: #{_lambda_.13} parent=15 // pred_check_branch
        %193 = sbr.rel (%p191) target = $region24
      $region23: #{_lambda_.13} parent=15 // pred_region
        %s194 = smul.u32 3, %s19
        %p195 = scmp.lt.s32.totalorder %s16, 1
        %s196 = scalar_select %p195, %s16, 1
        %p197 = scmp.lt.s32.totalorder %s17, 3
        %s198 = scalar_select %p197, %s17, 3
        %p199 = scmp.lt.s32.totalorder %s194, 2
        %s200 = scalar_select %p199, %s194, 2
        %s201 = smul.addr %s198, 3
        %s202 = sadd.s32 %s200, %s201
        %s203 = smul.addr %s196, 12
        %s204 = sadd.s32 %s202, %s203
        %s205 = smul.addr %s204, 4
        %s206 = scalar_lea.vmem %s1, %s205
        %s207 = smul.u32 3, %s19
      $region24: #{_lambda_.13} parent=15 // pred_fallthru
        _
      // Predicated region
      $region25: #{_lambda_.13} parent=15 // pred_check
        %p208 = pneg %p119
      $region26: #{_lambda_.13} parent=15 // pred_check_branch
        %210 = sbr.rel (%p208) target = $region28
      $region27: #{_lambda_.13} parent=15 // pred_region
        %s211 = smul.u32 3, %s19
        %p212 = scmp.lt.s32.totalorder %s16, 1
        %s213 = scalar_select %p212, %s16, 1
        %p214 = scmp.lt.s32.totalorder %s17, 3
        %s215 = scalar_select %p214, %s17, 3
        %p216 = scmp.lt.s32.totalorder %s211, 2
        %s217 = scalar_select %p216, %s211, 2
        %s218 = smul.addr %s215, 3
        %s219 = sadd.s32 %s217, %s218
        %s220 = smul.addr %s213, 12
        %s221 = sadd.s32 %s219, %s220
        %s222 = smul.addr %s221, 4
        %s223 = scalar_lea.vmem %s2, %s222
        %s224 = smul.u32 3, %s19
      $region28: #{_lambda_.13} parent=15 // pred_fallthru
        _
    $region16: #{_lambda_.13} parent=5 // pred_fallthru
      _
    %p225 = scmp.le.s32.totalorder 1, %s9
    %p226 = scmp.lt.s32.totalorder %s9, 9
    %p227 = pnand %p225, %p226
    %p228 = pneg %p227
    // Predicated region
    $region29: #{_lambda_.13} parent=5 // pred_check
      _
    $region30: #{_lambda_.13} parent=5 // pred_check_branch
      %230 = sbr.rel (%p227) target = $region32
    $region31: #{_lambda_.13} parent=5 // pred_region
      %s231 = ssub.s32 %s9, 1
      %s232 = smul.u32 3, %s22
      %p233 = scmp.lt.s32.totalorder %s20, 1
      %s234 = scalar_select %p233, %s20, 1
      %p235 = scmp.lt.s32.totalorder %s21, 3
      %s236 = scalar_select %p235, %s21, 3
      %p237 = scmp.lt.s32.totalorder %s232, 2
      %s238 = scalar_select %p237, %s232, 2
      %s239 = smul.addr %s236, 3
      %s240 = sadd.s32 %s238, %s239
      %s241 = smul.addr %s234, 12
      %s242 = sadd.s32 %s240, %s241
      %s243 = smul.addr %s242, 4
      %s244 = scalar_lea.vmem %s0, %s243
      %p245 = pneg %p65
      %p246 = pneg %p62
      %s247 = smul.u32 3, %s23
      %p248 = scmp.lt.s32.totalorder %s20, 1
      %s249 = scalar_select %p248, %s20, 1
      %p250 = scmp.lt.s32.totalorder %s21, 3
      %s251 = scalar_select %p250, %s21, 3
      %p252 = scmp.lt.s32.totalorder %s247, 2
      %s253 = scalar_select %p252, %s247, 2
      %s254 = smul.addr %s251, 3
      %s255 = sadd.s32 %s253, %s254
      %s256 = smul.addr %s249, 12
      %s257 = sadd.s32 %s255, %s256
      %s258 = smul.addr %s257, 4
      %s259 = scalar_lea.vmem %s1, %s258
      %p260 = pneg %p95
      %p261 = pneg %p92
      %s262 = smul.u32 3, %s23
      %p263 = scmp.lt.s32.totalorder %s20, 1
      %s264 = scalar_select %p263, %s20, 1
      %p265 = scmp.lt.s32.totalorder %s21, 3
      %s266 = scalar_select %p265, %s21, 3
      %p267 = scmp.lt.s32.totalorder %s262, 2
      %s268 = scalar_select %p267, %s262, 2
      %s269 = smul.addr %s266, 3
      %s270 = sadd.s32 %s268, %s269
      %s271 = smul.addr %s264, 12
      %s272 = sadd.s32 %s270, %s271
      %s273 = smul.addr %s272, 4
      %s274 = scalar_lea.vmem %s2, %s273
      %p275 = pneg %p125
      %p276 = pneg %p122
      %p277 = pneg %p155
      %p278 = pneg %p152
      %s279 = smul.u32 3, %s22
      %p280 = scmp.lt.s32.totalorder %s20, 1
      %s281 = scalar_select %p280, %s20, 1
      %p282 = scmp.lt.s32.totalorder %s21, 3
      %s283 = scalar_select %p282, %s21, 3
      %p284 = scmp.lt.s32.totalorder %s279, 2
      %s285 = scalar_select %p284, %s279, 2
      %s286 = smul.addr %s283, 3
      %s287 = sadd.s32 %s285, %s286
      %s288 = smul.addr %s281, 12
      %s289 = sadd.s32 %s287, %s288
      %s290 = smul.addr %s289, 4
      %s291 = scalar_lea.vmem %s3, %s290
      %s292 = smul.u32 3, %s22
      %p293 = scmp.lt.s32.totalorder %s20, 1
      %s294 = scalar_select %p293, %s20, 1
      %p295 = scmp.lt.s32.totalorder %s21, 3
      %s296 = scalar_select %p295, %s21, 3
      %p297 = scmp.lt.s32.totalorder %s292, 2
      %s298 = scalar_select %p297, %s292, 2
      %s299 = smul.addr %s296, 3
      %s300 = sadd.s32 %s298, %s299
      %s301 = smul.addr %s294, 12
      %s302 = sadd.s32 %s300, %s301
      %s303 = smul.addr %s302, 4
      %s304 = scalar_lea.vmem %s0, %s303
      %s305 = smul.u32 3, %s22
      %s306 = smul.u32 3, %s23
      %p307 = scmp.lt.s32.totalorder %s20, 1
      %s308 = scalar_select %p307, %s20, 1
      %p309 = scmp.lt.s32.totalorder %s21, 3
      %s310 = scalar_select %p309, %s21, 3
      %p311 = scmp.lt.s32.totalorder %s306, 2
      %s312 = scalar_select %p311, %s306, 2
      %s313 = smul.addr %s310, 3
      %s314 = sadd.s32 %s312, %s313
      %s315 = smul.addr %s308, 12
      %s316 = sadd.s32 %s314, %s315
      %s317 = smul.addr %s316, 4
      %s318 = scalar_lea.vmem %s1, %s317
      %s319 = smul.u32 3, %s23
      %s320 = smul.u32 3, %s23
      %p321 = scmp.lt.s32.totalorder %s20, 1
      %s322 = scalar_select %p321, %s20, 1
      %p323 = scmp.lt.s32.totalorder %s21, 3
      %s324 = scalar_select %p323, %s21, 3
      %p325 = scmp.lt.s32.totalorder %s320, 2
      %s326 = scalar_select %p325, %s320, 2
      %s327 = smul.addr %s324, 3
      %s328 = sadd.s32 %s326, %s327
      %s329 = smul.addr %s322, 12
      %s330 = sadd.s32 %s328, %s329
      %s331 = smul.addr %s330, 4
      %s332 = scalar_lea.vmem %s2, %s331
      %s333 = smul.u32 3, %s23
      %s334 = smul.u32 3, %s22
      %p335 = scmp.lt.s32.totalorder %s20, 1
      %s336 = scalar_select %p335, %s20, 1
      %p337 = scmp.lt.s32.totalorder %s21, 3
      %s338 = scalar_select %p337, %s21, 3
      %p339 = scmp.lt.s32.totalorder %s334, 2
      %s340 = scalar_select %p339, %s334, 2
      %s341 = smul.addr %s338, 3
      %s342 = sadd.s32 %s340, %s341
      %s343 = smul.addr %s336, 12
      %s344 = sadd.s32 %s342, %s343
      %s345 = smul.addr %s344, 4
      %s346 = scalar_lea.vmem %s3, %s345
      %s347 = smul.u32 3, %s22
      %p349 = scmp.eq.s32.totalorder %s23, 0
      // Predicated region
      $region33: #{_lambda_.13} parent=31 // pred_check
        %p350 = pneg %p349
      $region34: #{_lambda_.13} parent=31 // pred_check_branch
        %352 = sbr.rel (%p350) target = $region36
      $region35: #{_lambda_.13} parent=31 // pred_region
        %vm353 = vcmask 7168
        %354 = vst.msk [vmem:[#allocation2] sm:$0xff] %vm353, -inf
        %355 = vst.msk [vmem:[#allocation2 + $0x8] sm:$0xff] %vm353, -inf
        %356 = vst.msk [vmem:[#allocation2 + $0x10] sm:$0xff] %vm353, -inf
        %357 = vst.msk [vmem:[#allocation3] sm:$0xff] %vm353, 0.0
        %358 = vst.msk [vmem:[#allocation3 + $0x8] sm:$0xff] %vm353, 0.0
        %359 = vst.msk [vmem:[#allocation3 + $0x10] sm:$0xff] %vm353, 0.0
        %vm360 = vcmask 261120
        %361 = vst.msk [vmem:[#allocation4] sm:$0xff] %vm360, 0.0
        %362 = vst.msk [vmem:[#allocation4 + $0x8] sm:$0xff] %vm360, 0.0
        %363 = vst.msk [vmem:[#allocation4 + $0x10] sm:$0xff] %vm360, 0.0
      $region36: #{_lambda_.13} parent=31 // pred_fallthru
        _
      %p364 = scmp.le.s32.totalorder %s23, %s22
      // Predicated region
      $region37: #{_lambda_.13} parent=31 // pred_check
        %p365 = pneg %p364
      $region38: #{_lambda_.13} parent=31 // pred_check_branch
        %367 = sbr.rel (%p365) target = $region40
      $region39: #{_lambda_.13} parent=31 // pred_region
        %v368 = vld [vmem:[%s304] sm:$0xf]
        %v369 = vld [vmem:[%s304 + $0x4] sm:$0xf]
        %v370 = vld [vmem:[%s304 + $0x8] sm:$0xf]
        %v371 = vld [vmem:[%s318] sm:$0xf]
        %v372 = vld [vmem:[%s318 + $0x4] sm:$0xf]
        %v373 = vld [vmem:[%s318 + $0x8] sm:$0xf]
        %v374 = vld [vmem:[%s332] sm:$0xf]
        %v375 = vld [vmem:[%s332 + $0x4] sm:$0xf]
        %v376 = vld [vmem:[%s332 + $0x8] sm:$0xf]
        %v380 = vunpack.c.l.b16 %v368
        %v381 = vunpack.c.l.b16 %v369
        %v382 = vunpack.c.l.b16 %v370
        %v383 = vpack.c.b16 %v381, %v380
        %v384 = vpack.c.b16 %v382, %v382
        %v388 = vunpack.c.l.b16 %v371
        %v389 = vunpack.c.l.b16 %v372
        %v390 = vunpack.c.l.b16 %v373
        %v391 = vpack.c.b16 %v389, %v388
        %v392 = vpack.c.b16 %v390, %v390
        %vm393 = vcmask 261120
        %v395 = vsel %vm393, %v383, 0
        %v398 = vsel %vm393, %v384, 0
        %v401 = vsel %vm393, %v391, 0
        %v404 = vsel %vm393, %v392, 0
        %406 = vmatprep.subr.bf16.mxu0 0
        %407 = vmatpush1.bf16.xpose.msra.mxu0 %v401
        %408 = vmatprep.subr.bf16.mxu0 0
        %409 = vmatpush1.bf16.xpose.msra.mxu0 %v404
        %410 = vmatprep.subr.bf16.mxu0 0
        %411 = vmatpush1.bf16.xpose.msra.mxu0 0
        %412 = vmatprep.subr.bf16.mxu0 0
        %413 = vmatpush1.bf16.xpose.msra.mxu0 0
        %414 = vmatprep.subr.bf16.mxu0 0
        %415 = vmatpush1.bf16.xpose.msra.mxu0 0
        %416 = vmatprep.subr.bf16.mxu0 0
        %417 = vmatpush1.bf16.xpose.msra.mxu0 0
        %418 = vmatprep.subr.bf16.mxu0 0
        %419 = vmatpush1.bf16.xpose.msra.mxu0 0
        %420 = vmatprep.subr.bf16.mxu0 0
        %421 = vmatpush1.bf16.xpose.msra.mxu0 0
        %422 = vmatprep.subr.bf16.mxu0 0
        %423 = vmatpush1.bf16.xpose.msra.mxu0 0
        %424 = vmatprep.subr.bf16.mxu0 0
        %425 = vmatpush1.bf16.xpose.msra.mxu0 0
        %426 = vmatprep.subr.bf16.mxu0 0
        %427 = vmatpush1.bf16.xpose.msra.mxu0 0
        %428 = vmatprep.subr.bf16.mxu0 0
        %429 = vmatpush1.bf16.xpose.msra.mxu0 0
        %430 = vmatprep.subr.bf16.mxu0 0
        %431 = vmatpush1.bf16.xpose.msra.mxu0 0
        %432 = vmatprep.subr.bf16.mxu0 0
        %433 = vmatpush1.bf16.xpose.msra.mxu0 0
        %434 = vmatprep.subr.bf16.mxu0 0
        %435 = vmatpush1.bf16.xpose.msra.mxu0 0
        %436 = vmatprep.subr.bf16.mxu0 0
        %437 = vmatpush1.bf16.xpose.msra.mxu0 0
        %438 = vmatprep.mubr.bf16.mxu0 0
        %439 = vmatmul.mubr.bf16.gmra.mrb[0].mxu0 %v395
        %v440 = vpop.f32.mrb[0].mxu0
        %v441 = vadd.f32 0.0, %v440
        %v442 = vpop.f32.mrb[0].mxu0
        %v443 = vpop.f32.mrb[0].mxu0
        %v444 = vadd.f32 0.0, %v443
        %v445 = vpop.f32.mrb[0].mxu0
        %446 = vmatprep.mubr.bf16.mxu0 0
        %447 = vmatmul.mubr.bf16.gmra.mrb[0].mxu0 %v398
        %v448 = vpop.f32.mrb[0].mxu0
        %v449 = vadd.f32 0.0, %v448
        %v450 = vpop.f32.mrb[0].mxu0
        %v451 = vpop.f32.mrb[0].mxu0
        %v452 = vpop.f32.mrb[0].mxu0
        %453 = vdwg.mxu0
        %v454 = vmul.f32 %v441, 0.17677669
        %v455 = vmul.f32 %v444, 0.17677669
        %v456 = vmul.f32 %v449, 0.17677669
        %s457 = smul.u32 %s22, 24
        %v458 = vlaneseq
        %v459 = vshrl.u32 %v458, 7
        %v460 = vadd.s32 %v459, 8
        %v461 = vadd.s32 %v459, 16
        %v462 = vstv %s457
        %v463 = vadd.s32 %v462, %v459
        %v464 = vadd.s32 %v462, %v460
        %v465 = vadd.s32 %v462, %v461
        %s466 = smul.u32 %s23, 24
        %v467 = vlaneseq
        %v468 = vand.u32 %v467, 127
        %v469 = vstv %s466
        %v470 = vadd.s32 %v469, %v468
        %vm471 = vcmp.le.s32.totalorder %v470, %v463
        %vm472 = vcmp.le.s32.totalorder %v470, %v464
        %vm473 = vcmp.le.s32.totalorder %v470, %v465
        %v474 = vsel %vm471, %v454, -1e+30
        %v475 = vsel %vm472, %v455, -1e+30
        %v476 = vsel %vm473, %v456, -1e+30
        %v477 = vld [vmem:[#allocation2] sm:$0xff]
        %v478 = vld [vmem:[#allocation2 + $0x8] sm:$0xff]
        %v479 = vld [vmem:[#allocation2 + $0x10] sm:$0xff]
        %vm480 = vcmask 195584
        %v481 = vsel %vm480, %v474, -inf
        %482 = vmax.xlane.f32.xlu0 %v481
        %v483 = vpop.xlane.xlu0 %482
        %v484 = vsel %vm480, %v475, -inf
        %485 = vmax.xlane.f32.xlu0 %v484
        %v486 = vpop.xlane.xlu0 %485
        %v487 = vsel %vm480, %v476, -inf
        %488 = vmax.xlane.f32.xlu0 %v487
        %v489 = vpop.xlane.xlu0 %488
        %v490 = vmax.f32 %v477, %v483
        %v491 = vmax.f32 %v478, %v486
        %v492 = vmax.f32 %v479, %v489
        %v493 = vsub.f32 %v477, %v490
        %v494 = vsub.f32 %v478, %v491
        %v495 = vsub.f32 %v479, %v492
        %v496 = vmul.f32 %v493, 1.442695
        %v497 = vpow.pop %v496
        %v498 = vmul.f32 %v494, 1.442695
        %v499 = vpow.pop %v498
        %v500 = vmul.f32 %v495, 1.442695
        %v501 = vpow.pop %v500
        %503 = vset.pattern.permute.xlu0 0
        %504 = vperm.xlu0 %503, %v490
        %v505 = vpop.permute.xlu0 %504
        %508 = vset.pattern.permute.xlu0 0
        %509 = vperm.xlu0 %508, %v491
        %v510 = vpop.permute.xlu0 %509
        %513 = vset.pattern.permute.xlu0 0
        %514 = vperm.xlu0 %513, %v492
        %v515 = vpop.permute.xlu0 %514
        %v517 = vsub.f32 %v474, %v505
        %v518 = vsub.f32 %v475, %v510
        %v519 = vsub.f32 %v476, %v515
        %v520 = vmul.f32 %v517, 1.442695
        %v521 = vpow.pop %v520
        %v522 = vmul.f32 %v518, 1.442695
        %v523 = vpow.pop %v522
        %v524 = vmul.f32 %v519, 1.442695
        %v525 = vpow.pop %v524
        %v526 = vld [vmem:[#allocation3] sm:$0xff]
        %v527 = vld [vmem:[#allocation3 + $0x8] sm:$0xff]
        %v528 = vld [vmem:[#allocation3 + $0x10] sm:$0xff]
        %v529 = vmul.f32 %v497, %v526
        %v530 = vmul.f32 %v499, %v527
        %v531 = vmul.f32 %v501, %v528
        %v532 = vsel %vm480, %v521, 0.0
        %533 = vadd.xlane.f32.xlu0 %v532
        %v534 = vpop.xlane.xlu0 %533
        %v535 = vsel %vm480, %v523, 0.0
        %536 = vadd.xlane.f32.xlu0 %v535
        %v537 = vpop.xlane.xlu0 %536
        %v538 = vsel %vm480, %v525, 0.0
        %539 = vadd.xlane.f32.xlu0 %v538
        %v540 = vpop.xlane.xlu0 %539
        %v541 = vadd.f32 %v529, %v534
        %v542 = vadd.f32 %v530, %v537
        %v543 = vadd.f32 %v531, %v540
        %vm544 = vcmask 7168
        %545 = vst.msk [vmem:[#allocation3] sm:$0xff] %vm544, %v541
        %546 = vst.msk [vmem:[#allocation3 + $0x8] sm:$0xff] %vm544, %v542
        %547 = vst.msk [vmem:[#allocation3 + $0x10] sm:$0xff] %vm544, %v543
        %v548 = vld [vmem:[#allocation4] sm:$0xff]
        %v549 = vld [vmem:[#allocation4 + $0x8] sm:$0xff]
        %v550 = vld [vmem:[#allocation4 + $0x10] sm:$0xff]
        %552 = vset.pattern.permute.xlu0 0
        %553 = vperm.xlu0 %552, %v497
        %v554 = vpop.permute.xlu0 %553
        %557 = vset.pattern.permute.xlu0 0
        %558 = vperm.xlu0 %557, %v499
        %v559 = vpop.permute.xlu0 %558
        %562 = vset.pattern.permute.xlu0 0
        %563 = vperm.xlu0 %562, %v501
        %v564 = vpop.permute.xlu0 %563
        %v566 = vmul.f32 %v554, %v548
        %v567 = vmul.f32 %v559, %v549
        %v568 = vmul.f32 %v564, %v550
        %v569 = vpack.c.bf16 %v523, %v521
        %v570 = vpack.c.bf16 %v525, %v525
        %v574 = vunpack.c.l.b16 %v374
        %v575 = vunpack.c.l.b16 %v375
        %v576 = vunpack.c.l.b16 %v376
        %v577 = vpack.c.b16 %v575, %v574
        %v578 = vpack.c.b16 %v576, %v576
        %v581 = vsel %vm480, %v569, 0
        %v584 = vsel %vm480, %v570, 0
        %vm586 = vcmask 1043456
        %v588 = vsel %vm586, %v578, 0
        %590 = vmatprep.subr.bf16.mxu0 0
        %591 = vmatpush1.bf16.msra.mxu0 %v577
        %592 = vmatprep.subr.bf16.mxu0 0
        %593 = vmatpush1.bf16.msra.mxu0 %v588
        %594 = vmatprep.subr.bf16.mxu0 0
        %595 = vmatpush1.bf16.msra.mxu0 0
        %596 = vmatprep.subr.bf16.mxu0 0
        %597 = vmatpush1.bf16.msra.mxu0 0
        %598 = vmatprep.subr.bf16.mxu0 0
        %599 = vmatpush1.bf16.msra.mxu0 0
        %600 = vmatprep.subr.bf16.mxu0 0
        %601 = vmatpush1.bf16.msra.mxu0 0
        %602 = vmatprep.subr.bf16.mxu0 0
        %603 = vmatpush1.bf16.msra.mxu0 0
        %604 = vmatprep.subr.bf16.mxu0 0
        %605 = vmatpush1.bf16.msra.mxu0 0
        %606 = vmatprep.subr.bf16.mxu0 0
        %607 = vmatpush1.bf16.msra.mxu0 0
        %608 = vmatprep.subr.bf16.mxu0 0
        %609 = vmatpush1.bf16.msra.mxu0 0
        %610 = vmatprep.subr.bf16.mxu0 0
        %611 = vmatpush1.bf16.msra.mxu0 0
        %612 = vmatprep.subr.bf16.mxu0 0
        %613 = vmatpush1.bf16.msra.mxu0 0
        %614 = vmatprep.subr.bf16.mxu0 0
        %615 = vmatpush1.bf16.msra.mxu0 0
        %616 = vmatprep.subr.bf16.mxu0 0
        %617 = vmatpush1.bf16.msra.mxu0 0
        %618 = vmatprep.subr.bf16.mxu0 0
        %619 = vmatpush1.bf16.msra.mxu0 0
        %620 = vmatprep.subr.bf16.mxu0 0
        %621 = vmatpush1.bf16.msra.mxu0 0
        %622 = vmatprep.mubr.bf16.mxu0 0
        %623 = vmatmul.mubr.bf16.gmra.mrb[0].mxu0 %v581
        %v624 = vpop.f32.mrb[0].mxu0
        %v625 = vadd.f32 0.0, %v624
        %v626 = vpop.f32.mrb[0].mxu0
        %v627 = vpop.f32.mrb[0].mxu0
        %v628 = vadd.f32 0.0, %v627
        %v629 = vpop.f32.mrb[0].mxu0
        %630 = vmatprep.mubr.bf16.mxu0 0
        %631 = vmatmul.mubr.bf16.gmra.mrb[0].mxu0 %v584
        %v632 = vpop.f32.mrb[0].mxu0
        %v633 = vadd.f32 0.0, %v632
        %v634 = vpop.f32.mrb[0].mxu0
        %v635 = vpop.f32.mrb[0].mxu0
        %v636 = vpop.f32.mrb[0].mxu0
        %637 = vdwg.mxu0
        %v638 = vadd.f32 %v566, %v625
        %v639 = vadd.f32 %v567, %v628
        %v640 = vadd.f32 %v568, %v633
        %641 = vst.msk [vmem:[#allocation4] sm:$0xff] %vm393, %v638
        %642 = vst.msk [vmem:[#allocation4 + $0x8] sm:$0xff] %vm393, %v639
        %643 = vst.msk [vmem:[#allocation4 + $0x10] sm:$0xff] %vm393, %v640
        %644 = vst.msk [vmem:[#allocation2] sm:$0xff] %vm544, %v490
        %645 = vst.msk [vmem:[#allocation2 + $0x8] sm:$0xff] %vm544, %v491
        %646 = vst.msk [vmem:[#allocation2 + $0x10] sm:$0xff] %vm544, %v492
      $region40: #{_lambda_.13} parent=31 // pred_fallthru
        _
      // Predicated region
      $region41: #{_lambda_.13} parent=31 // pred_check
        %p647 = pneg %p349
      $region42: #{_lambda_.13} parent=31 // pred_check_branch
        %649 = sbr.rel (%p647) target = $region44
      $region43: #{_lambda_.13} parent=31 // pred_region
        %v650 = vld [vmem:[#allocation4] sm:$0xff]
        %v651 = vld [vmem:[#allocation4 + $0x8] sm:$0xff]
        %v652 = vld [vmem:[#allocation4 + $0x10] sm:$0xff]
        %v653 = vld [vmem:[#allocation3] sm:$0xff]
        %v654 = vld [vmem:[#allocation3 + $0x8] sm:$0xff]
        %v655 = vld [vmem:[#allocation3 + $0x10] sm:$0xff]
        %v656 = vrcp.pop %v653
        %v657 = vrcp.pop %v654
        %v658 = vrcp.pop %v655
        %660 = vset.pattern.permute.xlu0 0
        %661 = vperm.xlu0 %660, %v656
        %v662 = vpop.permute.xlu0 %661
        %665 = vset.pattern.permute.xlu0 0
        %666 = vperm.xlu0 %665, %v657
        %v667 = vpop.permute.xlu0 %666
        %670 = vset.pattern.permute.xlu0 0
        %671 = vperm.xlu0 %670, %v658
        %v672 = vpop.permute.xlu0 %671
        %v674 = vmul.f32 %v650, %v662
        %v675 = vmul.f32 %v651, %v667
        %v676 = vmul.f32 %v652, %v672
        %v677 = vpack.c.bf16 %v675, %v674
        %v678 = vpack.c.bf16 %v676, %v676
        %v681 = vunpack.c.l.b16 %v677
        %v682 = vunpack.c.h.b16 %v677
        %v683 = vunpack.c.l.b16 %v678
        %v684 = vpack.c.b16 %v681, %v681
        %v685 = vpack.c.b16 %v682, %v682
        %v686 = vpack.c.b16 %v683, %v683
        %vm690 = vcmask 257024
        %691 = vst.msk [vmem:[%s346] sm:$0xf] %vm690, %v684
        %692 = vst.msk [vmem:[%s346 + $0x4] sm:$0xf] %vm690, %v685
        %693 = vst.msk [vmem:[%s346 + $0x8] sm:$0xf] %vm690, %v686
      $region44: #{_lambda_.13} parent=31 // pred_fallthru
        _
      %s694 = smul.u32 3, %s22
      %p695 = scmp.lt.s32.totalorder %s20, 1
      %s696 = scalar_select %p695, %s20, 1
      %p697 = scmp.lt.s32.totalorder %s21, 3
      %s698 = scalar_select %p697, %s21, 3
      %p699 = scmp.lt.s32.totalorder %s694, 2
      %s700 = scalar_select %p699, %s694, 2
      %s701 = smul.addr %s698, 3
      %s702 = sadd.s32 %s700, %s701
      %s703 = smul.addr %s696, 12
      %s704 = sadd.s32 %s702, %s703
      %s705 = smul.addr %s704, 4
      %s706 = scalar_lea.vmem %s3, %s705
      // Predicated region
      $region45: #{_lambda_.13} parent=31 // pred_check
        %p707 = pneg %p152
      $region46: #{_lambda_.13} parent=31 // pred_check_branch
        %709 = sbr.rel (%p707) target = $region48
      $region47: #{_lambda_.13} parent=31 // pred_region
        %s710 = smul.u32 3, %s22
      $region48: #{_lambda_.13} parent=31 // pred_fallthru
        _
    $region32: #{_lambda_.13} parent=5 // pred_fallthru
      _
    %p711 = scmp.le.s32.totalorder 2, %s9
    // Predicated region
    $region49: #{_lambda_.13} parent=5 // pred_check
      %p712 = pneg %p711
    $region50: #{_lambda_.13} parent=5 // pred_check_branch
      %714 = sbr.rel (%p712) target = $region52
    $region51: #{_lambda_.13} parent=5 // pred_region
      %s715 = ssub.s32 %s9, 2
      // Predicated region
      $region53: #{_lambda_.13} parent=51 // pred_check
        %p716 = pneg %p158
      $region54: #{_lambda_.13} parent=51 // pred_check_branch
        %718 = sbr.rel (%p716) target = $region56
      $region55: #{_lambda_.13} parent=51 // pred_region
        %s719 = smul.u32 3, %s26
        %p720 = scmp.lt.s32.totalorder %s24, 1
        %s721 = scalar_select %p720, %s24, 1
        %p722 = scmp.lt.s32.totalorder %s25, 3
        %s723 = scalar_select %p722, %s25, 3
        %p724 = scmp.lt.s32.totalorder %s719, 2
        %s725 = scalar_select %p724, %s719, 2
        %s726 = smul.addr %s723, 3
        %s727 = sadd.s32 %s725, %s726
        %s728 = smul.addr %s721, 12
        %s729 = sadd.s32 %s727, %s728
        %s730 = smul.addr %s729, 4
        %s731 = scalar_lea.vmem %s3, %s730
      $region56: #{_lambda_.13} parent=51 // pred_fallthru
        _
    $region52: #{_lambda_.13} parent=5 // pred_fallthru
      _
  $region6: #{_lambda_.13} parent=0 // loop_footer
    %s13 = sadd.s32 1, %s9
  $region7: #{_lambda_.13} parent=0 // loop_footer_branch
    %8 = sbr.rel target = $region3
  $region8: #{_lambda_.13} parent=0 // loop_exit
    _

// kernel: _lambda_.15
$region0: #{_lambda_.15}
  #allocation0 [shape = 'u32[]', space=smem, size = 0x4, offset = 0x4, fixed_abs, tag = 'smem constant byte address 0x4 - core index']
  #allocation1 [shape = 'u32[144,128]{1,0:T(1,128)}', space=vmem, size = 0x12000, scoped, tag = 'internal scratch']
  #allocation2 [shape = 'f32[48,128]{1,0:T(8,128)}', space=vmem, size = 0x6000, scoped, tag = 'scratch operand']
  %s0 = inlined_call_operand.vmem [shape: bf16[48,128], index: 0, kind: input, shape index: {}]
  %s1 = inlined_call_operand.vmem [shape: f32[1,128], index: 1, kind: input, shape index: {}]
  %s2 = inlined_call_operand.vmem [shape: bf16[128,384], index: 2, kind: input, shape index: {}]
  %s3 = inlined_call_operand.vmem [shape: bf16[128,384], index: 3, kind: input, shape index: {}]
  %s4 = inlined_call_operand.vmem [shape: bf16[384,128], index: 4, kind: input, shape index: {}]
  %s5 = inlined_call_operand.vmem [shape: bf16[48,128], index: 5, kind: output, shape index: {}]
  %s6 = sld [smem:[#allocation0]]
  $region143: #{_lambda_.15} parent=0
    _
  %s8 = ssub.s32 1, %s6
  %s9 = scalar_select 0, %s8, %s6
  $region1: #{_lambda_.15} parent=0
    #allocation3 [shape = 'u8[65536]{0}', space=vmem, size = 0x10000, scoped, tag = 'input window, operand 2']
    #allocation4 [shape = 'u8[65536]{0}', space=vmem, size = 0x10000, scoped, tag = 'input window, operand 3']
    loop: start=0, step=1, limit=5
    $region2: #{_lambda_.15} parent=1 // loop_pre_header
      _
    $region3: #{_lambda_.15} parent=1 // loop_header
      %s11 = sphi 0, %s15
      %p12 = scmp.ge.s32.totalorder %s11, 5
      %s18 = sphi 0, %s30
      %s19 = sphi 0, %s26
      %s20 = sphi 0, %s18
      %s21 = sphi 0, %s19
      %s22 = sphi 0, %s20
      %s23 = sphi 0, %s21
      %s33 = sphi 0, %s35
      %s36 = sphi 0, %s33
      %s37 = sphi 0, %s36
      %s53 = sphi 0, %s37
      %s57 = sphi 0, %s57
      %s59 = sphi 0, %s57
      %s60 = sphi 0, %s59
      %s74 = sphi 0, %s60
      %s80 = sphi 0, %s82
      %s83 = sphi 0, %s80
      %s84 = sphi 0, %s83
      %s100 = sphi 0, %s84
      %s106 = sphi 0, %s108
      %s109 = sphi 0, %s106
      %s110 = sphi 0, %s109
      %s126 = sphi 0, %s110
      %s132 = sphi 0, %s134
      %s135 = sphi 0, %s132
      %s136 = sphi 0, %s135
      %s152 = sphi 0, %s136
      %s158 = sphi 0, %s160
      %s161 = sphi 0, %s158
      %s162 = sphi 0, %s161
      %s178 = sphi 0, %s162
    $region4: #{_lambda_.15} parent=1 // loop_header_branch
      %14 = sbr.rel (%p12) target = $region8
    $region5: #{_lambda_.15} parent=1 // loop_body
      %s16 = ssub.s32 %s11, 1
      %s17 = ssub.s32 %s11, 2
      %s24 = sadd.s32 1, %s19
      %p25 = scmp.ge.s32.totalorder %s24, 3
      %s26 = scalar_select %p25, 0, %s24
      %s27 = sadd.s32 1, %s18
      %s28 = scalar_select %p25, %s27, %s18
      %p29 = scmp.ge.s32.totalorder %s28, 1
      %s30 = scalar_select %p29, 0, %s28
      %s31 = ssub.s32 %s18, %s30
      %p32 = scmp.eq.s32.totalorder %s31, 0
      %s34 = sadd.s32 %s33, 1
      %s35 = scalar_select %p32, %s33, %s34
      %p38 = pneg %p32
      %p39 = scmp.eq.s32.totalorder %s11, 2
      %p40 = por %p38, %p39
      %p41 = scmp.ne.s32.totalorder %s33, %s36
      %p42 = scmp.eq.s32.totalorder %s11, 0
      %p43 = por %p41, %p42
      %p44 = scmp.ne.s32.totalorder %s33, %s36
      %p45 = scmp.eq.s32.totalorder %s16, 2
      %p46 = por %p44, %p45
      %p47 = scmp.ne.s32.totalorder %s36, %s37
      %p48 = scmp.eq.s32.totalorder %s16, 0
      %p49 = por %p47, %p48
      %p50 = scmp.ne.s32.totalorder %s36, %s37
      %p51 = scmp.eq.s32.totalorder %s17, 2
      %p52 = por %p50, %p51
      %p54 = scmp.ne.s32.totalorder %s37, %s53
      %p55 = scmp.eq.s32.totalorder %s17, 0
      %p56 = por %p54, %p55
      %s58 = sadd.s32 %s57, 1
      %p61 = scmp.eq.s32.totalorder %s11, 2
      %p62 = scmp.ne.s32.totalorder %s57, %s59
      %p63 = scmp.eq.s32.totalorder %s11, 0
      %p64 = por %p62, %p63
      %p65 = scmp.ne.s32.totalorder %s57, %s59
      %p66 = scmp.eq.s32.totalorder %s16, 2
      %p67 = por %p65, %p66
      %p68 = scmp.ne.s32.totalorder %s59, %s60
      %p69 = scmp.eq.s32.totalorder %s16, 0
      %p70 = por %p68, %p69
      %p71 = scmp.ne.s32.totalorder %s59, %s60
      %p72 = scmp.eq.s32.totalorder %s17, 2
      %p73 = por %p71, %p72
      %p75 = scmp.ne.s32.totalorder %s60, %s74
      %p76 = scmp.eq.s32.totalorder %s17, 0
      %p77 = por %p75, %p76
      %s78 = ssub.s32 %s19, %s26
      %p79 = scmp.eq.s32.totalorder %s78, 0
      %s81 = sadd.s32 %s80, 1
      %s82 = scalar_select %p79, %s80, %s81
      %p85 = pneg %p79
      %p86 = scmp.eq.s32.totalorder %s11, 2
      %p87 = por %p85, %p86
      %p88 = scmp.ne.s32.totalorder %s80, %s83
      %p89 = scmp.eq.s32.totalorder %s11, 0
      %p90 = por %p88, %p89
      %p91 = scmp.ne.s32.totalorder %s80, %s83
      %p92 = scmp.eq.s32.totalorder %s16, 2
      %p93 = por %p91, %p92
      %p94 = scmp.ne.s32.totalorder %s83, %s84
      %p95 = scmp.eq.s32.totalorder %s16, 0
      %p96 = por %p94, %p95
      %p97 = scmp.ne.s32.totalorder %s83, %s84
      %p98 = scmp.eq.s32.totalorder %s17, 2
      %p99 = por %p97, %p98
      %p101 = scmp.ne.s32.totalorder %s84, %s100
      %p102 = scmp.eq.s32.totalorder %s17, 0
      %p103 = por %p101, %p102
      %s104 = ssub.s32 %s19, %s26
      %p105 = scmp.eq.s32.totalorder %s104, 0
      %s107 = sadd.s32 %s106, 1
      %s108 = scalar_select %p105, %s106, %s107
      %p111 = pneg %p105
      %p112 = scmp.eq.s32.totalorder %s11, 2
      %p113 = por %p111, %p112
      %p114 = scmp.ne.s32.totalorder %s106, %s109
      %p115 = scmp.eq.s32.totalorder %s11, 0
      %p116 = por %p114, %p115
      %p117 = scmp.ne.s32.totalorder %s106, %s109
      %p118 = scmp.eq.s32.totalorder %s16, 2
      %p119 = por %p117, %p118
      %p120 = scmp.ne.s32.totalorder %s109, %s110
      %p121 = scmp.eq.s32.totalorder %s16, 0
      %p122 = por %p120, %p121
      %p123 = scmp.ne.s32.totalorder %s109, %s110
      %p124 = scmp.eq.s32.totalorder %s17, 2
      %p125 = por %p123, %p124
      %p127 = scmp.ne.s32.totalorder %s110, %s126
      %p128 = scmp.eq.s32.totalorder %s17, 0
      %p129 = por %p127, %p128
      %s130 = ssub.s32 %s19, %s26
      %p131 = scmp.eq.s32.totalorder %s130, 0
      %s133 = sadd.s32 %s132, 1
      %s134 = scalar_select %p131, %s132, %s133
      %p137 = pneg %p131
      %p138 = scmp.eq.s32.totalorder %s11, 2
      %p139 = por %p137, %p138
      %p140 = scmp.ne.s32.totalorder %s132, %s135
      %p141 = scmp.eq.s32.totalorder %s11, 0
      %p142 = por %p140, %p141
      %p143 = scmp.ne.s32.totalorder %s132, %s135
      %p144 = scmp.eq.s32.totalorder %s16, 2
      %p145 = por %p143, %p144
      %p146 = scmp.ne.s32.totalorder %s135, %s136
      %p147 = scmp.eq.s32.totalorder %s16, 0
      %p148 = por %p146, %p147
      %p149 = scmp.ne.s32.totalorder %s135, %s136
      %p150 = scmp.eq.s32.totalorder %s17, 2
      %p151 = por %p149, %p150
      %p153 = scmp.ne.s32.totalorder %s136, %s152
      %p154 = scmp.eq.s32.totalorder %s17, 0
      %p155 = por %p153, %p154
      %s156 = ssub.s32 %s18, %s30
      %p157 = scmp.eq.s32.totalorder %s156, 0
      %s159 = sadd.s32 %s158, 1
      %s160 = scalar_select %p157, %s158, %s159
      %p163 = pneg %p157
      %p164 = scmp.eq.s32.totalorder %s11, 2
      %p165 = por %p163, %p164
      %p166 = scmp.ne.s32.totalorder %s158, %s161
      %p167 = scmp.eq.s32.totalorder %s11, 0
      %p168 = por %p166, %p167
      %p169 = scmp.ne.s32.totalorder %s158, %s161
      %p170 = scmp.eq.s32.totalorder %s16, 2
      %p171 = por %p169, %p170
      %p172 = scmp.ne.s32.totalorder %s161, %s162
      %p173 = scmp.eq.s32.totalorder %s16, 0
      %p174 = por %p172, %p173
      %p175 = scmp.ne.s32.totalorder %s161, %s162
      %p176 = scmp.eq.s32.totalorder %s17, 2
      %p177 = por %p175, %p176
      %p179 = scmp.ne.s32.totalorder %s162, %s178
      %p180 = scmp.eq.s32.totalorder %s17, 0
      %p181 = por %p179, %p180
      %p182 = scmp.le.s32.totalorder 1, %s11
      %p183 = scmp.lt.s32.totalorder %s11, 4
      %p184 = pnand %p182, %p183
      %p185 = pneg %p184
      // Predicated region
      $region9: #{_lambda_.15} parent=5 // pred_check
        _
      $region10: #{_lambda_.15} parent=5 // pred_check_branch
        %187 = sbr.rel (%p184) target = $region12
      $region11: #{_lambda_.15} parent=5 // pred_region
        %s188 = ssub.s32 %s11, 1
        // Predicated region
        $region13: #{_lambda_.15} parent=11 // pred_check
          %p189 = pneg %p49
        $region14: #{_lambda_.15} parent=11 // pred_check_branch
          %191 = sbr.rel (%p189) target = $region16
        $region15: #{_lambda_.15} parent=11 // pred_region
          %s192 = smul.u32 6, %s20
          %p193 = scmp.lt.s32.totalorder %s192, 5
          %s194 = scalar_select %p193, %s192, 5
          %s195 = smul.addr %s194, 4
          %s196 = scalar_lea.vmem %s0, %s195
          %s197 = smul.u32 6, %s20
        $region16: #{_lambda_.15} parent=11 // pred_fallthru
          _
        // Predicated region
        $region17: #{_lambda_.15} parent=11 // pred_check
          %p198 = pneg %p70
        $region18: #{_lambda_.15} parent=11 // pred_check_branch
          %200 = sbr.rel (%p198) target = $region20
        $region19: #{_lambda_.15} parent=11 // pred_region
          _
        $region20: #{_lambda_.15} parent=11 // pred_fallthru
          _
      $region12: #{_lambda_.15} parent=5 // pred_fallthru
        _
      %p201 = scmp.lt.s32.totalorder %s11, 3
      // Predicated region
      $region21: #{_lambda_.15} parent=5 // pred_check
        %p202 = pneg %p201
      $region22: #{_lambda_.15} parent=5 // pred_check_branch
        %204 = sbr.rel (%p202) target = $region24
      $region23: #{_lambda_.15} parent=5 // pred_region
        // Predicated region
        $region25: #{_lambda_.15} parent=23 // pred_check
          %p205 = pneg %p90
        $region26: #{_lambda_.15} parent=23 // pred_check_branch
          %207 = sbr.rel (%p205) target = $region28
        $region27: #{_lambda_.15} parent=23 // pred_region
          %s208 = sand.u32 %s80, 1
          %s209 = sand.u32 %s80, 1
          %s210 = smul.addr %s209, 64
          %s211 = scalar_lea.vmem [#allocation3], %s210
          %s212 = smul.addr %s19, 4
          %s213 = scalar_lea.vmem %s2, %s212
          // Predicated region
          $region29: #{_lambda_.15} parent=27 // pred_check
            _
          $region30: #{_lambda_.15} parent=27 // pred_check_branch
            %215 = sbr.rel (0) target = $region32
          $region31: #{_lambda_.15} parent=27 // pred_region
            // Predicated region
            $region33: #{_lambda_.15} parent=31 // pred_check
              _
            $region34: #{_lambda_.15} parent=31 // pred_check_branch
              %217 = sbr.rel target = $region36
            $region35: #{_lambda_.15} parent=31 // pred_region
              // Predicated region
              $region48: #{_lambda_.15} parent=35 // pred_check
                _
              $region49: #{_lambda_.15} parent=35 // pred_check_branch
                %262 = sbr.rel (0) target = $region51
              $region50: #{_lambda_.15} parent=35 // pred_region
                loop: start=0, step=1, limit=1
                $region52: #{_lambda_.15} parent=50 // loop_pre_header
                  _
                $region53: #{_lambda_.15} parent=50 // loop_header
                  %s264 = sphi 0, %s268
                  %p265 = scmp.ge.s32.totalorder %s264, 1
                  %s269 = sphi %s213, %s213
                  %s270 = sphi %s211, %s211
                $region54: #{_lambda_.15} parent=50 // loop_header_branch
                  %267 = sbr.rel (%p265) target = $region58
                $region55: #{_lambda_.15} parent=50 // loop_body
                  _
                $region56: #{_lambda_.15} parent=50 // loop_footer
                  %s268 = sadd.s32 1, %s264
                $region57: #{_lambda_.15} parent=50 // loop_footer_branch
                  %263 = sbr.rel target = $region53
                $region58: #{_lambda_.15} parent=50 // loop_exit
                  _
                loop: start=0, step=1, limit=1
                $region59: #{_lambda_.15} parent=50 // loop_pre_header
                  _
                $region60: #{_lambda_.15} parent=50 // loop_header
                  %s273 = sphi 0, %s277
                  %p274 = scmp.ge.s32.totalorder %s273, 1
                  %s278 = sphi %s213, %s213
                  %s279 = sphi %s211, %s211
                $region61: #{_lambda_.15} parent=50 // loop_header_branch
                  %276 = sbr.rel (%p274) target = $region65
                $region62: #{_lambda_.15} parent=50 // loop_body
                  %v280 = vld [vmem:[%s278] sm:$0xf]
                  %281 = vst [vmem:[%s279] sm:$0xf] %v280
                  %v282 = vld [vmem:[%s278 + $0xc] sm:$0xf]
                  %283 = vst [vmem:[%s279 + $0x4] sm:$0xf] %v282
                  %v284 = vld [vmem:[%s278 + $0x18] sm:$0xf]
                  %285 = vst [vmem:[%s279 + $0x8] sm:$0xf] %v284
                  %v286 = vld [vmem:[%s278 + $0x24] sm:$0xf]
                  %287 = vst [vmem:[%s279 + $0xc] sm:$0xf] %v286
                  %v288 = vld [vmem:[%s278 + $0x30] sm:$0xf]
                  %289 = vst [vmem:[%s279 + $0x10] sm:$0xf] %v288
                  %v290 = vld [vmem:[%s278 + $0x3c] sm:$0xf]
                  %291 = vst [vmem:[%s279 + $0x14] sm:$0xf] %v290
                  %v292 = vld [vmem:[%s278 + $0x48] sm:$0xf]
                  %293 = vst [vmem:[%s279 + $0x18] sm:$0xf] %v292
                  %v294 = vld [vmem:[%s278 + $0x54] sm:$0xf]
                  %295 = vst [vmem:[%s279 + $0x1c] sm:$0xf] %v294
                  %v296 = vld [vmem:[%s278 + $0x60] sm:$0xf]
                  %297 = vst [vmem:[%s279 + $0x20] sm:$0xf] %v296
                  %v298 = vld [vmem:[%s278 + $0x6c] sm:$0xf]
                  %299 = vst [vmem:[%s279 + $0x24] sm:$0xf] %v298
                  %v300 = vld [vmem:[%s278 + $0x78] sm:$0xf]
                  %301 = vst [vmem:[%s279 + $0x28] sm:$0xf] %v300
                  %v302 = vld [vmem:[%s278 + $0x84] sm:$0xf]
                  %303 = vst [vmem:[%s279 + $0x2c] sm:$0xf] %v302
                  %v304 = vld [vmem:[%s278 + $0x90] sm:$0xf]
                  %305 = vst [vmem:[%s279 + $0x30] sm:$0xf] %v304
                  %v306 = vld [vmem:[%s278 + $0x9c] sm:$0xf]
                  %307 = vst [vmem:[%s279 + $0x34] sm:$0xf] %v306
                  %v308 = vld [vmem:[%s278 + $0xa8] sm:$0xf]
                  %309 = vst [vmem:[%s279 + $0x38] sm:$0xf] %v308
                  %v310 = vld [vmem:[%s278 + $0xb4] sm:$0xf]
                  %311 = vst [vmem:[%s279 + $0x3c] sm:$0xf] %v310
                $region63: #{_lambda_.15} parent=50 // loop_footer
                  %s277 = sadd.s32 1, %s273
                $region64: #{_lambda_.15} parent=50 // loop_footer_branch
                  %272 = sbr.rel target = $region60
                $region65: #{_lambda_.15} parent=50 // loop_exit
                  _
              $region51: #{_lambda_.15} parent=35 // pred_fallthru
                _
            $region36: #{_lambda_.15} parent=31 // pred_fallthru
              _
            // Predicated region
            $region37: #{_lambda_.15} parent=31 // pred_check
              _
            $region38: #{_lambda_.15} parent=31 // pred_check_branch
              %219 = sbr.rel (0) target = $region40
            $region39: #{_lambda_.15} parent=31 // pred_region
              loop: start=0, step=1, limit=1
              $region41: #{_lambda_.15} parent=39 // loop_pre_header
                _
              $region42: #{_lambda_.15} parent=39 // loop_header
                %s222 = sphi 0, %s226
                %p223 = scmp.ge.s32.totalorder %s222, 1
                %s227 = sphi %s213, %s213
                %s228 = sphi %s211, %s211
              $region43: #{_lambda_.15} parent=39 // loop_header_branch
                %225 = sbr.rel (%p223) target = $region47
              $region44: #{_lambda_.15} parent=39 // loop_body
                %v229 = vld [vmem:[%s227] sm:$0xf]
                %230 = vst [vmem:[%s228] sm:$0xf] %v229
                %v231 = vld [vmem:[%s227 + $0xc] sm:$0xf]
                %232 = vst [vmem:[%s228 + $0x4] sm:$0xf] %v231
                %v233 = vld [vmem:[%s227 + $0x18] sm:$0xf]
                %234 = vst [vmem:[%s228 + $0x8] sm:$0xf] %v233
                %v235 = vld [vmem:[%s227 + $0x24] sm:$0xf]
                %236 = vst [vmem:[%s228 + $0xc] sm:$0xf] %v235
                %v237 = vld [vmem:[%s227 + $0x30] sm:$0xf]
                %238 = vst [vmem:[%s228 + $0x10] sm:$0xf] %v237
                %v239 = vld [vmem:[%s227 + $0x3c] sm:$0xf]
                %240 = vst [vmem:[%s228 + $0x14] sm:$0xf] %v239
                %v241 = vld [vmem:[%s227 + $0x48] sm:$0xf]
                %242 = vst [vmem:[%s228 + $0x18] sm:$0xf] %v241
                %v243 = vld [vmem:[%s227 + $0x54] sm:$0xf]
                %244 = vst [vmem:[%s228 + $0x1c] sm:$0xf] %v243
                %v245 = vld [vmem:[%s227 + $0x60] sm:$0xf]
                %246 = vst [vmem:[%s228 + $0x20] sm:$0xf] %v245
                %v247 = vld [vmem:[%s227 + $0x6c] sm:$0xf]
                %248 = vst [vmem:[%s228 + $0x24] sm:$0xf] %v247
                %v249 = vld [vmem:[%s227 + $0x78] sm:$0xf]
                %250 = vst [vmem:[%s228 + $0x28] sm:$0xf] %v249
                %v251 = vld [vmem:[%s227 + $0x84] sm:$0xf]
                %252 = vst [vmem:[%s228 + $0x2c] sm:$0xf] %v251
                %v253 = vld [vmem:[%s227 + $0x90] sm:$0xf]
                %254 = vst [vmem:[%s228 + $0x30] sm:$0xf] %v253
                %v255 = vld [vmem:[%s227 + $0x9c] sm:$0xf]
                %256 = vst [vmem:[%s228 + $0x34] sm:$0xf] %v255
                %v257 = vld [vmem:[%s227 + $0xa8] sm:$0xf]
                %258 = vst [vmem:[%s228 + $0x38] sm:$0xf] %v257
                %v259 = vld [vmem:[%s227 + $0xb4] sm:$0xf]
                %260 = vst [vmem:[%s228 + $0x3c] sm:$0xf] %v259
              $region45: #{_lambda_.15} parent=39 // loop_footer
                %s226 = sadd.s32 1, %s222
              $region46: #{_lambda_.15} parent=39 // loop_footer_branch
                %221 = sbr.rel target = $region42
              $region47: #{_lambda_.15} parent=39 // loop_exit
                _
            $region40: #{_lambda_.15} parent=31 // pred_fallthru
              _
          $region32: #{_lambda_.15} parent=27 // pred_fallthru
            _
          %312 = vnop
        $region28: #{_lambda_.15} parent=23 // pred_fallthru
          _
        // Predicated region
        $region66: #{_lambda_.15} parent=23 // pred_check
          %p313 = pneg %p116
        $region67: #{_lambda_.15} parent=23 // pred_check_branch
          %315 = sbr.rel (%p313) target = $region69
        $region68: #{_lambda_.15} parent=23 // pred_region
          %s316 = sand.u32 %s106, 1
          %s317 = sand.u32 %s106, 1
          %s318 = smul.addr %s317, 64
          %s319 = scalar_lea.vmem [#allocation4], %s318
          %s320 = smul.addr %s19, 4
          %s321 = scalar_lea.vmem %s3, %s320
          // Predicated region
          $region70: #{_lambda_.15} parent=68 // pred_check
            _
          $region71: #{_lambda_.15} parent=68 // pred_check_branch
            %323 = sbr.rel (0) target = $region73
          $region72: #{_lambda_.15} parent=68 // pred_region
            // Predicated region
            $region74: #{_lambda_.15} parent=72 // pred_check
              _
            $region75: #{_lambda_.15} parent=72 // pred_check_branch
              %325 = sbr.rel target = $region77
            $region76: #{_lambda_.15} parent=72 // pred_region
              // Predicated region
              $region89: #{_lambda_.15} parent=76 // pred_check
                _
              $region90: #{_lambda_.15} parent=76 // pred_check_branch
                %370 = sbr.rel (0) target = $region92
              $region91: #{_lambda_.15} parent=76 // pred_region
                loop: start=0, step=1, limit=1
                $region93: #{_lambda_.15} parent=91 // loop_pre_header
                  _
                $region94: #{_lambda_.15} parent=91 // loop_header
                  %s372 = sphi 0, %s376
                  %p373 = scmp.ge.s32.totalorder %s372, 1
                  %s377 = sphi %s321, %s321
                  %s378 = sphi %s319, %s319
                $region95: #{_lambda_.15} parent=91 // loop_header_branch
                  %375 = sbr.rel (%p373) target = $region99
                $region96: #{_lambda_.15} parent=91 // loop_body
                  _
                $region97: #{_lambda_.15} parent=91 // loop_footer
                  %s376 = sadd.s32 1, %s372
                $region98: #{_lambda_.15} parent=91 // loop_footer_branch
                  %371 = sbr.rel target = $region94
                $region99: #{_lambda_.15} parent=91 // loop_exit
                  _
                loop: start=0, step=1, limit=1
                $region100: #{_lambda_.15} parent=91 // loop_pre_header
                  _
                $region101: #{_lambda_.15} parent=91 // loop_header
                  %s381 = sphi 0, %s385
                  %p382 = scmp.ge.s32.totalorder %s381, 1
                  %s386 = sphi %s321, %s321
                  %s387 = sphi %s319, %s319
                $region102: #{_lambda_.15} parent=91 // loop_header_branch
                  %384 = sbr.rel (%p382) target = $region106
                $region103: #{_lambda_.15} parent=91 // loop_body
                  %v388 = vld [vmem:[%s386] sm:$0xf]
                  %389 = vst [vmem:[%s387] sm:$0xf] %v388
                  %v390 = vld [vmem:[%s386 + $0xc] sm:$0xf]
                  %391 = vst [vmem:[%s387 + $0x4] sm:$0xf] %v390
                  %v392 = vld [vmem:[%s386 + $0x18] sm:$0xf]
                  %393 = vst [vmem:[%s387 + $0x8] sm:$0xf] %v392
                  %v394 = vld [vmem:[%s386 + $0x24] sm:$0xf]
                  %395 = vst [vmem:[%s387 + $0xc] sm:$0xf] %v394
                  %v396 = vld [vmem:[%s386 + $0x30] sm:$0xf]
                  %397 = vst [vmem:[%s387 + $0x10] sm:$0xf] %v396
                  %v398 = vld [vmem:[%s386 + $0x3c] sm:$0xf]
                  %399 = vst [vmem:[%s387 + $0x14] sm:$0xf] %v398
                  %v400 = vld [vmem:[%s386 + $0x48] sm:$0xf]
                  %401 = vst [vmem:[%s387 + $0x18] sm:$0xf] %v400
                  %v402 = vld [vmem:[%s386 + $0x54] sm:$0xf]
                  %403 = vst [vmem:[%s387 + $0x1c] sm:$0xf] %v402
                  %v404 = vld [vmem:[%s386 + $0x60] sm:$0xf]
                  %405 = vst [vmem:[%s387 + $0x20] sm:$0xf] %v404
                  %v406 = vld [vmem:[%s386 + $0x6c] sm:$0xf]
                  %407 = vst [vmem:[%s387 + $0x24] sm:$0xf] %v406
                  %v408 = vld [vmem:[%s386 + $0x78] sm:$0xf]
                  %409 = vst [vmem:[%s387 + $0x28] sm:$0xf] %v408
                  %v410 = vld [vmem:[%s386 + $0x84] sm:$0xf]
                  %411 = vst [vmem:[%s387 + $0x2c] sm:$0xf] %v410
                  %v412 = vld [vmem:[%s386 + $0x90] sm:$0xf]
                  %413 = vst [vmem:[%s387 + $0x30] sm:$0xf] %v412
                  %v414 = vld [vmem:[%s386 + $0x9c] sm:$0xf]
                  %415 = vst [vmem:[%s387 + $0x34] sm:$0xf] %v414
                  %v416 = vld [vmem:[%s386 + $0xa8] sm:$0xf]
                  %417 = vst [vmem:[%s387 + $0x38] sm:$0xf] %v416
                  %v418 = vld [vmem:[%s386 + $0xb4] sm:$0xf]
                  %419 = vst [vmem:[%s387 + $0x3c] sm:$0xf] %v418
                $region104: #{_lambda_.15} parent=91 // loop_footer
                  %s385 = sadd.s32 1, %s381
                $region105: #{_lambda_.15} parent=91 // loop_footer_branch
                  %380 = sbr.rel target = $region101
                $region106: #{_lambda_.15} parent=91 // loop_exit
                  _
              $region92: #{_lambda_.15} parent=76 // pred_fallthru
                _
            $region77: #{_lambda_.15} parent=72 // pred_fallthru
              _
            // Predicated region
            $region78: #{_lambda_.15} parent=72 // pred_check
              _
            $region79: #{_lambda_.15} parent=72 // pred_check_branch
              %327 = sbr.rel (0) target = $region81
            $region80: #{_lambda_.15} parent=72 // pred_region
              loop: start=0, step=1, limit=1
              $region82: #{_lambda_.15} parent=80 // loop_pre_header
                _
              $region83: #{_lambda_.15} parent=80 // loop_header
                %s330 = sphi 0, %s334
                %p331 = scmp.ge.s32.totalorder %s330, 1
                %s335 = sphi %s321, %s321
                %s336 = sphi %s319, %s319
              $region84: #{_lambda_.15} parent=80 // loop_header_branch
                %333 = sbr.rel (%p331) target = $region88
              $region85: #{_lambda_.15} parent=80 // loop_body
                %v337 = vld [vmem:[%s335] sm:$0xf]
                %338 = vst [vmem:[%s336] sm:$0xf] %v337
                %v339 = vld [vmem:[%s335 + $0xc] sm:$0xf]
                %340 = vst [vmem:[%s336 + $0x4] sm:$0xf] %v339
                %v341 = vld [vmem:[%s335 + $0x18] sm:$0xf]
                %342 = vst [vmem:[%s336 + $0x8] sm:$0xf] %v341
                %v343 = vld [vmem:[%s335 + $0x24] sm:$0xf]
                %344 = vst [vmem:[%s336 + $0xc] sm:$0xf] %v343
                %v345 = vld [vmem:[%s335 + $0x30] sm:$0xf]
                %346 = vst [vmem:[%s336 + $0x10] sm:$0xf] %v345
                %v347 = vld [vmem:[%s335 + $0x3c] sm:$0xf]
                %348 = vst [vmem:[%s336 + $0x14] sm:$0xf] %v347
                %v349 = vld [vmem:[%s335 + $0x48] sm:$0xf]
                %350 = vst [vmem:[%s336 + $0x18] sm:$0xf] %v349
                %v351 = vld [vmem:[%s335 + $0x54] sm:$0xf]
                %352 = vst [vmem:[%s336 + $0x1c] sm:$0xf] %v351
                %v353 = vld [vmem:[%s335 + $0x60] sm:$0xf]
                %354 = vst [vmem:[%s336 + $0x20] sm:$0xf] %v353
                %v355 = vld [vmem:[%s335 + $0x6c] sm:$0xf]
                %356 = vst [vmem:[%s336 + $0x24] sm:$0xf] %v355
                %v357 = vld [vmem:[%s335 + $0x78] sm:$0xf]
                %358 = vst [vmem:[%s336 + $0x28] sm:$0xf] %v357
                %v359 = vld [vmem:[%s335 + $0x84] sm:$0xf]
                %360 = vst [vmem:[%s336 + $0x2c] sm:$0xf] %v359
                %v361 = vld [vmem:[%s335 + $0x90] sm:$0xf]
                %362 = vst [vmem:[%s336 + $0x30] sm:$0xf] %v361
                %v363 = vld [vmem:[%s335 + $0x9c] sm:$0xf]
                %364 = vst [vmem:[%s336 + $0x34] sm:$0xf] %v363
                %v365 = vld [vmem:[%s335 + $0xa8] sm:$0xf]
                %366 = vst [vmem:[%s336 + $0x38] sm:$0xf] %v365
                %v367 = vld [vmem:[%s335 + $0xb4] sm:$0xf]
                %368 = vst [vmem:[%s336 + $0x3c] sm:$0xf] %v367
              $region86: #{_lambda_.15} parent=80 // loop_footer
                %s334 = sadd.s32 1, %s330
              $region87: #{_lambda_.15} parent=80 // loop_footer_branch
                %329 = sbr.rel target = $region83
              $region88: #{_lambda_.15} parent=80 // loop_exit
                _
            $region81: #{_lambda_.15} parent=72 // pred_fallthru
              _
          $region73: #{_lambda_.15} parent=68 // pred_fallthru
            _
          %420 = vnop
        $region69: #{_lambda_.15} parent=23 // pred_fallthru
          _
        // Predicated region
        $region107: #{_lambda_.15} parent=23 // pred_check
          %p421 = pneg %p142
        $region108: #{_lambda_.15} parent=23 // pred_check_branch
          %423 = sbr.rel (%p421) target = $region110
        $region109: #{_lambda_.15} parent=23 // pred_region
          %s424 = smul.u32 16, %s19
          %p425 = scmp.lt.s32.totalorder %s424, 47
          %s426 = scalar_select %p425, %s424, 47
          %s427 = smul.addr %s426, 4
          %s428 = scalar_lea.vmem %s4, %s427
          %s429 = smul.u32 16, %s19
        $region110: #{_lambda_.15} parent=23 // pred_fallthru
          _
      $region24: #{_lambda_.15} parent=5 // pred_fallthru
        _
      %p430 = scmp.le.s32.totalorder 1, %s11
      %p431 = scmp.lt.s32.totalorder %s11, 4
      %p432 = pnand %p430, %p431
      %p433 = pneg %p432
      // Predicated region
      $region111: #{_lambda_.15} parent=5 // pred_check
        _
      $region112: #{_lambda_.15} parent=5 // pred_check_branch
        %435 = sbr.rel (%p432) target = $region114
      $region113: #{_lambda_.15} parent=5 // pred_region
        %s436 = ssub.s32 %s11, 1
        %s437 = sand.u32 %s83, 1
        %s438 = sand.u32 %s83, 1
        %s439 = smul.addr %s438, 64
        %s440 = scalar_lea.vmem [#allocation3], %s439
        // Predicated region
        $region115: #{_lambda_.15} parent=113 // pred_check
          %p441 = pneg %p96
        $region116: #{_lambda_.15} parent=113 // pred_check_branch
          %443 = sbr.rel (%p441) target = $region118
        $region117: #{_lambda_.15} parent=113 // pred_region
          _
        $region118: #{_lambda_.15} parent=113 // pred_fallthru
          _
        %s444 = sand.u32 %s109, 1
        %s445 = sand.u32 %s109, 1
        %s446 = smul.addr %s445, 64
        %s447 = scalar_lea.vmem [#allocation4], %s446
        // Predicated region
        $region119: #{_lambda_.15} parent=113 // pred_check
          %p448 = pneg %p122
        $region120: #{_lambda_.15} parent=113 // pred_check_branch
          %450 = sbr.rel (%p448) target = $region122
        $region121: #{_lambda_.15} parent=113 // pred_region
          _
        $region122: #{_lambda_.15} parent=113 // pred_fallthru
          _
        %s451 = smul.u32 6, %s20
        %p452 = scmp.lt.s32.totalorder %s451, 5
        %s453 = scalar_select %p452, %s451, 5
        %s454 = smul.addr %s453, 4
        %s455 = scalar_lea.vmem %s0, %s454
        %p456 = pneg %p49
        %p457 = pneg %p46
        %p458 = pneg %p70
        %p459 = pneg %p67
        %s460 = sand.u32 %s83, 1
        %s461 = sand.u32 %s83, 1
        %s462 = smul.addr %s461, 64
        %s463 = scalar_lea.vmem [#allocation3], %s462
        %p464 = pneg %p96
        %p465 = pneg %p93
        %s466 = sand.u32 %s109, 1
        %s467 = sand.u32 %s109, 1
        %s468 = smul.addr %s467, 64
        %s469 = scalar_lea.vmem [#allocation4], %s468
        %p470 = pneg %p122
        %p471 = pneg %p119
        %s472 = smul.u32 16, %s21
        %p473 = scmp.lt.s32.totalorder %s472, 47
        %s474 = scalar_select %p473, %s472, 47
        %s475 = smul.addr %s474, 4
        %s476 = scalar_lea.vmem %s4, %s475
        %p477 = pneg %p148
        %p478 = pneg %p145
        %p479 = pneg %p174
        %p480 = pneg %p171
        %s481 = smul.u32 6, %s20
        %p482 = scmp.lt.s32.totalorder %s481, 5
        %s483 = scalar_select %p482, %s481, 5
        %s484 = smul.addr %s483, 4
        %s485 = scalar_lea.vmem %s5, %s484
        %s486 = smul.u32 6, %s20
        %p487 = scmp.lt.s32.totalorder %s486, 5
        %s488 = scalar_select %p487, %s486, 5
        %s489 = smul.addr %s488, 4
        %s490 = scalar_lea.vmem %s0, %s489
        %s491 = smul.u32 6, %s20
        %s492 = smul.u32 16, %s21
        %p493 = scmp.lt.s32.totalorder %s492, 47
        %s494 = scalar_select %p493, %s492, 47
        %s495 = smul.addr %s494, 4
        %s496 = scalar_lea.vmem %s4, %s495
        %s497 = smul.u32 16, %s21
        %s498 = smul.u32 6, %s20
        %p499 = scmp.lt.s32.totalorder %s498, 5
        %s500 = scalar_select %p499, %s498, 5
        %s501 = smul.addr %s500, 4
        %s502 = scalar_lea.vmem %s5, %s501
        %s503 = smul.u32 6, %s20
        %p505 = scmp.eq.s32.totalorder %s21, 0
        // Predicated region
        $region123: #{_lambda_.15} parent=113 // pred_check
          %p506 = pneg %p505
        $region124: #{_lambda_.15} parent=113 // pred_check_branch
          %508 = sbr.rel (%p506) target = $region126
        $region125: #{_lambda_.15} parent=113 // pred_region
          %509 = vst [vmem:[#allocation2] sm:$0xff] 0.0
          %510 = vst [vmem:[#allocation2 + $0x8] sm:$0xff] 0.0
          %511 = vst [vmem:[#allocation2 + $0x10] sm:$0xff] 0.0
          %512 = vst [vmem:[#allocation2 + $0x18] sm:$0xff] 0.0
          %513 = vst [vmem:[#allocation2 + $0x20] sm:$0xff] 0.0
          %514 = vst [vmem:[#allocation2 + $0x28] sm:$0xff] 0.0
        $region126: #{_lambda_.15} parent=113 // pred_fallthru
          _
        %v515 = vld [vmem:[%s490] sm:$0xf]
        %v516 = vld [vmem:[%s490 + $0x4] sm:$0xf]
        %v517 = vld [vmem:[%s490 + $0x8] sm:$0xf]
        %v518 = vld [vmem:[%s490 + $0xc] sm:$0xf]
        %v519 = vld [vmem:[%s490 + $0x10] sm:$0xf]
        %v520 = vld [vmem:[%s490 + $0x14] sm:$0xf]
        %v521 = vunpack.c.l.bf16 %v515
        %v522 = vunpack.c.l.bf16 %v516
        %v523 = vunpack.c.l.bf16 %v517
        %v524 = vunpack.c.l.bf16 %v518
        %v525 = vunpack.c.l.bf16 %v519
        %v526 = vunpack.c.l.bf16 %v520
        %v527 = vmul.f32 %v521, %v521
        %v528 = vmul.f32 %v522, %v522
        %v529 = vmul.f32 %v523, %v523
        %v530 = vmul.f32 %v524, %v524
        %v531 = vmul.f32 %v525, %v525
        %v532 = vmul.f32 %v526, %v526
        %533 = vadd.xlane.f32.xlu0 %v527
        %v534 = vpop.xlane.xlu0 %533
        %535 = vadd.xlane.f32.xlu0 %v528
        %v536 = vpop.xlane.xlu0 %535
        %537 = vadd.xlane.f32.xlu0 %v529
        %v538 = vpop.xlane.xlu0 %537
        %539 = vadd.xlane.f32.xlu0 %v530
        %v540 = vpop.xlane.xlu0 %539
        %541 = vadd.xlane.f32.xlu0 %v531
        %v542 = vpop.xlane.xlu0 %541
        %543 = vadd.xlane.f32.xlu0 %v532
        %v544 = vpop.xlane.xlu0 %543
        %v545 = vrcp.pop 128.0
        %v546 = vmul.f32 %v534, %v545
        %v547 = vmul.f32 %v536, %v545
        %v548 = vmul.f32 %v538, %v545
        %v549 = vmul.f32 %v540, %v545
        %v550 = vmul.f32 %v542, %v545
        %v551 = vmul.f32 %v544, %v545
        %v552 = vadd.f32 %v546, 1e-05
        %v553 = vadd.f32 %v547, 1e-05
        %v554 = vadd.f32 %v548, 1e-05
        %v555 = vadd.f32 %v549, 1e-05
        %v556 = vadd.f32 %v550, 1e-05
        %v557 = vadd.f32 %v551, 1e-05
        %v558 = vrsqrt.pop %v552
        %v559 = vrsqrt.pop %v553
        %v560 = vrsqrt.pop %v554
        %v561 = vrsqrt.pop %v555
        %v562 = vrsqrt.pop %v556
        %v563 = vrsqrt.pop %v557
        %v564 = vmul.f32 %v521, %v558
        %v565 = vmul.f32 %v522, %v559
        %v566 = vmul.f32 %v523, %v560
        %v567 = vmul.f32 %v524, %v561
        %v568 = vmul.f32 %v525, %v562
        %v569 = vmul.f32 %v526, %v563
        %v570 = vld [vmem:[%s1] sm:$0x1]
        %v572 = vlaneseq
        %v573 = vshrl.u32 %v572, 7
        %v574 = vsub.s32 0, %v573
        %v575 = vrot.slane %v570, %v574
        %v577 = vmul.f32 %v564, %v575
        %v578 = vmul.f32 %v565, %v575
        %v579 = vmul.f32 %v566, %v575
        %v580 = vmul.f32 %v567, %v575
        %v581 = vmul.f32 %v568, %v575
        %v582 = vmul.f32 %v569, %v575
        %v583 = vpack.c.bf16 %v578, %v577
        %v584 = vpack.c.bf16 %v580, %v579
        %v585 = vpack.c.bf16 %v582, %v581
        %v586 = vld [vmem:[%s440] sm:$0xf]
        %v587 = vld [vmem:[%s440 + $0x4] sm:$0xf]
        %v588 = vld [vmem:[%s440 + $0x8] sm:$0xf]
        %v589 = vld [vmem:[%s440 + $0xc] sm:$0xf]
        %v590 = vld [vmem:[%s440 + $0x10] sm:$0xf]
        %v591 = vld [vmem:[%s440 + $0x14] sm:$0xf]
        %v592 = vld [vmem:[%s440 + $0x18] sm:$0xf]
        %v593 = vld [vmem:[%s440 + $0x1c] sm:$0xf]
        %v594 = vld [vmem:[%s440 + $0x20] sm:$0xf]
        %v595 = vld [vmem:[%s440 + $0x24] sm:$0xf]
        %v596 = vld [vmem:[%s440 + $0x28] sm:$0xf]
        %v597 = vld [vmem:[%s440 + $0x2c] sm:$0xf]
        %v598 = vld [vmem:[%s440 + $0x30] sm:$0xf]
        %v599 = vld [vmem:[%s440 + $0x34] sm:$0xf]
        %v600 = vld [vmem:[%s440 + $0x38] sm:$0xf]
        %v601 = vld [vmem:[%s440 + $0x3c] sm:$0xf]
        %v618 = vunpack.c.l.b16 %v586
        %v619 = vunpack.c.l.b16 %v587
        %v620 = vunpack.c.l.b16 %v588
        %v621 = vunpack.c.l.b16 %v589
        %v622 = vunpack.c.l.b16 %v590
        %v623 = vunpack.c.l.b16 %v591
        %v624 = vunpack.c.l.b16 %v592
        %v625 = vunpack.c.l.b16 %v593
        %v626 = vunpack.c.l.b16 %v594
        %v627 = vunpack.c.l.b16 %v595
        %v628 = vunpack.c.l.b16 %v596
        %v629 = vunpack.c.l.b16 %v597
        %v630 = vunpack.c.l.b16 %v598
        %v631 = vunpack.c.l.b16 %v599
        %v632 = vunpack.c.l.b16 %v600
        %v633 = vunpack.c.l.b16 %v601
        %v634 = vpack.c.b16 %v619, %v618
        %v635 = vpack.c.b16 %v621, %v620
        %v636 = vpack.c.b16 %v623, %v622
        %v637 = vpack.c.b16 %v625, %v624
        %v638 = vpack.c.b16 %v627, %v626
        %v639 = vpack.c.b16 %v629, %v628
        %v640 = vpack.c.b16 %v631, %v630
        %v641 = vpack.c.b16 %v633, %v632
        %650 = vmatprep.subr.bf16.mxu0 0
        %651 = vmatpush1.bf16.msra.mxu0 %v634
        %652 = vmatprep.subr.bf16.mxu0 0
        %653 = vmatpush1.bf16.msra.mxu0 %v635
        %654 = vmatprep.subr.bf16.mxu0 0
        %655 = vmatpush1.bf16.msra.mxu0 %v636
        %656 = vmatprep.subr.bf16.mxu0 0
        %657 = vmatpush1.bf16.msra.mxu0 %v637
        %658 = vmatprep.subr.bf16.mxu0 0
        %659 = vmatpush1.bf16.msra.mxu0 %v638
        %660 = vmatprep.subr.bf16.mxu0 0
        %661 = vmatpush1.bf16.msra.mxu0 %v639
        %662 = vmatprep.subr.bf16.mxu0 0
        %663 = vmatpush1.bf16.msra.mxu0 %v640
        %664 = vmatprep.subr.bf16.mxu0 0
        %665 = vmatpush1.bf16.msra.mxu0 %v641
        %666 = vmatprep.subr.bf16.mxu0 0
        %667 = vmatpush1.bf16.msra.mxu0 0
        %668 = vmatprep.subr.bf16.mxu0 0
        %669 = vmatpush1.bf16.msra.mxu0 0
        %670 = vmatprep.subr.bf16.mxu0 0
        %671 = vmatpush1.bf16.msra.mxu0 0
        %672 = vmatprep.subr.bf16.mxu0 0
        %673 = vmatpush1.bf16.msra.mxu0 0
        %674 = vmatprep.subr.bf16.mxu0 0
        %675 = vmatpush1.bf16.msra.mxu0 0
        %676 = vmatprep.subr.bf16.mxu0 0
        %677 = vmatpush1.bf16.msra.mxu0 0
        %678 = vmatprep.subr.bf16.mxu0 0
        %679 = vmatpush1.bf16.msra.mxu0 0
        %680 = vmatprep.subr.bf16.mxu0 0
        %681 = vmatpush1.bf16.msra.mxu0 0
        %682 = vmatprep.mubr.bf16.mxu0 0
        %683 = vmatmul.mubr.bf16.gmra.mrb[0].mxu0 %v583
        %v684 = vpop.f32.mrb[0].mxu0
        %v685 = vadd.f32 0.0, %v684
        %v686 = vpop.f32.mrb[0].mxu0
        %v687 = vpop.f32.mrb[0].mxu0
        %v688 = vadd.f32 0.0, %v687
        %v689 = vpop.f32.mrb[0].mxu0
        %690 = vmatprep.mubr.bf16.mxu0 0
        %691 = vmatmul.mubr.bf16.gmra.mrb[0].mxu0 %v584
        %v692 = vpop.f32.mrb[0].mxu0
        %v693 = vadd.f32 0.0, %v692
        %v694 = vpop.f32.mrb[0].mxu0
        %v695 = vpop.f32.mrb[0].mxu0
        %v696 = vadd.f32 0.0, %v695
        %v697 = vpop.f32.mrb[0].mxu0
        %698 = vmatprep.mubr.bf16.mxu0 0
        %699 = vmatmul.mubr.bf16.gmra.mrb[0].mxu0 %v585
        %v700 = vpop.f32.mrb[0].mxu0
        %v701 = vadd.f32 0.0, %v700
        %v702 = vpop.f32.mrb[0].mxu0
        %v703 = vpop.f32.mrb[0].mxu0
        %v704 = vadd.f32 0.0, %v703
        %v705 = vpop.f32.mrb[0].mxu0
        %706 = vdwg.mxu0
        %v707 = vld [vmem:[%s447] sm:$0xf]
        %v708 = vld [vmem:[%s447 + $0x4] sm:$0xf]
        %v709 = vld [vmem:[%s447 + $0x8] sm:$0xf]
        %v710 = vld [vmem:[%s447 + $0xc] sm:$0xf]
        %v711 = vld [vmem:[%s447 + $0x10] sm:$0xf]
        %v712 = vld [vmem:[%s447 + $0x14] sm:$0xf]
        %v713 = vld [vmem:[%s447 + $0x18] sm:$0xf]
        %v714 = vld [vmem:[%s447 + $0x1c] sm:$0xf]
        %v715 = vld [vmem:[%s447 + $0x20] sm:$0xf]
        %v716 = vld [vmem:[%s447 + $0x24] sm:$0xf]
        %v717 = vld [vmem:[%s447 + $0x28] sm:$0xf]
        %v718 = vld [vmem:[%s447 + $0x2c] sm:$0xf]
        %v719 = vld [vmem:[%s447 + $0x30] sm:$0xf]
        %v720 = vld [vmem:[%s447 + $0x34] sm:$0xf]
        %v721 = vld [vmem:[%s447 + $0x38] sm:$0xf]
        %v722 = vld [vmem:[%s447 + $0x3c] sm:$0xf]
        %v739 = vunpack.c.l.b16 %v707
        %v740 = vunpack.c.l.b16 %v708
        %v741 = vunpack.c.l.b16 %v709
        %v742 = vunpack.c.l.b16 %v710
        %v743 = vunpack.c.l.b16 %v711
        %v744 = vunpack.c.l.b16 %v712
        %v745 = vunpack.c.l.b16 %v713
        %v746 = vunpack.c.l.b16 %v714
        %v747 = vunpack.c.l.b16 %v715
        %v748 = vunpack.c.l.b16 %v716
        %v749 = vunpack.c.l.b16 %v717
        %v750 = vunpack.c.l.b16 %v718
        %v751 = vunpack.c.l.b16 %v719
        %v752 = vunpack.c.l.b16 %v720
        %v753 = vunpack.c.l.b16 %v721
        %v754 = vunpack.c.l.b16 %v722
        %v755 = vpack.c.b16 %v740, %v739
        %v756 = vpack.c.b16 %v742, %v741
        %v757 = vpack.c.b16 %v744, %v743
        %v758 = vpack.c.b16 %v746, %v745
        %v759 = vpack.c.b16 %v748, %v747
        %v760 = vpack.c.b16 %v750, %v749
        %v761 = vpack.c.b16 %v752, %v751
        %v762 = vpack.c.b16 %v754, %v753
        %771 = vmatprep.subr.bf16.mxu0 0
        %772 = vmatpush1.bf16.msra.mxu0 %v755
        %773 = vmatprep.subr.bf16.mxu0 0
        %774 = vmatpush1.bf16.msra.mxu0 %v756
        %775 = vmatprep.subr.bf16.mxu0 0
        %776 = vmatpush1.bf16.msra.mxu0 %v757
        %777 = vmatprep.subr.bf16.mxu0 0
        %778 = vmatpush1.bf16.msra.mxu0 %v758
        %779 = vmatprep.subr.bf16.mxu0 0
        %780 = vmatpush1.bf16.msra.mxu0 %v759
        %781 = vmatprep.subr.bf16.mxu0 0
        %782 = vmatpush1.bf16.msra.mxu0 %v760
        %783 = vmatprep.subr.bf16.mxu0 0
        %784 = vmatpush1.bf16.msra.mxu0 %v761
        %785 = vmatprep.subr.bf16.mxu0 0
        %786 = vmatpush1.bf16.msra.mxu0 %v762
        %787 = vmatprep.subr.bf16.mxu0 0
        %788 = vmatpush1.bf16.msra.mxu0 0
        %789 = vmatprep.subr.bf16.mxu0 0
        %790 = vmatpush1.bf16.msra.mxu0 0
        %791 = vmatprep.subr.bf16.mxu0 0
        %792 = vmatpush1.bf16.msra.mxu0 0
        %793 = vmatprep.subr.bf16.mxu0 0
        %794 = vmatpush1.bf16.msra.mxu0 0
        %795 = vmatprep.subr.bf16.mxu0 0
        %796 = vmatpush1.bf16.msra.mxu0 0
        %797 = vmatprep.subr.bf16.mxu0 0
        %798 = vmatpush1.bf16.msra.mxu0 0
        %799 = vmatprep.subr.bf16.mxu0 0
        %800 = vmatpush1.bf16.msra.mxu0 0
        %801 = vmatprep.subr.bf16.mxu0 0
        %802 = vmatpush1.bf16.msra.mxu0 0
        %803 = vmatprep.mubr.bf16.mxu0 0
        %804 = vmatmul.mubr.bf16.gmra.mrb[0].mxu0 %v583
        %v805 = vpop.f32.mrb[0].mxu0
        %v806 = vadd.f32 0.0, %v805
        %v807 = vpop.f32.mrb[0].mxu0
        %v808 = vpop.f32.mrb[0].mxu0
        %v809 = vadd.f32 0.0, %v808
        %v810 = vpop.f32.mrb[0].mxu0
        %811 = vmatprep.mubr.bf16.mxu0 0
        %812 = vmatmul.mubr.bf16.gmra.mrb[0].mxu0 %v584
        %v813 = vpop.f32.mrb[0].mxu0
        %v814 = vadd.f32 0.0, %v813
        %v815 = vpop.f32.mrb[0].mxu0
        %v816 = vpop.f32.mrb[0].mxu0
        %v817 = vadd.f32 0.0, %v816
        %v818 = vpop.f32.mrb[0].mxu0
        %819 = vmatprep.mubr.bf16.mxu0 0
        %820 = vmatmul.mubr.bf16.gmra.mrb[0].mxu0 %v585
        %v821 = vpop.f32.mrb[0].mxu0
        %v822 = vadd.f32 0.0, %v821
        %v823 = vpop.f32.mrb[0].mxu0
        %v824 = vpop.f32.mrb[0].mxu0
        %v825 = vadd.f32 0.0, %v824
        %v826 = vpop.f32.mrb[0].mxu0
        %827 = vdwg.mxu0
        %v828 = vxor.u32 %v685, 2147483648
        %v829 = vxor.u32 %v688, 2147483648
        %v830 = vxor.u32 %v693, 2147483648
        %v831 = vxor.u32 %v696, 2147483648
        %v832 = vxor.u32 %v701, 2147483648
        %v833 = vxor.u32 %v704, 2147483648
        %v834 = vmul.f32 %v828, 1.442695
        %v835 = vpow.pop %v834
        %v836 = vmul.f32 %v829, 1.442695
        %v837 = vpow.pop %v836
        %v838 = vmul.f32 %v830, 1.442695
        %v839 = vpow.pop %v838
        %v840 = vmul.f32 %v831, 1.442695
        %v841 = vpow.pop %v840
        %v842 = vmul.f32 %v832, 1.442695
        %v843 = vpow.pop %v842
        %v844 = vmul.f32 %v833, 1.442695
        %v845 = vpow.pop %v844
        %v846 = vadd.f32 %v835, 1.0
        %v847 = vadd.f32 %v837, 1.0
        %v848 = vadd.f32 %v839, 1.0
        %v849 = vadd.f32 %v841, 1.0
        %v850 = vadd.f32 %v843, 1.0
        %v851 = vadd.f32 %v845, 1.0
        %v852 = vrcp.pop %v846
        %v853 = vmul.f32 1.0, %v852
        %v854 = vrcp.pop %v847
        %v855 = vmul.f32 1.0, %v854
        %v856 = vrcp.pop %v848
        %v857 = vmul.f32 1.0, %v856
        %v858 = vrcp.pop %v849
        %v859 = vmul.f32 1.0, %v858
        %v860 = vrcp.pop %v850
        %v861 = vmul.f32 1.0, %v860
        %v862 = vrcp.pop %v851
        %v863 = vmul.f32 1.0, %v862
        %v864 = vmul.f32 %v685, %v853
        %v865 = vmul.f32 %v688, %v855
        %v866 = vmul.f32 %v693, %v857
        %v867 = vmul.f32 %v696, %v859
        %v868 = vmul.f32 %v701, %v861
        %v869 = vmul.f32 %v704, %v863
        %v870 = vmul.f32 %v864, %v806
        %v871 = vmul.f32 %v865, %v809
        %v872 = vmul.f32 %v866, %v814
        %v873 = vmul.f32 %v867, %v817
        %v874 = vmul.f32 %v868, %v822
        %v875 = vmul.f32 %v869, %v825
        %v876 = vld [vmem:[#allocation2] sm:$0xff]
        %v877 = vld [vmem:[#allocation2 + $0x8] sm:$0xff]
        %v878 = vld [vmem:[#allocation2 + $0x10] sm:$0xff]
        %v879 = vld [vmem:[#allocation2 + $0x18] sm:$0xff]
        %v880 = vld [vmem:[#allocation2 + $0x20] sm:$0xff]
        %v881 = vld [vmem:[#allocation2 + $0x28] sm:$0xff]
        %v882 = vpack.c.bf16 %v871, %v870
        %v883 = vpack.c.bf16 %v873, %v872
        %v884 = vpack.c.bf16 %v875, %v874
        %v885 = vld [vmem:[%s496] sm:$0xf]
        %v886 = vld [vmem:[%s496 + $0x4] sm:$0xf]
        %v887 = vld [vmem:[%s496 + $0x8] sm:$0xf]
        %v888 = vld [vmem:[%s496 + $0xc] sm:$0xf]
        %v889 = vld [vmem:[%s496 + $0x10] sm:$0xf]
        %v890 = vld [vmem:[%s496 + $0x14] sm:$0xf]
        %v891 = vld [vmem:[%s496 + $0x18] sm:$0xf]
        %v892 = vld [vmem:[%s496 + $0x1c] sm:$0xf]
        %v893 = vld [vmem:[%s496 + $0x20] sm:$0xf]
        %v894 = vld [vmem:[%s496 + $0x24] sm:$0xf]
        %v895 = vld [vmem:[%s496 + $0x28] sm:$0xf]
        %v896 = vld [vmem:[%s496 + $0x2c] sm:$0xf]
        %v897 = vld [vmem:[%s496 + $0x30] sm:$0xf]
        %v898 = vld [vmem:[%s496 + $0x34] sm:$0xf]
        %v899 = vld [vmem:[%s496 + $0x38] sm:$0xf]
        %v900 = vld [vmem:[%s496 + $0x3c] sm:$0xf]
        %v917 = vunpack.c.l.b16 %v885
        %v918 = vunpack.c.l.b16 %v886
        %v919 = vunpack.c.l.b16 %v887
        %v920 = vunpack.c.l.b16 %v888
        %v921 = vunpack.c.l.b16 %v889
        %v922 = vunpack.c.l.b16 %v890
        %v923 = vunpack.c.l.b16 %v891
        %v924 = vunpack.c.l.b16 %v892
        %v925 = vunpack.c.l.b16 %v893
        %v926 = vunpack.c.l.b16 %v894
        %v927 = vunpack.c.l.b16 %v895
        %v928 = vunpack.c.l.b16 %v896
        %v929 = vunpack.c.l.b16 %v897
        %v930 = vunpack.c.l.b16 %v898
        %v931 = vunpack.c.l.b16 %v899
        %v932 = vunpack.c.l.b16 %v900
        %v933 = vpack.c.b16 %v918, %v917
        %v934 = vpack.c.b16 %v920, %v919
        %v935 = vpack.c.b16 %v922, %v921
        %v936 = vpack.c.b16 %v924, %v923
        %v937 = vpack.c.b16 %v926, %v925
        %v938 = vpack.c.b16 %v928, %v927
        %v939 = vpack.c.b16 %v930, %v929
        %v940 = vpack.c.b16 %v932, %v931
        %949 = vmatprep.subr.bf16.mxu0 0
        %950 = vmatpush1.bf16.msra.mxu0 %v933
        %951 = vmatprep.subr.bf16.mxu0 0
        %952 = vmatpush1.bf16.msra.mxu0 %v934
        %953 = vmatprep.subr.bf16.mxu0 0
        %954 = vmatpush1.bf16.msra.mxu0 %v935
        %955 = vmatprep.subr.bf16.mxu0 0
        %956 = vmatpush1.bf16.msra.mxu0 %v936
        %957 = vmatprep.subr.bf16.mxu0 0
        %958 = vmatpush1.bf16.msra.mxu0 %v937
        %959 = vmatprep.subr.bf16.mxu0 0
        %960 = vmatpush1.bf16.msra.mxu0 %v938
        %961 = vmatprep.subr.bf16.mxu0 0
        %962 = vmatpush1.bf16.msra.mxu0 %v939
        %963 = vmatprep.subr.bf16.mxu0 0
        %964 = vmatpush1.bf16.msra.mxu0 %v940
        %965 = vmatprep.subr.bf16.mxu0 0
        %966 = vmatpush1.bf16.msra.mxu0 0
        %967 = vmatprep.subr.bf16.mxu0 0
        %968 = vmatpush1.bf16.msra.mxu0 0
        %969 = vmatprep.subr.bf16.mxu0 0
        %970 = vmatpush1.bf16.msra.mxu0 0
        %971 = vmatprep.subr.bf16.mxu0 0
        %972 = vmatpush1.bf16.msra.mxu0 0
        %973 = vmatprep.subr.bf16.mxu0 0
        %974 = vmatpush1.bf16.msra.mxu0 0
        %975 = vmatprep.subr.bf16.mxu0 0
        %976 = vmatpush1.bf16.msra.mxu0 0
        %977 = vmatprep.subr.bf16.mxu0 0
        %978 = vmatpush1.bf16.msra.mxu0 0
        %979 = vmatprep.subr.bf16.mxu0 0
        %980 = vmatpush1.bf16.msra.mxu0 0
        %981 = vmatprep.mubr.bf16.mxu0 0
        %982 = vmatmul.mubr.bf16.gmra.mrb[0].mxu0 %v882
        %v983 = vpop.f32.mrb[0].mxu0
        %v984 = vadd.f32 0.0, %v983
        %v985 = vpop.f32.mrb[0].mxu0
        %v986 = vpop.f32.mrb[0].mxu0
        %v987 = vadd.f32 0.0, %v986
        %v988 = vpop.f32.mrb[0].mxu0
        %989 = vmatprep.mubr.bf16.mxu0 0
        %990 = vmatmul.mubr.bf16.gmra.mrb[0].mxu0 %v883
        %v991 = vpop.f32.mrb[0].mxu0
        %v992 = vadd.f32 0.0, %v991
        %v993 = vpop.f32.mrb[0].mxu0
        %v994 = vpop.f32.mrb[0].mxu0
        %v995 = vadd.f32 0.0, %v994
        %v996 = vpop.f32.mrb[0].mxu0
        %997 = vmatprep.mubr.bf16.mxu0 0
        %998 = vmatmul.mubr.bf16.gmra.mrb[0].mxu0 %v884
        %v999 = vpop.f32.mrb[0].mxu0
        %v1000 = vadd.f32 0.0, %v999
        %v1001 = vpop.f32.mrb[0].mxu0
        %v1002 = vpop.f32.mrb[0].mxu0
        %v1003 = vadd.f32 0.0, %v1002
        %v1004 = vpop.f32.mrb[0].mxu0
        %1005 = vdwg.mxu0
        %v1006 = vadd.f32 %v876, %v984
        %v1007 = vadd.f32 %v877, %v987
        %v1008 = vadd.f32 %v878, %v992
        %v1009 = vadd.f32 %v879, %v995
        %v1010 = vadd.f32 %v880, %v1000
        %v1011 = vadd.f32 %v881, %v1003
        %1012 = vst [vmem:[#allocation2] sm:$0xff] %v1006
        %1013 = vst [vmem:[#allocation2 + $0x8] sm:$0xff] %v1007
        %1014 = vst [vmem:[#allocation2 + $0x10] sm:$0xff] %v1008
        %1015 = vst [vmem:[#allocation2 + $0x18] sm:$0xff] %v1009
        %1016 = vst [vmem:[#allocation2 + $0x20] sm:$0xff] %v1010
        %1017 = vst [vmem:[#allocation2 + $0x28] sm:$0xff] %v1011
        %p1018 = scmp.eq.s32.totalorder %s21, 2
        // Predicated region
        $region127: #{_lambda_.15} parent=113 // pred_check
          %p1019 = pneg %p1018
        $region128: #{_lambda_.15} parent=113 // pred_check_branch
          %1021 = sbr.rel (%p1019) target = $region130
        $region129: #{_lambda_.15} parent=113 // pred_region
          %v1022 = vld [vmem:[#allocation2] sm:$0xff]
          %v1023 = vld [vmem:[#allocation2 + $0x8] sm:$0xff]
          %v1024 = vld [vmem:[#allocation2 + $0x10] sm:$0xff]
          %v1025 = vld [vmem:[#allocation2 + $0x18] sm:$0xff]
          %v1026 = vld [vmem:[#allocation2 + $0x20] sm:$0xff]
          %v1027 = vld [vmem:[#allocation2 + $0x28] sm:$0xff]
          %v1028 = vld [vmem:[%s490] sm:$0xf]
          %v1029 = vld [vmem:[%s490 + $0x4] sm:$0xf]
          %v1030 = vld [vmem:[%s490 + $0x8] sm:$0xf]
          %v1031 = vld [vmem:[%s490 + $0xc] sm:$0xf]
          %v1032 = vld [vmem:[%s490 + $0x10] sm:$0xf]
          %v1033 = vld [vmem:[%s490 + $0x14] sm:$0xf]
          %v1034 = vunpack.c.l.bf16 %v1028
          %v1035 = vunpack.c.l.bf16 %v1029
          %v1036 = vunpack.c.l.bf16 %v1030
          %v1037 = vunpack.c.l.bf16 %v1031
          %v1038 = vunpack.c.l.bf16 %v1032
          %v1039 = vunpack.c.l.bf16 %v1033
          %v1040 = vadd.f32 %v1022, %v1034
          %v1041 = vadd.f32 %v1023, %v1035
          %v1042 = vadd.f32 %v1024, %v1036
          %v1043 = vadd.f32 %v1025, %v1037
          %v1044 = vadd.f32 %v1026, %v1038
          %v1045 = vadd.f32 %v1027, %v1039
          %v1046 = vpack.c.bf16 %v1041, %v1040
          %v1047 = vpack.c.bf16 %v1043, %v1042
          %v1048 = vpack.c.bf16 %v1045, %v1044
          %v1052 = vunpack.c.l.b16 %v1046
          %v1053 = vunpack.c.h.b16 %v1046
          %v1054 = vunpack.c.l.b16 %v1047
          %v1055 = vunpack.c.h.b16 %v1047
          %v1056 = vunpack.c.l.b16 %v1048
          %v1057 = vunpack.c.h.b16 %v1048
          %v1058 = vpack.c.b16 %v1052, %v1052
          %v1059 = vpack.c.b16 %v1053, %v1053
          %v1060 = vpack.c.b16 %v1054, %v1054
          %v1061 = vpack.c.b16 %v1055, %v1055
          %v1062 = vpack.c.b16 %v1056, %v1056
          %v1063 = vpack.c.b16 %v1057, %v1057
          %1070 = vst [vmem:[%s502] sm:$0xf] %v1058
          %1071 = vst [vmem:[%s502 + $0x4] sm:$0xf] %v1059
          %1072 = vst [vmem:[%s502 + $0x8] sm:$0xf] %v1060
          %1073 = vst [vmem:[%s502 + $0xc] sm:$0xf] %v1061
          %1074 = vst [vmem:[%s502 + $0x10] sm:$0xf] %v1062
          %1075 = vst [vmem:[%s502 + $0x14] sm:$0xf] %v1063
        $region130: #{_lambda_.15} parent=113 // pred_fallthru
          _
        %s1076 = smul.u32 6, %s20
        %p1077 = scmp.lt.s32.totalorder %s1076, 5
        %s1078 = scalar_select %p1077, %s1076, 5
        %s1079 = smul.addr %s1078, 4
        %s1080 = scalar_lea.vmem %s5, %s1079
        // Predicated region
        $region131: #{_lambda_.15} parent=113 // pred_check
          %p1081 = pneg %p171
        $region132: #{_lambda_.15} parent=113 // pred_check_branch
          %1083 = sbr.rel (%p1081) target = $region134
        $region133: #{_lambda_.15} parent=113 // pred_region
          %s1084 = smul.u32 6, %s20
        $region134: #{_lambda_.15} parent=113 // pred_fallthru
          _
        // Predicated region
        $region135: #{_lambda_.15} parent=113 // pred_check
          %p1085 = pneg %p171
        $region136: #{_lambda_.15} parent=113 // pred_check_branch
          %1087 = sbr.rel (%p1085) target = $region138
        $region137: #{_lambda_.15} parent=113 // pred_region
          %s1088 = smul.u32 6, %s20
          %p1089 = scmp.lt.s32.totalorder %s1088, 5
          %s1090 = scalar_select %p1089, %s1088, 5
          %s1091 = smul.addr %s1090, 4
          %s1092 = scalar_lea.vmem %s5, %s1091
        $region138: #{_lambda_.15} parent=113 // pred_fallthru
          _
      $region114: #{_lambda_.15} parent=5 // pred_fallthru
        _
      %p1093 = scmp.le.s32.totalorder 2, %s11
      // Predicated region
      $region139: #{_lambda_.15} parent=5 // pred_check
        %p1094 = pneg %p1093
      $region140: #{_lambda_.15} parent=5 // pred_check_branch
        %1096 = sbr.rel (%p1094) target = $region142
      $region141: #{_lambda_.15} parent=5 // pred_region
        %s1097 = ssub.s32 %s11, 2
      $region142: #{_lambda_.15} parent=5 // pred_fallthru
        _
    $region6: #{_lambda_.15} parent=1 // loop_footer
      %s15 = sadd.s32 1, %s11
    $region7: #{_lambda_.15} parent=1 // loop_footer_branch
      %10 = sbr.rel target = $region3
    $region8: #{_lambda_.15} parent=1 // loop_exit
      _

// kernel: _lambda_.21
$region0: #{_lambda_.21}
  #allocation0 [shape = 'u32[]', space=smem, size = 0x4, offset = 0x4, fixed_abs, tag = 'smem constant byte address 0x4 - core index']
  #allocation1 [shape = 'u32[144,128]{1,0:T(1,128)}', space=vmem, size = 0x12000, scoped, tag = 'internal scratch']
  %s0 = inlined_call_operand.vmem [shape: bf16[2,24,128], index: 0, kind: input, shape index: {}]
  %s1 = inlined_call_operand.vmem [shape: f32[2,1,128], index: 1, kind: input, shape index: {}]
  %s2 = inlined_call_operand.vmem [shape: f32[2,1,128], index: 2, kind: input, shape index: {}]
  %s3 = inlined_call_operand.vmem [shape: bf16[128,128], index: 3, kind: input, shape index: {}]
  %s4 = inlined_call_operand.vmem [shape: f32[1,128], index: 4, kind: input, shape index: {}]
  %s5 = inlined_call_operand.vmem [shape: f32[2,24,128], index: 5, kind: output, shape index: {}]
  %s6 = sld [smem:[#allocation0]]
  $region53: #{_lambda_.21} parent=0
    _
  %s8 = ssub.s32 1, %s6
  %s9 = scalar_select 0, %s8, %s6
  loop: start=0, step=1, limit=4
  $region2: #{_lambda_.21} parent=0 // loop_pre_header
    _
  $region3: #{_lambda_.21} parent=0 // loop_header
    %s11 = sphi 0, %s15
    %p12 = scmp.ge.s32.totalorder %s11, 4
    %s18 = sphi 0, %s30
    %s19 = sphi 0, %s26
    %s20 = sphi 0, %s18
    %s21 = sphi 0, %s19
    %s22 = sphi 0, %s20
    %s23 = sphi 0, %s21
    %s35 = sphi 0, %s37
    %s38 = sphi 0, %s35
    %s39 = sphi 0, %s38
    %s55 = sphi 0, %s39
    %s61 = sphi 0, %s63
    %s64 = sphi 0, %s61
    %s65 = sphi 0, %s64
    %s81 = sphi 0, %s65
    %s87 = sphi 0, %s89
    %s90 = sphi 0, %s87
    %s91 = sphi 0, %s90
    %s107 = sphi 0, %s91
    %s111 = sphi 0, %s111
    %s113 = sphi 0, %s111
    %s114 = sphi 0, %s113
    %s128 = sphi 0, %s114
    %s132 = sphi 0, %s132
    %s134 = sphi 0, %s132
    %s135 = sphi 0, %s134
    %s149 = sphi 0, %s135
    %s157 = sphi 0, %s159
    %s160 = sphi 0, %s157
    %s161 = sphi 0, %s160
    %s177 = sphi 0, %s161
  $region4: #{_lambda_.21} parent=0 // loop_header_branch
    %14 = sbr.rel (%p12) target = $region8
  $region5: #{_lambda_.21} parent=0 // loop_body
    %s16 = ssub.s32 %s11, 1
    %s17 = ssub.s32 %s11, 2
    %s24 = sadd.s32 1, %s19
    %p25 = scmp.ge.s32.totalorder %s24, 1
    %s26 = scalar_select %p25, 0, %s24
    %s27 = sadd.s32 1, %s18
    %s28 = scalar_select %p25, %s27, %s18
    %p29 = scmp.ge.s32.totalorder %s28, 2
    %s30 = scalar_select %p29, 0, %s28
    %s31 = ssub.s32 %s18, %s30
    %s32 = ssub.s32 %s19, %s26
    %s33 = sor.u32 %s31, %s32
    %p34 = scmp.eq.s32.totalorder %s33, 0
    %s36 = sadd.s32 %s35, 1
    %s37 = scalar_select %p34, %s35, %s36
    %p40 = pneg %p34
    %p41 = scmp.eq.s32.totalorder %s11, 1
    %p42 = por %p40, %p41
    %p43 = scmp.ne.s32.totalorder %s35, %s38
    %p44 = scmp.eq.s32.totalorder %s11, 0
    %p45 = por %p43, %p44
    %p46 = scmp.ne.s32.totalorder %s35, %s38
    %p47 = scmp.eq.s32.totalorder %s16, 1
    %p48 = por %p46, %p47
    %p49 = scmp.ne.s32.totalorder %s38, %s39
    %p50 = scmp.eq.s32.totalorder %s16, 0
    %p51 = por %p49, %p50
    %p52 = scmp.ne.s32.totalorder %s38, %s39
    %p53 = scmp.eq.s32.totalorder %s17, 1
    %p54 = por %p52, %p53
    %p56 = scmp.ne.s32.totalorder %s39, %s55
    %p57 = scmp.eq.s32.totalorder %s17, 0
    %p58 = por %p56, %p57
    %s59 = ssub.s32 %s18, %s30
    %p60 = scmp.eq.s32.totalorder %s59, 0
    %s62 = sadd.s32 %s61, 1
    %s63 = scalar_select %p60, %s61, %s62
    %p66 = pneg %p60
    %p67 = scmp.eq.s32.totalorder %s11, 1
    %p68 = por %p66, %p67
    %p69 = scmp.ne.s32.totalorder %s61, %s64
    %p70 = scmp.eq.s32.totalorder %s11, 0
    %p71 = por %p69, %p70
    %p72 = scmp.ne.s32.totalorder %s61, %s64
    %p73 = scmp.eq.s32.totalorder %s16, 1
    %p74 = por %p72, %p73
    %p75 = scmp.ne.s32.totalorder %s64, %s65
    %p76 = scmp.eq.s32.totalorder %s16, 0
    %p77 = por %p75, %p76
    %p78 = scmp.ne.s32.totalorder %s64, %s65
    %p79 = scmp.eq.s32.totalorder %s17, 1
    %p80 = por %p78, %p79
    %p82 = scmp.ne.s32.totalorder %s65, %s81
    %p83 = scmp.eq.s32.totalorder %s17, 0
    %p84 = por %p82, %p83
    %s85 = ssub.s32 %s18, %s30
    %p86 = scmp.eq.s32.totalorder %s85, 0
    %s88 = sadd.s32 %s87, 1
    %s89 = scalar_select %p86, %s87, %s88
    %p92 = pneg %p86
    %p93 = scmp.eq.s32.totalorder %s11, 1
    %p94 = por %p92, %p93
    %p95 = scmp.ne.s32.totalorder %s87, %s90
    %p96 = scmp.eq.s32.totalorder %s11, 0
    %p97 = por %p95, %p96
    %p98 = scmp.ne.s32.totalorder %s87, %s90
    %p99 = scmp.eq.s32.totalorder %s16, 1
    %p100 = por %p98, %p99
    %p101 = scmp.ne.s32.totalorder %s90, %s91
    %p102 = scmp.eq.s32.totalorder %s16, 0
    %p103 = por %p101, %p102
    %p104 = scmp.ne.s32.totalorder %s90, %s91
    %p105 = scmp.eq.s32.totalorder %s17, 1
    %p106 = por %p104, %p105
    %p108 = scmp.ne.s32.totalorder %s91, %s107
    %p109 = scmp.eq.s32.totalorder %s17, 0
    %p110 = por %p108, %p109
    %s112 = sadd.s32 %s111, 1
    %p115 = scmp.eq.s32.totalorder %s11, 1
    %p116 = scmp.ne.s32.totalorder %s111, %s113
    %p117 = scmp.eq.s32.totalorder %s11, 0
    %p118 = por %p116, %p117
    %p119 = scmp.ne.s32.totalorder %s111, %s113
    %p120 = scmp.eq.s32.totalorder %s16, 1
    %p121 = por %p119, %p120
    %p122 = scmp.ne.s32.totalorder %s113, %s114
    %p123 = scmp.eq.s32.totalorder %s16, 0
    %p124 = por %p122, %p123
    %p125 = scmp.ne.s32.totalorder %s113, %s114
    %p126 = scmp.eq.s32.totalorder %s17, 1
    %p127 = por %p125, %p126
    %p129 = scmp.ne.s32.totalorder %s114, %s128
    %p130 = scmp.eq.s32.totalorder %s17, 0
    %p131 = por %p129, %p130
    %s133 = sadd.s32 %s132, 1
    %p136 = scmp.eq.s32.totalorder %s11, 1
    %p137 = scmp.ne.s32.totalorder %s132, %s134
    %p138 = scmp.eq.s32.totalorder %s11, 0
    %p139 = por %p137, %p138
    %p140 = scmp.ne.s32.totalorder %s132, %s134
    %p141 = scmp.eq.s32.totalorder %s16, 1
    %p142 = por %p140, %p141
    %p143 = scmp.ne.s32.totalorder %s134, %s135
    %p144 = scmp.eq.s32.totalorder %s16, 0
    %p145 = por %p143, %p144
    %p146 = scmp.ne.s32.totalorder %s134, %s135
    %p147 = scmp.eq.s32.totalorder %s17, 1
    %p148 = por %p146, %p147
    %p150 = scmp.ne.s32.totalorder %s135, %s149
    %p151 = scmp.eq.s32.totalorder %s17, 0
    %p152 = por %p150, %p151
    %s153 = ssub.s32 %s18, %s30
    %s154 = ssub.s32 %s19, %s26
    %s155 = sor.u32 %s153, %s154
    %p156 = scmp.eq.s32.totalorder %s155, 0
    %s158 = sadd.s32 %s157, 1
    %s159 = scalar_select %p156, %s157, %s158
    %p162 = pneg %p156
    %p163 = scmp.eq.s32.totalorder %s11, 1
    %p164 = por %p162, %p163
    %p165 = scmp.ne.s32.totalorder %s157, %s160
    %p166 = scmp.eq.s32.totalorder %s11, 0
    %p167 = por %p165, %p166
    %p168 = scmp.ne.s32.totalorder %s157, %s160
    %p169 = scmp.eq.s32.totalorder %s16, 1
    %p170 = por %p168, %p169
    %p171 = scmp.ne.s32.totalorder %s160, %s161
    %p172 = scmp.eq.s32.totalorder %s16, 0
    %p173 = por %p171, %p172
    %p174 = scmp.ne.s32.totalorder %s160, %s161
    %p175 = scmp.eq.s32.totalorder %s17, 1
    %p176 = por %p174, %p175
    %p178 = scmp.ne.s32.totalorder %s161, %s177
    %p179 = scmp.eq.s32.totalorder %s17, 0
    %p180 = por %p178, %p179
    %p181 = scmp.le.s32.totalorder 1, %s11
    %p182 = scmp.lt.s32.totalorder %s11, 3
    %p183 = pnand %p181, %p182
    %p184 = pneg %p183
    // Predicated region
    $region9: #{_lambda_.21} parent=5 // pred_check
      _
    $region10: #{_lambda_.21} parent=5 // pred_check_branch
      %186 = sbr.rel (%p183) target = $region12
    $region11: #{_lambda_.21} parent=5 // pred_region
      %s187 = ssub.s32 %s11, 1
      // Predicated region
      $region13: #{_lambda_.21} parent=11 // pred_check
        %p188 = pneg %p124
      $region14: #{_lambda_.21} parent=11 // pred_check_branch
        %190 = sbr.rel (%p188) target = $region16
      $region15: #{_lambda_.21} parent=11 // pred_region
        _
      $region16: #{_lambda_.21} parent=11 // pred_fallthru
        _
      // Predicated region
      $region17: #{_lambda_.21} parent=11 // pred_check
        %p191 = pneg %p145
      $region18: #{_lambda_.21} parent=11 // pred_check_branch
        %193 = sbr.rel (%p191) target = $region20
      $region19: #{_lambda_.21} parent=11 // pred_region
        _
      $region20: #{_lambda_.21} parent=11 // pred_fallthru
        _
    $region12: #{_lambda_.21} parent=5 // pred_fallthru
      _
    %p194 = scmp.lt.s32.totalorder %s11, 2
    // Predicated region
    $region21: #{_lambda_.21} parent=5 // pred_check
      %p195 = pneg %p194
    $region22: #{_lambda_.21} parent=5 // pred_check_branch
      %197 = sbr.rel (%p195) target = $region24
    $region23: #{_lambda_.21} parent=5 // pred_region
      // Predicated region
      $region25: #{_lambda_.21} parent=23 // pred_check
        %p198 = pneg %p45
      $region26: #{_lambda_.21} parent=23 // pred_check_branch
        %200 = sbr.rel (%p198) target = $region28
      $region27: #{_lambda_.21} parent=23 // pred_region
        %s201 = smul.u32 3, %s19
        %p202 = scmp.lt.s32.totalorder %s18, 1
        %s203 = scalar_select %p202, %s18, 1
        %p204 = scmp.lt.s32.totalorder %s201, 2
        %s205 = scalar_select %p204, %s201, 2
        %s206 = smul.addr %s203, 3
        %s207 = sadd.s32 %s205, %s206
        %s208 = smul.addr %s207, 4
        %s209 = scalar_lea.vmem %s0, %s208
        %s210 = smul.u32 3, %s19
      $region28: #{_lambda_.21} parent=23 // pred_fallthru
        _
      // Predicated region
      $region29: #{_lambda_.21} parent=23 // pred_check
        %p211 = pneg %p71
      $region30: #{_lambda_.21} parent=23 // pred_check_branch
        %213 = sbr.rel (%p211) target = $region32
      $region31: #{_lambda_.21} parent=23 // pred_region
        %p214 = scmp.lt.s32.totalorder %s18, 1
        %s215 = scalar_select %p214, %s18, 1
        %s216 = scalar_lea.vmem %s1, %s215
      $region32: #{_lambda_.21} parent=23 // pred_fallthru
        _
      // Predicated region
      $region33: #{_lambda_.21} parent=23 // pred_check
        %p217 = pneg %p97
      $region34: #{_lambda_.21} parent=23 // pred_check_branch
        %219 = sbr.rel (%p217) target = $region36
      $region35: #{_lambda_.21} parent=23 // pred_region
        %p220 = scmp.lt.s32.totalorder %s18, 1
        %s221 = scalar_select %p220, %s18, 1
        %s222 = scalar_lea.vmem %s2, %s221
      $region36: #{_lambda_.21} parent=23 // pred_fallthru
        _
    $region24: #{_lambda_.21} parent=5 // pred_fallthru
      _
    %p223 = scmp.le.s32.totalorder 1, %s11
    %p224 = scmp.lt.s32.totalorder %s11, 3
    %p225 = pnand %p223, %p224
    %p226 = pneg %p225
    // Predicated region
    $region37: #{_lambda_.21} parent=5 // pred_check
      _
    $region38: #{_lambda_.21} parent=5 // pred_check_branch
      %228 = sbr.rel (%p225) target = $region40
    $region39: #{_lambda_.21} parent=5 // pred_region
      %s229 = ssub.s32 %s11, 1
      %s230 = smul.u32 3, %s21
      %p231 = scmp.lt.s32.totalorder %s20, 1
      %s232 = scalar_select %p231, %s20, 1
      %p233 = scmp.lt.s32.totalorder %s230, 2
      %s234 = scalar_select %p233, %s230, 2
      %s235 = smul.addr %s232, 3
      %s236 = sadd.s32 %s234, %s235
      %s237 = smul.addr %s236, 4
      %s238 = scalar_lea.vmem %s0, %s237
      %p239 = pneg %p51
      %p240 = pneg %p48
      %p241 = scmp.lt.s32.totalorder %s20, 1
      %s242 = scalar_select %p241, %s20, 1
      %s243 = scalar_lea.vmem %s1, %s242
      %p244 = pneg %p77
      %p245 = pneg %p74
      %p246 = scmp.lt.s32.totalorder %s20, 1
      %s247 = scalar_select %p246, %s20, 1
      %s248 = scalar_lea.vmem %s2, %s247
      %p249 = pneg %p103
      %p250 = pneg %p100
      %p251 = pneg %p124
      %p252 = pneg %p121
      %p253 = pneg %p145
      %p254 = pneg %p142
      %p255 = pneg %p173
      %p256 = pneg %p170
      %s257 = smul.u32 3, %s21
      %p258 = scmp.lt.s32.totalorder %s20, 1
      %s259 = scalar_select %p258, %s20, 1
      %p260 = scmp.lt.s32.totalorder %s257, 2
      %s261 = scalar_select %p260, %s257, 2
      %s262 = smul.addr %s259, 3
      %s263 = sadd.s32 %s261, %s262
      %s264 = smul.addr %s263, 8
      %s265 = scalar_lea.vmem %s5, %s264
      %s266 = smul.u32 3, %s21
      %p267 = scmp.lt.s32.totalorder %s20, 1
      %s268 = scalar_select %p267, %s20, 1
      %p269 = scmp.lt.s32.totalorder %s266, 2
      %s270 = scalar_select %p269, %s266, 2
      %s271 = smul.addr %s268, 3
      %s272 = sadd.s32 %s270, %s271
      %s273 = smul.addr %s272, 4
      %s274 = scalar_lea.vmem %s0, %s273
      %s275 = smul.u32 3, %s21
      %p276 = scmp.lt.s32.totalorder %s20, 1
      %s277 = scalar_select %p276, %s20, 1
      %s278 = scalar_lea.vmem %s1, %s277
      %p279 = scmp.lt.s32.totalorder %s20, 1
      %s280 = scalar_select %p279, %s20, 1
      %s281 = scalar_lea.vmem %s2, %s280
      %s282 = smul.u32 3, %s21
      %p283 = scmp.lt.s32.totalorder %s20, 1
      %s284 = scalar_select %p283, %s20, 1
      %p285 = scmp.lt.s32.totalorder %s282, 2
      %s286 = scalar_select %p285, %s282, 2
      %s287 = smul.addr %s284, 3
      %s288 = sadd.s32 %s286, %s287
      %s289 = smul.addr %s288, 8
      %s290 = scalar_lea.vmem %s5, %s289
      %s291 = smul.u32 3, %s21
      %v293 = vld [vmem:[%s274] sm:$0xf]
      %v294 = vld [vmem:[%s274 + $0x4] sm:$0xf]
      %v295 = vld [vmem:[%s274 + $0x8] sm:$0xf]
      %v296 = vunpack.c.l.bf16 %v293
      %v297 = vunpack.c.l.bf16 %v294
      %v298 = vunpack.c.l.bf16 %v295
      %299 = vadd.xlane.f32.xlu0 %v296
      %v300 = vpop.xlane.xlu0 %299
      %301 = vadd.xlane.f32.xlu0 %v297
      %v302 = vpop.xlane.xlu0 %301
      %303 = vadd.xlane.f32.xlu0 %v298
      %v304 = vpop.xlane.xlu0 %303
      %v305 = vrcp.pop 128.0
      %v306 = vmul.f32 %v300, %v305
      %v307 = vmul.f32 %v302, %v305
      %v308 = vmul.f32 %v304, %v305
      %v309 = vsub.f32 %v296, %v306
      %v310 = vsub.f32 %v297, %v307
      %v311 = vsub.f32 %v298, %v308
      %v312 = vmul.f32 %v309, %v309
      %v313 = vmul.f32 %v310, %v310
      %v314 = vmul.f32 %v311, %v311
      %315 = vadd.xlane.f32.xlu0 %v312
      %v316 = vpop.xlane.xlu0 %315
      %317 = vadd.xlane.f32.xlu0 %v313
      %v318 = vpop.xlane.xlu0 %317
      %319 = vadd.xlane.f32.xlu0 %v314
      %v320 = vpop.xlane.xlu0 %319
      %v321 = vmul.f32 %v316, %v305
      %v322 = vmul.f32 %v318, %v305
      %v323 = vmul.f32 %v320, %v305
      %v324 = vadd.f32 %v321, 1e-06
      %v325 = vadd.f32 %v322, 1e-06
      %v326 = vadd.f32 %v323, 1e-06
      %v327 = vrsqrt.pop %v324
      %v328 = vrsqrt.pop %v325
      %v329 = vrsqrt.pop %v326
      %v330 = vmul.f32 %v309, %v327
      %v331 = vmul.f32 %v310, %v328
      %v332 = vmul.f32 %v311, %v329
      %v333 = vld [vmem:[%s281] sm:$0x1]
      %v334 = vadd.f32 %v333, 1.0
      %v336 = vlaneseq
      %v337 = vshrl.u32 %v336, 7
      %v338 = vsub.s32 0, %v337
      %v339 = vrot.slane %v334, %v338
      %v341 = vmul.f32 %v330, %v339
      %v342 = vmul.f32 %v331, %v339
      %v343 = vmul.f32 %v332, %v339
      %v344 = vld [vmem:[%s278] sm:$0x1]
      %v346 = vlaneseq
      %v347 = vshrl.u32 %v346, 7
      %v348 = vsub.s32 0, %v347
      %v349 = vrot.slane %v344, %v348
      %v351 = vadd.f32 %v341, %v349
      %v352 = vadd.f32 %v342, %v349
      %v353 = vadd.f32 %v343, %v349
      %v354 = vpack.c.bf16 %v352, %v351
      %v355 = vpack.c.bf16 %v353, %v353
      %v356 = vld [vmem:[%s3] sm:$0xf]
      %v357 = vld [vmem:[%s3 + $0x4] sm:$0xf]
      %v358 = vld [vmem:[%s3 + $0x8] sm:$0xf]
      %v359 = vld [vmem:[%s3 + $0xc] sm:$0xf]
      %v360 = vld [vmem:[%s3 + $0x10] sm:$0xf]
      %v361 = vld [vmem:[%s3 + $0x14] sm:$0xf]
      %v362 = vld [vmem:[%s3 + $0x18] sm:$0xf]
      %v363 = vld [vmem:[%s3 + $0x1c] sm:$0xf]
      %v364 = vld [vmem:[%s3 + $0x20] sm:$0xf]
      %v365 = vld [vmem:[%s3 + $0x24] sm:$0xf]
      %v366 = vld [vmem:[%s3 + $0x28] sm:$0xf]
      %v367 = vld [vmem:[%s3 + $0x2c] sm:$0xf]
      %v368 = vld [vmem:[%s3 + $0x30] sm:$0xf]
      %v369 = vld [vmem:[%s3 + $0x34] sm:$0xf]
      %v370 = vld [vmem:[%s3 + $0x38] sm:$0xf]
      %v371 = vld [vmem:[%s3 + $0x3c] sm:$0xf]
      %v372 = vld [vmem:[%s4] sm:$0x1]
      %v374 = vlaneseq
      %v375 = vshrl.u32 %v374, 7
      %v376 = vsub.s32 0, %v375
      %v377 = vrot.slane %v372, %v376
      %v395 = vunpack.c.l.b16 %v356
      %v396 = vunpack.c.l.b16 %v357
      %v397 = vunpack.c.l.b16 %v358
      %v398 = vunpack.c.l.b16 %v359
      %v399 = vunpack.c.l.b16 %v360
      %v400 = vunpack.c.l.b16 %v361
      %v401 = vunpack.c.l.b16 %v362
      %v402 = vunpack.c.l.b16 %v363
      %v403 = vunpack.c.l.b16 %v364
      %v404 = vunpack.c.l.b16 %v365
      %v405 = vunpack.c.l.b16 %v366
      %v406 = vunpack.c.l.b16 %v367
      %v407 = vunpack.c.l.b16 %v368
      %v408 = vunpack.c.l.b16 %v369
      %v409 = vunpack.c.l.b16 %v370
      %v410 = vunpack.c.l.b16 %v371
      %v411 = vpack.c.b16 %v396, %v395
      %v412 = vpack.c.b16 %v398, %v397
      %v413 = vpack.c.b16 %v400, %v399
      %v414 = vpack.c.b16 %v402, %v401
      %v415 = vpack.c.b16 %v404, %v403
      %v416 = vpack.c.b16 %v406, %v405
      %v417 = vpack.c.b16 %v408, %v407
      %v418 = vpack.c.b16 %v410, %v409
      %427 = vmatprep.subr.bf16.mxu0 0
      %428 = vmatpush1.bf16.msra.mxu0 %v411
      %429 = vmatprep.subr.bf16.mxu0 0
      %430 = vmatpush1.bf16.msra.mxu0 %v412
      %431 = vmatprep.subr.bf16.mxu0 0
      %432 = vmatpush1.bf16.msra.mxu0 %v413
      %433 = vmatprep.subr.bf16.mxu0 0
      %434 = vmatpush1.bf16.msra.mxu0 %v414
      %435 = vmatprep.subr.bf16.mxu0 0
      %436 = vmatpush1.bf16.msra.mxu0 %v415
      %437 = vmatprep.subr.bf16.mxu0 0
      %438 = vmatpush1.bf16.msra.mxu0 %v416
      %439 = vmatprep.subr.bf16.mxu0 0
      %440 = vmatpush1.bf16.msra.mxu0 %v417
      %441 = vmatprep.subr.bf16.mxu0 0
      %442 = vmatpush1.bf16.msra.mxu0 %v418
      %443 = vmatprep.subr.bf16.mxu0 0
      %444 = vmatpush1.bf16.msra.mxu0 0
      %445 = vmatprep.subr.bf16.mxu0 0
      %446 = vmatpush1.bf16.msra.mxu0 0
      %447 = vmatprep.subr.bf16.mxu0 0
      %448 = vmatpush1.bf16.msra.mxu0 0
      %449 = vmatprep.subr.bf16.mxu0 0
      %450 = vmatpush1.bf16.msra.mxu0 0
      %451 = vmatprep.subr.bf16.mxu0 0
      %452 = vmatpush1.bf16.msra.mxu0 0
      %453 = vmatprep.subr.bf16.mxu0 0
      %454 = vmatpush1.bf16.msra.mxu0 0
      %455 = vmatprep.subr.bf16.mxu0 0
      %456 = vmatpush1.bf16.msra.mxu0 0
      %457 = vmatprep.subr.bf16.mxu0 0
      %458 = vmatpush1.bf16.msra.mxu0 0
      %459 = vmatprep.mubr.bf16.mxu0 0
      %460 = vmatmul.mubr.bf16.gmra.mrb[0].mxu0 %v354
      %v461 = vpop.f32.mrb[0].mxu0
      %v462 = vadd.f32 %v377, %v461
      %v463 = vpop.f32.mrb[0].mxu0
      %v464 = vpop.f32.mrb[0].mxu0
      %v465 = vadd.f32 %v377, %v464
      %v466 = vpop.f32.mrb[0].mxu0
      %467 = vmatprep.mubr.bf16.mxu0 0
      %468 = vmatmul.mubr.bf16.gmra.mrb[0].mxu0 %v355
      %v469 = vpop.f32.mrb[0].mxu0
      %v470 = vadd.f32 %v377, %v469
      %v471 = vpop.f32.mrb[0].mxu0
      %v472 = vpop.f32.mrb[0].mxu0
      %v473 = vpop.f32.mrb[0].mxu0
      %474 = vdwg.mxu0
      %475 = vst [vmem:[%s290] sm:$0xff] %v462
      %476 = vst [vmem:[%s290 + $0x8] sm:$0xff] %v465
      %477 = vst [vmem:[%s290 + $0x10] sm:$0xff] %v470
      %s478 = smul.u32 3, %s21
      %p479 = scmp.lt.s32.totalorder %s20, 1
      %s480 = scalar_select %p479, %s20, 1
      %p481 = scmp.lt.s32.totalorder %s478, 2
      %s482 = scalar_select %p481, %s478, 2
      %s483 = smul.addr %s480, 3
      %s484 = sadd.s32 %s482, %s483
      %s485 = smul.addr %s484, 8
      %s486 = scalar_lea.vmem %s5, %s485
      // Predicated region
      $region41: #{_lambda_.21} parent=39 // pred_check
        %p487 = pneg %p170
      $region42: #{_lambda_.21} parent=39 // pred_check_branch
        %489 = sbr.rel (%p487) target = $region44
      $region43: #{_lambda_.21} parent=39 // pred_region
        %s490 = smul.u32 3, %s21
      $region44: #{_lambda_.21} parent=39 // pred_fallthru
        _
    $region40: #{_lambda_.21} parent=5 // pred_fallthru
      _
    %p491 = scmp.le.s32.totalorder 2, %s11
    // Predicated region
    $region45: #{_lambda_.21} parent=5 // pred_check
      %p492 = pneg %p491
    $region46: #{_lambda_.21} parent=5 // pred_check_branch
      %494 = sbr.rel (%p492) target = $region48
    $region47: #{_lambda_.21} parent=5 // pred_region
      %s495 = ssub.s32 %s11, 2
      // Predicated region
      $region49: #{_lambda_.21} parent=47 // pred_check
        %p496 = pneg %p176
      $region50: #{_lambda_.21} parent=47 // pred_check_branch
        %498 = sbr.rel (%p496) target = $region52
      $region51: #{_lambda_.21} parent=47 // pred_region
        %s499 = smul.u32 3, %s23
        %p500 = scmp.lt.s32.totalorder %s22, 1
        %s501 = scalar_select %p500, %s22, 1
        %p502 = scmp.lt.s32.totalorder %s499, 2
        %s503 = scalar_select %p502, %s499, 2
        %s504 = smul.addr %s501, 3
        %s505 = sadd.s32 %s503, %s504
        %s506 = smul.addr %s505, 8
        %s507 = scalar_lea.vmem %s5, %s506
      $region52: #{_lambda_.21} parent=47 // pred_fallthru
        _
    $region48: #{_lambda_.21} parent=5 // pred_fallthru
      _
  $region6: #{_lambda_.21} parent=0 // loop_footer
    %s15 = sadd.s32 1, %s11
  $region7: #{_lambda_.21} parent=0 // loop_footer_branch
    %10 = sbr.rel target = $region3
  $region8: #{_lambda_.21} parent=0 // loop_exit
    _

// kernel: _lambda_.20
$region0: #{_lambda_.20}
  #allocation0 [shape = 'u32[]', space=smem, size = 0x4, offset = 0x4, fixed_abs, tag = 'smem constant byte address 0x4 - core index']
  #allocation1 [shape = 'u32[144,128]{1,0:T(1,128)}', space=vmem, size = 0x12000, scoped, tag = 'internal scratch']
  %s0 = inlined_call_operand.vmem [shape: bf16[48,128], index: 0, kind: input, shape index: {}]
  %s1 = inlined_call_operand.vmem [shape: f32[1,128], index: 1, kind: input, shape index: {}]
  %s2 = inlined_call_operand.vmem [shape: bf16[128,128], index: 2, kind: input, shape index: {}]
  %s3 = inlined_call_operand.vmem [shape: f32[48,128], index: 3, kind: output, shape index: {}]
  %s4 = sld [smem:[#allocation0]]
  $region22: #{_lambda_.20} parent=0
    _
  %s6 = ssub.s32 1, %s4
  %s7 = scalar_select 0, %s6, %s4
  // Predicated region
  $region2: #{_lambda_.20} parent=0 // pred_check
    _
  $region3: #{_lambda_.20} parent=0 // pred_check_branch
    %9 = sbr.rel (0) target = $region5
  $region4: #{_lambda_.20} parent=0 // pred_region
    _
  $region5: #{_lambda_.20} parent=0 // pred_fallthru
    _
  // Predicated region
  $region6: #{_lambda_.20} parent=0 // pred_check
    _
  $region7: #{_lambda_.20} parent=0 // pred_check_branch
    %11 = sbr.rel (0) target = $region9
  $region8: #{_lambda_.20} parent=0 // pred_region
    _
  $region9: #{_lambda_.20} parent=0 // pred_fallthru
    _
  // Predicated region
  $region10: #{_lambda_.20} parent=0 // pred_check
    _
  $region11: #{_lambda_.20} parent=0 // pred_check_branch
    %13 = sbr.rel (0) target = $region13
  $region12: #{_lambda_.20} parent=0 // pred_region
    _
  $region13: #{_lambda_.20} parent=0 // pred_fallthru
    _
  %v15 = vld [vmem:[%s0] sm:$0xf]
  %v16 = vld [vmem:[%s0 + $0x4] sm:$0xf]
  %v17 = vld [vmem:[%s0 + $0x8] sm:$0xf]
  %v18 = vld [vmem:[%s0 + $0xc] sm:$0xf]
  %v19 = vld [vmem:[%s0 + $0x10] sm:$0xf]
  %v20 = vld [vmem:[%s0 + $0x14] sm:$0xf]
  %v21 = vunpack.c.l.bf16 %v15
  %v22 = vunpack.c.l.bf16 %v16
  %v23 = vunpack.c.l.bf16 %v17
  %v24 = vunpack.c.l.bf16 %v18
  %v25 = vunpack.c.l.bf16 %v19
  %v26 = vunpack.c.l.bf16 %v20
  %v27 = vmul.f32 %v21, %v21
  %v28 = vmul.f32 %v22, %v22
  %v29 = vmul.f32 %v23, %v23
  %v30 = vmul.f32 %v24, %v24
  %v31 = vmul.f32 %v25, %v25
  %v32 = vmul.f32 %v26, %v26
  %33 = vadd.xlane.f32.xlu0 %v27
  %v34 = vpop.xlane.xlu0 %33
  %35 = vadd.xlane.f32.xlu0 %v28
  %v36 = vpop.xlane.xlu0 %35
  %37 = vadd.xlane.f32.xlu0 %v29
  %v38 = vpop.xlane.xlu0 %37
  %39 = vadd.xlane.f32.xlu0 %v30
  %v40 = vpop.xlane.xlu0 %39
  %41 = vadd.xlane.f32.xlu0 %v31
  %v42 = vpop.xlane.xlu0 %41
  %43 = vadd.xlane.f32.xlu0 %v32
  %v44 = vpop.xlane.xlu0 %43
  %v45 = vrcp.pop 128.0
  %v46 = vmul.f32 %v34, %v45
  %v47 = vmul.f32 %v36, %v45
  %v48 = vmul.f32 %v38, %v45
  %v49 = vmul.f32 %v40, %v45
  %v50 = vmul.f32 %v42, %v45
  %v51 = vmul.f32 %v44, %v45
  %v52 = vadd.f32 %v46, 1e-05
  %v53 = vadd.f32 %v47, 1e-05
  %v54 = vadd.f32 %v48, 1e-05
  %v55 = vadd.f32 %v49, 1e-05
  %v56 = vadd.f32 %v50, 1e-05
  %v57 = vadd.f32 %v51, 1e-05
  %v58 = vrsqrt.pop %v52
  %v59 = vrsqrt.pop %v53
  %v60 = vrsqrt.pop %v54
  %v61 = vrsqrt.pop %v55
  %v62 = vrsqrt.pop %v56
  %v63 = vrsqrt.pop %v57
  %v64 = vmul.f32 %v21, %v58
  %v65 = vmul.f32 %v22, %v59
  %v66 = vmul.f32 %v23, %v60
  %v67 = vmul.f32 %v24, %v61
  %v68 = vmul.f32 %v25, %v62
  %v69 = vmul.f32 %v26, %v63
  %v70 = vld [vmem:[%s1] sm:$0x1]
  %v72 = vlaneseq
  %v73 = vshrl.u32 %v72, 7
  %v74 = vsub.s32 0, %v73
  %v75 = vrot.slane %v70, %v74
  %v77 = vmul.f32 %v64, %v75
  %v78 = vmul.f32 %v65, %v75
  %v79 = vmul.f32 %v66, %v75
  %v80 = vmul.f32 %v67, %v75
  %v81 = vmul.f32 %v68, %v75
  %v82 = vmul.f32 %v69, %v75
  %v83 = vpack.c.bf16 %v78, %v77
  %v84 = vpack.c.bf16 %v80, %v79
  %v85 = vpack.c.bf16 %v82, %v81
  %v86 = vld [vmem:[%s2] sm:$0xf]
  %v87 = vld [vmem:[%s2 + $0x4] sm:$0xf]
  %v88 = vld [vmem:[%s2 + $0x8] sm:$0xf]
  %v89 = vld [vmem:[%s2 + $0xc] sm:$0xf]
  %v90 = vld [vmem:[%s2 + $0x10] sm:$0xf]
  %v91 = vld [vmem:[%s2 + $0x14] sm:$0xf]
  %v92 = vld [vmem:[%s2 + $0x18] sm:$0xf]
  %v93 = vld [vmem:[%s2 + $0x1c] sm:$0xf]
  %v94 = vld [vmem:[%s2 + $0x20] sm:$0xf]
  %v95 = vld [vmem:[%s2 + $0x24] sm:$0xf]
  %v96 = vld [vmem:[%s2 + $0x28] sm:$0xf]
  %v97 = vld [vmem:[%s2 + $0x2c] sm:$0xf]
  %v98 = vld [vmem:[%s2 + $0x30] sm:$0xf]
  %v99 = vld [vmem:[%s2 + $0x34] sm:$0xf]
  %v100 = vld [vmem:[%s2 + $0x38] sm:$0xf]
  %v101 = vld [vmem:[%s2 + $0x3c] sm:$0xf]
  %v118 = vunpack.c.l.b16 %v86
  %v119 = vunpack.c.l.b16 %v87
  %v120 = vunpack.c.l.b16 %v88
  %v121 = vunpack.c.l.b16 %v89
  %v122 = vunpack.c.l.b16 %v90
  %v123 = vunpack.c.l.b16 %v91
  %v124 = vunpack.c.l.b16 %v92
  %v125 = vunpack.c.l.b16 %v93
  %v126 = vunpack.c.l.b16 %v94
  %v127 = vunpack.c.l.b16 %v95
  %v128 = vunpack.c.l.b16 %v96
  %v129 = vunpack.c.l.b16 %v97
  %v130 = vunpack.c.l.b16 %v98
  %v131 = vunpack.c.l.b16 %v99
  %v132 = vunpack.c.l.b16 %v100
  %v133 = vunpack.c.l.b16 %v101
  %v134 = vpack.c.b16 %v119, %v118
  %v135 = vpack.c.b16 %v121, %v120
  %v136 = vpack.c.b16 %v123, %v122
  %v137 = vpack.c.b16 %v125, %v124
  %v138 = vpack.c.b16 %v127, %v126
  %v139 = vpack.c.b16 %v129, %v128
  %v140 = vpack.c.b16 %v131, %v130
  %v141 = vpack.c.b16 %v133, %v132
  %150 = vmatprep.subr.bf16.mxu0 0
  %151 = vmatpush1.bf16.msra.mxu0 %v134
  %152 = vmatprep.subr.bf16.mxu0 0
  %153 = vmatpush1.bf16.msra.mxu0 %v135
  %154 = vmatprep.subr.bf16.mxu0 0
  %155 = vmatpush1.bf16.msra.mxu0 %v136
  %156 = vmatprep.subr.bf16.mxu0 0
  %157 = vmatpush1.bf16.msra.mxu0 %v137
  %158 = vmatprep.subr.bf16.mxu0 0
  %159 = vmatpush1.bf16.msra.mxu0 %v138
  %160 = vmatprep.subr.bf16.mxu0 0
  %161 = vmatpush1.bf16.msra.mxu0 %v139
  %162 = vmatprep.subr.bf16.mxu0 0
  %163 = vmatpush1.bf16.msra.mxu0 %v140
  %164 = vmatprep.subr.bf16.mxu0 0
  %165 = vmatpush1.bf16.msra.mxu0 %v141
  %166 = vmatprep.subr.bf16.mxu0 0
  %167 = vmatpush1.bf16.msra.mxu0 0
  %168 = vmatprep.subr.bf16.mxu0 0
  %169 = vmatpush1.bf16.msra.mxu0 0
  %170 = vmatprep.subr.bf16.mxu0 0
  %171 = vmatpush1.bf16.msra.mxu0 0
  %172 = vmatprep.subr.bf16.mxu0 0
  %173 = vmatpush1.bf16.msra.mxu0 0
  %174 = vmatprep.subr.bf16.mxu0 0
  %175 = vmatpush1.bf16.msra.mxu0 0
  %176 = vmatprep.subr.bf16.mxu0 0
  %177 = vmatpush1.bf16.msra.mxu0 0
  %178 = vmatprep.subr.bf16.mxu0 0
  %179 = vmatpush1.bf16.msra.mxu0 0
  %180 = vmatprep.subr.bf16.mxu0 0
  %181 = vmatpush1.bf16.msra.mxu0 0
  %182 = vmatprep.mubr.bf16.mxu0 0
  %183 = vmatmul.mubr.bf16.gmra.mrb[0].mxu0 %v83
  %v184 = vpop.f32.mrb[0].mxu0
  %v185 = vadd.f32 0.0, %v184
  %v186 = vpop.f32.mrb[0].mxu0
  %v187 = vpop.f32.mrb[0].mxu0
  %v188 = vadd.f32 0.0, %v187
  %v189 = vpop.f32.mrb[0].mxu0
  %190 = vmatprep.mubr.bf16.mxu0 0
  %191 = vmatmul.mubr.bf16.gmra.mrb[0].mxu0 %v84
  %v192 = vpop.f32.mrb[0].mxu0
  %v193 = vadd.f32 0.0, %v192
  %v194 = vpop.f32.mrb[0].mxu0
  %v195 = vpop.f32.mrb[0].mxu0
  %v196 = vadd.f32 0.0, %v195
  %v197 = vpop.f32.mrb[0].mxu0
  %198 = vmatprep.mubr.bf16.mxu0 0
  %199 = vmatmul.mubr.bf16.gmra.mrb[0].mxu0 %v85
  %v200 = vpop.f32.mrb[0].mxu0
  %v201 = vadd.f32 0.0, %v200
  %v202 = vpop.f32.mrb[0].mxu0
  %v203 = vpop.f32.mrb[0].mxu0
  %v204 = vadd.f32 0.0, %v203
  %v205 = vpop.f32.mrb[0].mxu0
  %206 = vdwg.mxu0
  %207 = vst [vmem:[%s3] sm:$0xff] %v185
  %208 = vst [vmem:[%s3 + $0x8] sm:$0xff] %v188
  %209 = vst [vmem:[%s3 + $0x10] sm:$0xff] %v193
  %210 = vst [vmem:[%s3 + $0x18] sm:$0xff] %v196
  %211 = vst [vmem:[%s3 + $0x20] sm:$0xff] %v201
  %212 = vst [vmem:[%s3 + $0x28] sm:$0xff] %v204
  // Predicated region
  $region14: #{_lambda_.20} parent=0 // pred_check
    _
  $region15: #{_lambda_.20} parent=0 // pred_check_branch
    %214 = sbr.rel (0) target = $region17
  $region16: #{_lambda_.20} parent=0 // pred_region
    _
  $region17: #{_lambda_.20} parent=0 // pred_fallthru
    _
  // Predicated region
  $region18: #{_lambda_.20} parent=0 // pred_check
    _
  $region19: #{_lambda_.20} parent=0 // pred_check_branch
    %216 = sbr.rel (0) target = $region21
  $region20: #{_lambda_.20} parent=0 // pred_region
    _
  $region21: #{_lambda_.20} parent=0 // pred_fallthru
    _

</llo_original>
